<compile_context>
chip_gen: v7x
topology: tpu7x:2x2x1
jax: 0.10.0
libtpu: 0.0.40
codegen_flags: <defaults>
</compile_context>

<pallas_src>
import functools

import jax
import jax.numpy as jnp
from jax.experimental import pallas as pl
from jax.experimental.pallas import tpu as pltpu

_VMEM_LIMIT = 32 * 1024 * 1024   # explicit scoped-VMEM limit, safe on v5e/v6e/v7x
_DEFAULT_TILE = 256              # A_hat tile (TM = TK); bf16 tile = 128 KiB


def _round_up(x, m):
    return (x + m - 1) // m * m


def _pad2(x, rows, cols):
    r, c = x.shape
    if r == rows and c == cols:
        return x
    return jnp.zeros((rows, cols), x.dtype).at[:r, :c].set(x)


# --------------------------------------------------------------------------
# Kernels
# --------------------------------------------------------------------------
def _project_kernel(x_ref, w_ref, out_ref):
    """Row-tiled projection: out = X_tile @ W (f32 matmul, cast to out dtype)."""
    out_ref[...] = jnp.dot(
        x_ref[...], w_ref[...], preferred_element_type=jnp.float32
    ).astype(out_ref.dtype)


def _gcn1_kernel(a_ref, xw_ref, b1_ref, wc_ref, out_ref, acc_ref):
    """Layer 1 aggregation + fused mu|logvar head projection.

    acc += A[i,k] @ XW[k]   over k; on the last k:
    H = relu(acc + b1);  out = (H @ [Wmu|Wvar]).astype(bf16)   (lane-dense 128).
    """
    k = pl.program_id(1)

    @pl.when(k == 0)
    def _():
        acc_ref[...] = jnp.zeros_like(acc_ref)

    acc_ref[...] += jnp.dot(
        a_ref[...], xw_ref[...], preferred_element_type=jnp.float32
    )

    @pl.when(k == pl.num_programs(1) - 1)
    def _():
        h = jnp.maximum(acc_ref[...] + b1_ref[...], 0.0)   # bias + ReLU in f32
        # TODO(synk): nn.Dropout(0.1) after ReLU omitted (eval-mode identity).
        out_ref[...] = jnp.dot(
            h, wc_ref[...], preferred_element_type=jnp.float32
        ).astype(out_ref.dtype)


def _gcn2_kernel(a_ref, v_ref, bc_ref, out_ref, acc_ref):
    """Layer 2 aggregation: Z = A @ HWc + [bmu|bvar] (128-lane f32 output)."""
    k = pl.program_id(1)

    @pl.when(k == 0)
    def _():
        acc_ref[...] = jnp.zeros_like(acc_ref)

    acc_ref[...] += jnp.dot(
        a_ref[...], v_ref[...], preferred_element_type=jnp.float32
    )

    @pl.when(k == pl.num_programs(1) - 1)
    def _():
        out_ref[...] = acc_ref[...] + bc_ref[...]


# --------------------------------------------------------------------------
# Wrapper
# --------------------------------------------------------------------------
@functools.partial(jax.jit, static_argnames=("tile",))
def vgae_encoder(X, A_hat, params, *, tile=_DEFAULT_TILE):
    """X: [N, F_in] f32, A_hat: [N, N] f32 normalized adjacency. Returns (mu, logvar)."""
    agg_dtype = jnp.bfloat16
    N, f_in = X.shape
    interm = params["w1"].shape[1]
    latent = params["w_mu"].shape[1]
    two_lat = 2 * latent

    # Tile / padding choice: tiles divide the padded N, full-extent when small.
    if N <= tile:
        n_pad = _round_up(N, 8)
        tm = tk = n_pad
    else:
        n_pad = _round_up(N, tile)
        tm = tk = tile
    n_i = n_pad // tm
    n_k = n_pad // tk

    # bf16 A_hat (MXU operand + half the HBM traffic); zero-padding is exact.
    a = _pad2(A_hat.astype(agg_dtype), n_pad, n_pad)
    x = _pad2(X.astype(jnp.float32), n_pad, f_in)

    # Fused mu|logvar head: one 128-lane projection / aggregation instead of two 64-lane ones.
    wc = jnp.concatenate([params["w_mu"], params["w_var"]], axis=1)   # [interm, 2*latent]
    bc = jnp.concatenate([params["b_mu"], params["b_var"]], axis=1)   # [1, 2*latent]

    cp_par = pltpu.CompilerParams(
        dimension_semantics=("parallel",), vmem_limit_bytes=_VMEM_LIMIT)
    cp_agg = pltpu.CompilerParams(
        dimension_semantics=("parallel", "arbitrary"), vmem_limit_bytes=_VMEM_LIMIT)

    # ---- 1) XW = X @ W1 (hoisted projection, bf16 output for the A pass) ----
    xw = pl.pallas_call(
        _project_kernel,
        out_shape=jax.ShapeDtypeStruct((n_pad, interm), agg_dtype),
        grid_spec=pltpu.PrefetchScalarGridSpec(
            num_scalar_prefetch=0,
            grid=(n_i,),
            in_specs=[pl.BlockSpec((tm, f_in), lambda i: (i, 0)),
                      pl.BlockSpec((f_in, interm), lambda i: (0, 0))],
            out_specs=pl.BlockSpec((tm, interm), lambda i: (i, 0))),
        compiler_params=cp_par,
    )(x, params["w1"])

    # ---- 2) HWc = relu(A @ XW + b1) @ [Wmu|Wvar]  (tiled A, fused head) -----
    hwc = pl.pallas_call(
        _gcn1_kernel,
        out_shape=jax.ShapeDtypeStruct((n_pad, two_lat), agg_dtype),
        grid_spec=pltpu.PrefetchScalarGridSpec(
            num_scalar_prefetch=0,
            grid=(n_i, n_k),
            in_specs=[pl.BlockSpec((tm, tk), lambda i, k: (i, k)),
                      pl.BlockSpec((tk, interm), lambda i, k: (k, 0)),
                      pl.BlockSpec((1, interm), lambda i, k: (0, 0)),
                      pl.BlockSpec((interm, two_lat), lambda i, k: (0, 0))],
            out_specs=pl.BlockSpec((tm, two_lat), lambda i, k: (i, 0)),
            scratch_shapes=[pltpu.VMEM((tm, interm), jnp.float32)]),
        compiler_params=cp_agg,
    )(a, xw, params["b1"], wc)

    # ---- 3) Z = A @ HWc + [bmu|bvar]  (tiled A, 128-lane f32 output) --------
    z = pl.pallas_call(
        _gcn2_kernel,
        out_shape=jax.ShapeDtypeStruct((n_pad, two_lat), jnp.float32),
        grid_spec=pltpu.PrefetchScalarGridSpec(
            num_scalar_prefetch=0,
            grid=(n_i, n_k),
            in_specs=[pl.BlockSpec((tm, tk), lambda i, k: (i, k)),
                      pl.BlockSpec((tk, two_lat), lambda i, k: (k, 0)),
                      pl.BlockSpec((1, two_lat), lambda i, k: (0, 0))],
            out_specs=pl.BlockSpec((tm, two_lat), lambda i, k: (i, 0)),
            scratch_shapes=[pltpu.VMEM((tm, two_lat), jnp.float32)]),
        compiler_params=cp_agg,
    )(a, hwc, bc)

    mu = z[:N, :latent]
    logvar = z[:N, latent:]
    # TODO(synk): latent_distr='vMF' branch (F.normalize + squeeze, 1-dim var head)
    # not implemented; only the default 'normal' path is provided.
    return mu, logvar


def vgae_encoder_ref(X, A_hat, params):
    """Pure-JAX f32 reference (matches the PyTorch forward in eval mode)."""
    h = jnp.maximum(A_hat @ (X @ params["w1"]) + params["b1"], 0.0)
    mu = A_hat @ (h @ params["w_mu"]) + params["b_mu"]
    lv = A_hat @ (h @ params["w_var"]) + params["b_var"]
    return mu, lv


# --------------------------------------------------------------------------
# Glue: params + normalized adjacency
# --------------------------------------------------------------------------
def make_params(key, input_dim, interm_dim=32, latent_dim=64):
    """Glorot-uniform weights, zero biases (matches GCNConv defaults)."""
    k1, k2, k3 = jax.random.split(key, 3)

    def glorot(k, fan_in, fan_out):
        lim = (6.0 / (fan_in + fan_out)) ** 0.5
        return jax.random.uniform(k, (fan_in, fan_out), jnp.float32, -lim, lim)

    return {
        "w1":    glorot(k1, input_dim, interm_dim),
        "b1":    jnp.zeros((1, interm_dim), jnp.float32),
        "w_mu":  glorot(k2, interm_dim, latent_dim),
        "b_mu":  jnp.zeros((1, latent_dim), jnp.float32),
        "w_var": glorot(k3, interm_dim, latent_dim),   # latent_distr='normal'
        "b_var": jnp.zeros((1, latent_dim), jnp.float32),
    }


def normalized_adjacency(edge_src, edge_dst, num_nodes):
    """Build dense D^-1/2 (A + I) D^-1/2.

    TODO(synk): for genuinely sparse graphs use a block-sparse SpMM with
    scalar-prefetched neighbor-block indices instead of densifying A_hat.
    """
    A = jnp.zeros((num_nodes, num_nodes), jnp.float32)
    A = A.at[edge_src, edge_dst].set(1.0)
    A = A.at[edge_dst, edge_src].set(1.0)          # undirected
    A = A + jnp.eye(num_nodes, dtype=jnp.float32)  # self loops
    deg = jnp.sum(A, axis=1)
    d_inv_sqrt = jnp.where(deg > 0, 1.0 / jnp.sqrt(deg), 0.0)
    return A * d_inv_sqrt[:, None] * d_inv_sqrt[None, :]


if __name__ == "__main__":
    key = jax.random.PRNGKey(0)
    kx, kp = jax.random.split(key)

    # Small but grid-exercising shapes: 384 nodes pad to 512 -> (2, 2) tile grid.
    N, F_IN, INTERM, LATENT = 384, 16, 32, 64

    X = jax.random.normal(kx, (N, F_IN), jnp.float32)

    # Deterministic ring graph 0-1-...-(N-1)-0.
    src = jnp.arange(N, dtype=jnp.int32)
    dst = (src + 1) % N
    A_hat = normalized_adjacency(src, dst, N)

    params = make_params(kp, F_IN, INTERM, LATENT)

    mu, logsigma2 = vgae_encoder(X, A_hat, params)
    jax.block_until_ready((mu, logsigma2))

    assert mu.shape == (N, LATENT) and logsigma2.shape == (N, LATENT)
    assert bool(jnp.all(jnp.isfinite(mu))) and bool(jnp.all(jnp.isfinite(logsigma2)))

    # Correctness vs pure-JAX f32 reference (loose tolerance: bf16 MXU operands).
    mu_ref, lv_ref = vgae_encoder_ref(X, A_hat, params)
    assert bool(jnp.allclose(mu, mu_ref, rtol=5e-2, atol=5e-2)), "mu mismatch"
    assert bool(jnp.allclose(logsigma2, lv_ref, rtol=5e-2, atol=5e-2)), "logvar mismatch"

    print("KERNEL_OK")
</pallas_src>

<mosaic_0001>
module attributes {stable_mosaic.version = 11 : i64} {
  func.func @_project_kernel(%arg0: i32, %arg1: memref<256x16xf32, #tpu.memory_space<vmem>>, %arg2: memref<16x32xf32, #tpu.memory_space<vmem>>, %arg3: memref<256x32xbf16, #tpu.memory_space<vmem>>) attributes {dimension_semantics = [#tpu.dimension_semantics<parallel>], iteration_bounds = array<i64: 2>, scalar_prefetch = 0 : i64, scratch_operands = 0 : i64, tpu.core_type = #tpu.core_type<tc>, window_params = [{transform_indices = @transform_0, window_bounds = array<i64: 256, 16>}, {pipeline_mode = #tpu.pipeline_mode<synchronous>, transform_indices = @transform_1, window_bounds = array<i64: 16, 32>}, {transform_indices = @transform_2, window_bounds = array<i64: 256, 32>}]} {
    %c0 = arith.constant 0 : index
    %c0_0 = arith.constant 0 : index
    %0 = vector.load %arg1[%c0, %c0_0] : memref<256x16xf32, #tpu.memory_space<vmem>>, vector<256x16xf32>
    %c0_1 = arith.constant 0 : index
    %c0_2 = arith.constant 0 : index
    %1 = vector.load %arg2[%c0_1, %c0_2] : memref<16x32xf32, #tpu.memory_space<vmem>>, vector<16x32xf32>
    %cst = arith.constant dense<0.000000e+00> : vector<256x32xf32>
    %2 = tpu.matmul %0, %1, %cst {dimension_numbers = #tpu.dot_dimension_numbers<[1], [0], [0], [1], [0, 0, 1, 1], [], []>} : vector<256x16xf32>, vector<16x32xf32>, vector<256x32xf32> -> vector<256x32xf32>
    %3 = arith.truncf %2 : vector<256x32xf32> to vector<256x32xbf16>
    %c0_3 = arith.constant 0 : index
    %c0_4 = arith.constant 0 : index
    %4 = vector.load %arg3[%c0_3, %c0_4] : memref<256x32xbf16, #tpu.memory_space<vmem>>, vector<256x32xbf16>
    tpu.vector_store %arg3[%c0_3, %c0_4], %3 {strides = array<i32>} : memref<256x32xbf16, #tpu.memory_space<vmem>>, vector<256x32xbf16>,
    return
  }
  func.func @transform_0(%arg0: i32) -> (i32, i32) {
    %c0_i32 = arith.constant 0 : i32
    %c0_i32_0 = arith.constant 0 : i32
    return %arg0, %c0_i32 : i32, i32
  }
  func.func @transform_1(%arg0: i32) -> (i32, i32) {
    %c0_i32 = arith.constant 0 : i32
    %c0_i32_0 = arith.constant 0 : i32
    %c0_i32_1 = arith.constant 0 : i32
    return %c0_i32, %c0_i32_0 : i32, i32
  }
  func.func @transform_2(%arg0: i32) -> (i32, i32) {
    %c0_i32 = arith.constant 0 : i32
    %c0_i32_0 = arith.constant 0 : i32
    return %arg0, %c0_i32 : i32, i32
  }
}

module attributes {stable_mosaic.version = 11 : i64} {
  func.func @_gcn1_kernel(%arg0: i32, %arg1: i32, %arg2: memref<256x256xbf16, #tpu.memory_space<vmem>>, %arg3: memref<256x32xbf16, #tpu.memory_space<vmem>>, %arg4: memref<1x32xf32, #tpu.memory_space<vmem>>, %arg5: memref<32x128xf32, #tpu.memory_space<vmem>>, %arg6: memref<256x128xbf16, #tpu.memory_space<vmem>>, %arg7: memref<256x32xf32, #tpu.memory_space<vmem>>) attributes {dimension_semantics = [#tpu.dimension_semantics<parallel>, #tpu.dimension_semantics<arbitrary>], iteration_bounds = array<i64: 2, 2>, scalar_prefetch = 0 : i64, scratch_operands = 1 : i64, tpu.core_type = #tpu.core_type<tc>, window_params = [{transform_indices = @transform_0, window_bounds = array<i64: 256, 256>}, {transform_indices = @transform_1, window_bounds = array<i64: 256, 32>}, {pipeline_mode = #tpu.pipeline_mode<synchronous>, transform_indices = @transform_2, window_bounds = array<i64: 1, 32>}, {pipeline_mode = #tpu.pipeline_mode<synchronous>, transform_indices = @transform_3, window_bounds = array<i64: 32, 128>}, {transform_indices = @transform_4, window_bounds = array<i64: 256, 128>}]} {
    %c0_i32 = arith.constant 0 : i32
    %0 = arith.cmpi eq, %arg1, %c0_i32 : i32
    %1 = arith.extui %0 : i1 to i32
    %c0_i32_0 = arith.constant 0 : i32
    %2 = arith.cmpi ne, %1, %c0_i32_0 : i32
    scf.if %2 {
      %cst_9 = arith.constant 0.000000e+00 : f32
      %12 = vector.broadcast %cst_9 : f32 to vector<256x32xf32>
      %c0_10 = arith.constant 0 : index
      %c0_11 = arith.constant 0 : index
      %13 = vector.load %arg7[%c0_10, %c0_11] : memref<256x32xf32, #tpu.memory_space<vmem>>, vector<256x32xf32>
      tpu.vector_store %arg7[%c0_10, %c0_11], %12 {strides = array<i32>} : memref<256x32xf32, #tpu.memory_space<vmem>>, vector<256x32xf32>,
    } else {
    }
    %c0 = arith.constant 0 : index
    %c0_1 = arith.constant 0 : index
    %3 = vector.load %arg7[%c0, %c0_1] : memref<256x32xf32, #tpu.memory_space<vmem>>, vector<256x32xf32>
    %c0_2 = arith.constant 0 : index
    %c0_3 = arith.constant 0 : index
    %4 = vector.load %arg2[%c0_2, %c0_3] : memref<256x256xbf16, #tpu.memory_space<vmem>>, vector<256x256xbf16>
    %c0_4 = arith.constant 0 : index
    %c0_5 = arith.constant 0 : index
    %5 = vector.load %arg3[%c0_4, %c0_5] : memref<256x32xbf16, #tpu.memory_space<vmem>>, vector<256x32xbf16>
    %cst = arith.constant dense<0.000000e+00> : vector<256x32xf32>
    %6 = tpu.matmul %4, %5, %cst {dimension_numbers = #tpu.dot_dimension_numbers<[1], [0], [0], [1], [0, 0, 1, 1], [], []>} : vector<256x256xbf16>, vector<256x32xbf16>, vector<256x32xf32> -> vector<256x32xf32>
    %7 = arith.addf %3, %6 : vector<256x32xf32>
    %c0_6 = arith.constant 0 : index
    %c0_7 = arith.constant 0 : index
    %8 = vector.load %arg7[%c0_6, %c0_7] : memref<256x32xf32, #tpu.memory_space<vmem>>, vector<256x32xf32>
    tpu.vector_store %arg7[%c0_6, %c0_7], %7 {strides = array<i32>} : memref<256x32xf32, #tpu.memory_space<vmem>>, vector<256x32xf32>,
    %c1_i32 = arith.constant 1 : i32
    %9 = arith.cmpi eq, %arg1, %c1_i32 : i32
    %10 = arith.extui %9 : i1 to i32
    %c0_i32_8 = arith.constant 0 : i32
    %11 = arith.cmpi ne, %10, %c0_i32_8 : i32
    scf.if %11 {
      %c0_9 = arith.constant 0 : index
      %c0_10 = arith.constant 0 : index
      %12 = vector.load %arg7[%c0_9, %c0_10] : memref<256x32xf32, #tpu.memory_space<vmem>>, vector<256x32xf32>
      %c0_11 = arith.constant 0 : index
      %c0_12 = arith.constant 0 : index
      %13 = vector.load %arg4[%c0_11, %c0_12] : memref<1x32xf32, #tpu.memory_space<vmem>>, vector<1x32xf32>
      %14 = vector.broadcast %13 : vector<1x32xf32> to vector<256x32xf32>
      %15 = arith.addf %12, %14 : vector<256x32xf32>
      %cst_13 = arith.constant 0.000000e+00 : f32
      %16 = vector.broadcast %cst_13 : f32 to vector<256x32xf32>
      %17 = arith.maximumf %15, %16 : vector<256x32xf32>
      %c0_14 = arith.constant 0 : index
      %c0_15 = arith.constant 0 : index
      %18 = vector.load %arg5[%c0_14, %c0_15] : memref<32x128xf32, #tpu.memory_space<vmem>>, vector<32x128xf32>
      %cst_16 = arith.constant dense<0.000000e+00> : vector<256x128xf32>
      %19 = tpu.matmul %17, %18, %cst_16 {dimension_numbers = #tpu.dot_dimension_numbers<[1], [0], [0], [1], [0, 0, 1, 1], [], []>} : vector<256x32xf32>, vector<32x128xf32>, vector<256x128xf32> -> vector<256x128xf32>
      %20 = arith.truncf %19 : vector<256x128xf32> to vector<256x128xbf16>
      %c0_17 = arith.constant 0 : index
      %c0_18 = arith.constant 0 : index
      %21 = vector.load %arg6[%c0_17, %c0_18] : memref<256x128xbf16, #tpu.memory_space<vmem>>, vector<256x128xbf16>
      tpu.vector_store %arg6[%c0_17, %c0_18], %20 {strides = array<i32>} : memref<256x128xbf16, #tpu.memory_space<vmem>>, vector<256x128xbf16>,
    } else {
    }
    return
  }
  func.func @transform_0(%arg0: i32, %arg1: i32) -> (i32, i32) {
    %c0_i32 = arith.constant 0 : i32
    return %arg0, %arg1 : i32, i32
  }
  func.func @transform_1(%arg0: i32, %arg1: i32) -> (i32, i32) {
    %c0_i32 = arith.constant 0 : i32
    %c0_i32_0 = arith.constant 0 : i32
    return %arg1, %c0_i32 : i32, i32
  }
  func.func @transform_2(%arg0: i32, %arg1: i32) -> (i32, i32) {
    %c0_i32 = arith.constant 0 : i32
    %c0_i32_0 = arith.constant 0 : i32
    %c0_i32_1 = arith.constant 0 : i32
    return %c0_i32, %c0_i32_0 : i32, i32
  }
  func.func @transform_3(%arg0: i32, %arg1: i32) -> (i32, i32) {
    %c0_i32 = arith.constant 0 : i32
    %c0_i32_0 = arith.constant 0 : i32
    %c0_i32_1 = arith.constant 0 : i32
    return %c0_i32, %c0_i32_0 : i32, i32
  }
  func.func @transform_4(%arg0: i32, %arg1: i32) -> (i32, i32) {
    %c0_i32 = arith.constant 0 : i32
    %c0_i32_0 = arith.constant 0 : i32
    return %arg0, %c0_i32 : i32, i32
  }
}

module attributes {stable_mosaic.version = 11 : i64} {
  func.func @_gcn2_kernel(%arg0: i32, %arg1: i32, %arg2: memref<256x256xbf16, #tpu.memory_space<vmem>>, %arg3: memref<256x128xbf16, #tpu.memory_space<vmem>>, %arg4: memref<1x128xf32, #tpu.memory_space<vmem>>, %arg5: memref<256x128xf32, #tpu.memory_space<vmem>>, %arg6: memref<256x128xf32, #tpu.memory_space<vmem>>) attributes {dimension_semantics = [#tpu.dimension_semantics<parallel>, #tpu.dimension_semantics<arbitrary>], iteration_bounds = array<i64: 2, 2>, scalar_prefetch = 0 : i64, scratch_operands = 1 : i64, tpu.core_type = #tpu.core_type<tc>, window_params = [{transform_indices = @transform_0, window_bounds = array<i64: 256, 256>}, {transform_indices = @transform_1, window_bounds = array<i64: 256, 128>}, {pipeline_mode = #tpu.pipeline_mode<synchronous>, transform_indices = @transform_2, window_bounds = array<i64: 1, 128>}, {transform_indices = @transform_3, window_bounds = array<i64: 256, 128>}]} {
    %c0_i32 = arith.constant 0 : i32
    %0 = arith.cmpi eq, %arg1, %c0_i32 : i32
    %1 = arith.extui %0 : i1 to i32
    %c0_i32_0 = arith.constant 0 : i32
    %2 = arith.cmpi ne, %1, %c0_i32_0 : i32
    scf.if %2 {
      %cst_9 = arith.constant 0.000000e+00 : f32
      %12 = vector.broadcast %cst_9 : f32 to vector<256x128xf32>
      %c0_10 = arith.constant 0 : index
      %c0_11 = arith.constant 0 : index
      %13 = vector.load %arg6[%c0_10, %c0_11] : memref<256x128xf32, #tpu.memory_space<vmem>>, vector<256x128xf32>
      tpu.vector_store %arg6[%c0_10, %c0_11], %12 {strides = array<i32>} : memref<256x128xf32, #tpu.memory_space<vmem>>, vector<256x128xf32>,
    } else {
    }
    %c0 = arith.constant 0 : index
    %c0_1 = arith.constant 0 : index
    %3 = vector.load %arg6[%c0, %c0_1] : memref<256x128xf32, #tpu.memory_space<vmem>>, vector<256x128xf32>
    %c0_2 = arith.constant 0 : index
    %c0_3 = arith.constant 0 : index
    %4 = vector.load %arg2[%c0_2, %c0_3] : memref<256x256xbf16, #tpu.memory_space<vmem>>, vector<256x256xbf16>
    %c0_4 = arith.constant 0 : index
    %c0_5 = arith.constant 0 : index
    %5 = vector.load %arg3[%c0_4, %c0_5] : memref<256x128xbf16, #tpu.memory_space<vmem>>, vector<256x128xbf16>
    %cst = arith.constant dense<0.000000e+00> : vector<256x128xf32>
    %6 = tpu.matmul %4, %5, %cst {dimension_numbers = #tpu.dot_dimension_numbers<[1], [0], [0], [1], [0, 0, 1, 1], [], []>} : vector<256x256xbf16>, vector<256x128xbf16>, vector<256x128xf32> -> vector<256x128xf32>
    %7 = arith.addf %3, %6 : vector<256x128xf32>
    %c0_6 = arith.constant 0 : index
    %c0_7 = arith.constant 0 : index
    %8 = vector.load %arg6[%c0_6, %c0_7] : memref<256x128xf32, #tpu.memory_space<vmem>>, vector<256x128xf32>
    tpu.vector_store %arg6[%c0_6, %c0_7], %7 {strides = array<i32>} : memref<256x128xf32, #tpu.memory_space<vmem>>, vector<256x128xf32>,
    %c1_i32 = arith.constant 1 : i32
    %9 = arith.cmpi eq, %arg1, %c1_i32 : i32
    %10 = arith.extui %9 : i1 to i32
    %c0_i32_8 = arith.constant 0 : i32
    %11 = arith.cmpi ne, %10, %c0_i32_8 : i32
    scf.if %11 {
      %c0_9 = arith.constant 0 : index
      %c0_10 = arith.constant 0 : index
      %12 = vector.load %arg6[%c0_9, %c0_10] : memref<256x128xf32, #tpu.memory_space<vmem>>, vector<256x128xf32>
      %c0_11 = arith.constant 0 : index
      %c0_12 = arith.constant 0 : index
      %13 = vector.load %arg4[%c0_11, %c0_12] : memref<1x128xf32, #tpu.memory_space<vmem>>, vector<1x128xf32>
      %14 = vector.broadcast %13 : vector<1x128xf32> to vector<256x128xf32>
      %15 = arith.addf %12, %14 : vector<256x128xf32>
      %c0_13 = arith.constant 0 : index
      %c0_14 = arith.constant 0 : index
      %16 = vector.load %arg5[%c0_13, %c0_14] : memref<256x128xf32, #tpu.memory_space<vmem>>, vector<256x128xf32>
      tpu.vector_store %arg5[%c0_13, %c0_14], %15 {strides = array<i32>} : memref<256x128xf32, #tpu.memory_space<vmem>>, vector<256x128xf32>,
    } else {
    }
    return
  }
  func.func @transform_0(%arg0: i32, %arg1: i32) -> (i32, i32) {
    %c0_i32 = arith.constant 0 : i32
    return %arg0, %arg1 : i32, i32
  }
  func.func @transform_1(%arg0: i32, %arg1: i32) -> (i32, i32) {
    %c0_i32 = arith.constant 0 : i32
    %c0_i32_0 = arith.constant 0 : i32
    return %arg1, %c0_i32 : i32, i32
  }
  func.func @transform_2(%arg0: i32, %arg1: i32) -> (i32, i32) {
    %c0_i32 = arith.constant 0 : i32
    %c0_i32_0 = arith.constant 0 : i32
    %c0_i32_1 = arith.constant 0 : i32
    return %c0_i32, %c0_i32_0 : i32, i32
  }
  func.func @transform_3(%arg0: i32, %arg1: i32) -> (i32, i32) {
    %c0_i32 = arith.constant 0 : i32
    %c0_i32_0 = arith.constant 0 : i32
    return %arg0, %c0_i32 : i32, i32
  }
}

</mosaic_0001>

<llo_original>
// kernel: vgae_encoder.3
$region0: #{vgae_encoder.3}
  #allocation0 [shape = 'u32[]', space=smem, size = 0x4, offset = 0x4, fixed_abs, tag = 'smem constant byte address 0x4 - core index']
  #allocation1 [shape = 'u32[144,128]{1,0:T(1,128)}', space=vmem, size = 0x12000, scoped, tag = 'internal scratch']
  %s0 = inlined_call_operand.vmem [shape: f32[512,16], index: 0, kind: input, shape index: {}]
  %s1 = inlined_call_operand.vmem [shape: f32[16,32], index: 1, kind: input, shape index: {}]
  %s2 = inlined_call_operand.vmem [shape: bf16[512,32], index: 2, kind: output, shape index: {}]
  %s3 = sld [smem:[#allocation0]]
  $region41: #{vgae_encoder.3} parent=0
    _
  %s5 = ssub.s32 1, %s3
  %s6 = scalar_select 0, %s5, %s3
  loop: start=0, step=1, limit=4
  $region2: #{vgae_encoder.3} parent=0 // loop_pre_header
    _
  $region3: #{vgae_encoder.3} parent=0 // loop_header
    %s8 = sphi 0, %s12
    %p9 = scmp.ge.s32.totalorder %s8, 4
    %s18 = sphi 0, %s20
    %s21 = sphi 0, %s18
    %s22 = sphi 0, %s21
    %s38 = sphi 0, %s22
    %s42 = sphi 0, %s42
    %s44 = sphi 0, %s42
    %s45 = sphi 0, %s44
    %s59 = sphi 0, %s45
    %s65 = sphi 0, %s67
    %s68 = sphi 0, %s65
    %s69 = sphi 0, %s68
    %s85 = sphi 0, %s69
  $region4: #{vgae_encoder.3} parent=0 // loop_header_branch
    %11 = sbr.rel (%p9) target = $region8
  $region5: #{vgae_encoder.3} parent=0 // loop_body
    %s13 = ssub.s32 %s8, 1
    %s14 = ssub.s32 %s8, 2
    %s15 = sadd.s32 %s8, 1
    %s16 = ssub.s32 %s8, %s15
    %p17 = scmp.eq.s32.totalorder %s16, 0
    %s19 = sadd.s32 %s18, 1
    %s20 = scalar_select %p17, %s18, %s19
    %p23 = pneg %p17
    %p24 = scmp.eq.s32.totalorder %s8, 1
    %p25 = por %p23, %p24
    %p26 = scmp.ne.s32.totalorder %s18, %s21
    %p27 = scmp.eq.s32.totalorder %s8, 0
    %p28 = por %p26, %p27
    %p29 = scmp.ne.s32.totalorder %s18, %s21
    %p30 = scmp.eq.s32.totalorder %s13, 1
    %p31 = por %p29, %p30
    %p32 = scmp.ne.s32.totalorder %s21, %s22
    %p33 = scmp.eq.s32.totalorder %s13, 0
    %p34 = por %p32, %p33
    %p35 = scmp.ne.s32.totalorder %s21, %s22
    %p36 = scmp.eq.s32.totalorder %s14, 1
    %p37 = por %p35, %p36
    %p39 = scmp.ne.s32.totalorder %s22, %s38
    %p40 = scmp.eq.s32.totalorder %s14, 0
    %p41 = por %p39, %p40
    %s43 = sadd.s32 %s42, 1
    %p46 = scmp.eq.s32.totalorder %s8, 1
    %p47 = scmp.ne.s32.totalorder %s42, %s44
    %p48 = scmp.eq.s32.totalorder %s8, 0
    %p49 = por %p47, %p48
    %p50 = scmp.ne.s32.totalorder %s42, %s44
    %p51 = scmp.eq.s32.totalorder %s13, 1
    %p52 = por %p50, %p51
    %p53 = scmp.ne.s32.totalorder %s44, %s45
    %p54 = scmp.eq.s32.totalorder %s13, 0
    %p55 = por %p53, %p54
    %p56 = scmp.ne.s32.totalorder %s44, %s45
    %p57 = scmp.eq.s32.totalorder %s14, 1
    %p58 = por %p56, %p57
    %p60 = scmp.ne.s32.totalorder %s45, %s59
    %p61 = scmp.eq.s32.totalorder %s14, 0
    %p62 = por %p60, %p61
    %s63 = ssub.s32 %s8, %s15
    %p64 = scmp.eq.s32.totalorder %s63, 0
    %s66 = sadd.s32 %s65, 1
    %s67 = scalar_select %p64, %s65, %s66
    %p70 = pneg %p64
    %p71 = scmp.eq.s32.totalorder %s8, 1
    %p72 = por %p70, %p71
    %p73 = scmp.ne.s32.totalorder %s65, %s68
    %p74 = scmp.eq.s32.totalorder %s8, 0
    %p75 = por %p73, %p74
    %p76 = scmp.ne.s32.totalorder %s65, %s68
    %p77 = scmp.eq.s32.totalorder %s13, 1
    %p78 = por %p76, %p77
    %p79 = scmp.ne.s32.totalorder %s68, %s69
    %p80 = scmp.eq.s32.totalorder %s13, 0
    %p81 = por %p79, %p80
    %p82 = scmp.ne.s32.totalorder %s68, %s69
    %p83 = scmp.eq.s32.totalorder %s14, 1
    %p84 = por %p82, %p83
    %p86 = scmp.ne.s32.totalorder %s69, %s85
    %p87 = scmp.eq.s32.totalorder %s14, 0
    %p88 = por %p86, %p87
    %p89 = scmp.le.s32.totalorder 1, %s8
    %p90 = scmp.lt.s32.totalorder %s8, 3
    %p91 = pnand %p89, %p90
    %p92 = pneg %p91
    // Predicated region
    $region9: #{vgae_encoder.3} parent=5 // pred_check
      _
    $region10: #{vgae_encoder.3} parent=5 // pred_check_branch
      %94 = sbr.rel (%p91) target = $region12
    $region11: #{vgae_encoder.3} parent=5 // pred_region
      %s95 = ssub.s32 %s8, 1
      // Predicated region
      $region13: #{vgae_encoder.3} parent=11 // pred_check
        %p96 = pneg %p55
      $region14: #{vgae_encoder.3} parent=11 // pred_check_branch
        %98 = sbr.rel (%p96) target = $region16
      $region15: #{vgae_encoder.3} parent=11 // pred_region
        _
      $region16: #{vgae_encoder.3} parent=11 // pred_fallthru
        _
    $region12: #{vgae_encoder.3} parent=5 // pred_fallthru
      _
    %p99 = scmp.lt.s32.totalorder %s8, 2
    // Predicated region
    $region17: #{vgae_encoder.3} parent=5 // pred_check
      %p100 = pneg %p99
    $region18: #{vgae_encoder.3} parent=5 // pred_check_branch
      %102 = sbr.rel (%p100) target = $region20
    $region19: #{vgae_encoder.3} parent=5 // pred_region
      // Predicated region
      $region21: #{vgae_encoder.3} parent=19 // pred_check
        %p103 = pneg %p28
      $region22: #{vgae_encoder.3} parent=19 // pred_check_branch
        %105 = sbr.rel (%p103) target = $region24
      $region23: #{vgae_encoder.3} parent=19 // pred_region
        %s106 = smul.u32 32, %s8
        %p107 = scmp.lt.s32.totalorder %s106, 63
        %s108 = scalar_select %p107, %s106, 63
        %s109 = smul.addr %s108, 8
        %s110 = scalar_lea.vmem %s0, %s109
        %s111 = smul.u32 32, %s8
      $region24: #{vgae_encoder.3} parent=19 // pred_fallthru
        _
    $region20: #{vgae_encoder.3} parent=5 // pred_fallthru
      _
    %p112 = scmp.le.s32.totalorder 1, %s8
    %p113 = scmp.lt.s32.totalorder %s8, 3
    %p114 = pnand %p112, %p113
    %p115 = pneg %p114
    // Predicated region
    $region25: #{vgae_encoder.3} parent=5 // pred_check
      _
    $region26: #{vgae_encoder.3} parent=5 // pred_check_branch
      %117 = sbr.rel (%p114) target = $region28
    $region27: #{vgae_encoder.3} parent=5 // pred_region
      %s118 = ssub.s32 %s8, 1
      %s119 = smul.u32 32, %s13
      %p120 = scmp.lt.s32.totalorder %s119, 63
      %s121 = scalar_select %p120, %s119, 63
      %s122 = smul.addr %s121, 8
      %s123 = scalar_lea.vmem %s0, %s122
      %p124 = pneg %p34
      %p125 = pneg %p31
      %p126 = pneg %p55
      %p127 = pneg %p52
      %p128 = pneg %p81
      %p129 = pneg %p78
      %s130 = smul.u32 32, %s13
      %p131 = scmp.lt.s32.totalorder %s130, 63
      %s132 = scalar_select %p131, %s130, 63
      %s133 = smul.addr %s132, 4
      %s134 = scalar_lea.vmem %s2, %s133
      %s135 = smul.u32 32, %s13
      %p136 = scmp.lt.s32.totalorder %s135, 63
      %s137 = scalar_select %p136, %s135, 63
      %s138 = smul.addr %s137, 8
      %s139 = scalar_lea.vmem %s0, %s138
      %s140 = smul.u32 32, %s13
      %s141 = smul.u32 32, %s13
      %p142 = scmp.lt.s32.totalorder %s141, 63
      %s143 = scalar_select %p142, %s141, 63
      %s144 = smul.addr %s143, 4
      %s145 = scalar_lea.vmem %s2, %s144
      %s146 = smul.u32 32, %s13
      %v147 = vld [vmem:[%s139] sm:$0xff]
      %v148 = vld [vmem:[%s139 + $0x8] sm:$0xff]
      %v149 = vld [vmem:[%s139 + $0x10] sm:$0xff]
      %v150 = vld [vmem:[%s139 + $0x18] sm:$0xff]
      %v151 = vld [vmem:[%s139 + $0x20] sm:$0xff]
      %v152 = vld [vmem:[%s139 + $0x28] sm:$0xff]
      %v153 = vld [vmem:[%s139 + $0x30] sm:$0xff]
      %v154 = vld [vmem:[%s139 + $0x38] sm:$0xff]
      %v155 = vld [vmem:[%s139 + $0x40] sm:$0xff]
      %v156 = vld [vmem:[%s139 + $0x48] sm:$0xff]
      %v157 = vld [vmem:[%s139 + $0x50] sm:$0xff]
      %v158 = vld [vmem:[%s139 + $0x58] sm:$0xff]
      %v159 = vld [vmem:[%s139 + $0x60] sm:$0xff]
      %v160 = vld [vmem:[%s139 + $0x68] sm:$0xff]
      %v161 = vld [vmem:[%s139 + $0x70] sm:$0xff]
      %v162 = vld [vmem:[%s139 + $0x78] sm:$0xff]
      %v163 = vld [vmem:[%s139 + $0x80] sm:$0xff]
      %v164 = vld [vmem:[%s139 + $0x88] sm:$0xff]
      %v165 = vld [vmem:[%s139 + $0x90] sm:$0xff]
      %v166 = vld [vmem:[%s139 + $0x98] sm:$0xff]
      %v167 = vld [vmem:[%s139 + $0xa0] sm:$0xff]
      %v168 = vld [vmem:[%s139 + $0xa8] sm:$0xff]
      %v169 = vld [vmem:[%s139 + $0xb0] sm:$0xff]
      %v170 = vld [vmem:[%s139 + $0xb8] sm:$0xff]
      %v171 = vld [vmem:[%s139 + $0xc0] sm:$0xff]
      %v172 = vld [vmem:[%s139 + $0xc8] sm:$0xff]
      %v173 = vld [vmem:[%s139 + $0xd0] sm:$0xff]
      %v174 = vld [vmem:[%s139 + $0xd8] sm:$0xff]
      %v175 = vld [vmem:[%s139 + $0xe0] sm:$0xff]
      %v176 = vld [vmem:[%s139 + $0xe8] sm:$0xff]
      %v177 = vld [vmem:[%s139 + $0xf0] sm:$0xff]
      %v178 = vld [vmem:[%s139 + $0xf8] sm:$0xff]
      %v179 = vld [vmem:[%s1] sm:$0xff]
      %v180 = vld [vmem:[%s1 + $0x8] sm:$0xff]
      %vm181 = vcmask 130048
      %v183 = vsel %vm181, %v147, 0
      %v186 = vsel %vm181, %v148, 0
      %v189 = vsel %vm181, %v149, 0
      %v192 = vsel %vm181, %v150, 0
      %v195 = vsel %vm181, %v151, 0
      %v198 = vsel %vm181, %v152, 0
      %v201 = vsel %vm181, %v153, 0
      %v204 = vsel %vm181, %v154, 0
      %v207 = vsel %vm181, %v155, 0
      %v210 = vsel %vm181, %v156, 0
      %v213 = vsel %vm181, %v157, 0
      %v216 = vsel %vm181, %v158, 0
      %v219 = vsel %vm181, %v159, 0
      %v222 = vsel %vm181, %v160, 0
      %v225 = vsel %vm181, %v161, 0
      %v228 = vsel %vm181, %v162, 0
      %v231 = vsel %vm181, %v163, 0
      %v234 = vsel %vm181, %v164, 0
      %v237 = vsel %vm181, %v165, 0
      %v240 = vsel %vm181, %v166, 0
      %v243 = vsel %vm181, %v167, 0
      %v246 = vsel %vm181, %v168, 0
      %v249 = vsel %vm181, %v169, 0
      %v252 = vsel %vm181, %v170, 0
      %v255 = vsel %vm181, %v171, 0
      %v258 = vsel %vm181, %v172, 0
      %v261 = vsel %vm181, %v173, 0
      %v264 = vsel %vm181, %v174, 0
      %v267 = vsel %vm181, %v175, 0
      %v270 = vsel %vm181, %v176, 0
      %v273 = vsel %vm181, %v177, 0
      %v276 = vsel %vm181, %v178, 0
      %278 = vmatprep.subr.mxu0 0.0
      %279 = vmatpush1.msra.mxu0 %v179
      %280 = vmatprep.subr.mxu0 0.0
      %281 = vmatpush1.msra.mxu0 %v180
      %282 = vmatprep.subr.mxu0 0.0
      %283 = vmatpush1.msra.mxu0 0.0
      %284 = vmatprep.subr.mxu0 0.0
      %285 = vmatpush1.msra.mxu0 0.0
      %286 = vmatprep.subr.mxu0 0.0
      %287 = vmatpush1.msra.mxu0 0.0
      %288 = vmatprep.subr.mxu0 0.0
      %289 = vmatpush1.msra.mxu0 0.0
      %290 = vmatprep.subr.mxu0 0.0
      %291 = vmatpush1.msra.mxu0 0.0
      %292 = vmatprep.subr.mxu0 0.0
      %293 = vmatpush1.msra.mxu0 0.0
      %294 = vmatprep.subr.mxu0 0.0
      %295 = vmatpush1.msra.mxu0 0.0
      %296 = vmatprep.subr.mxu0 0.0
      %297 = vmatpush1.msra.mxu0 0.0
      %298 = vmatprep.subr.mxu0 0.0
      %299 = vmatpush1.msra.mxu0 0.0
      %300 = vmatprep.subr.mxu0 0.0
      %301 = vmatpush1.msra.mxu0 0.0
      %302 = vmatprep.subr.mxu0 0.0
      %303 = vmatpush1.msra.mxu0 0.0
      %304 = vmatprep.subr.mxu0 0.0
      %305 = vmatpush1.msra.mxu0 0.0
      %306 = vmatprep.subr.mxu0 0.0
      %307 = vmatpush1.msra.mxu0 0.0
      %308 = vmatprep.subr.mxu0 0.0
      %309 = vmatpush1.msra.mxu0 0.0
      %310 = vmatprep.subr.mxu0 0.0
      %311 = vmatpush1.msra.mxu0 0.0
      %312 = vmatprep.subr.mxu0 0.0
      %313 = vmatpush1.msra.mxu0 0.0
      %314 = vmatprep.subr.mxu0 0.0
      %315 = vmatpush1.msra.mxu0 0.0
      %316 = vmatprep.subr.mxu0 0.0
      %317 = vmatpush1.msra.mxu0 0.0
      %318 = vmatprep.subr.mxu0 0.0
      %319 = vmatpush1.msra.mxu0 0.0
      %320 = vmatprep.subr.mxu0 0.0
      %321 = vmatpush1.msra.mxu0 0.0
      %322 = vmatprep.subr.mxu0 0.0
      %323 = vmatpush1.msra.mxu0 0.0
      %324 = vmatprep.subr.mxu0 0.0
      %325 = vmatpush1.msra.mxu0 0.0
      %326 = vmatprep.subr.mxu0 0.0
      %327 = vmatpush1.msra.mxu0 0.0
      %328 = vmatprep.subr.mxu0 0.0
      %329 = vmatpush1.msra.mxu0 0.0
      %330 = vmatprep.subr.mxu0 0.0
      %331 = vmatpush1.msra.mxu0 0.0
      %332 = vmatprep.subr.mxu0 0.0
      %333 = vmatpush1.msra.mxu0 0.0
      %334 = vmatprep.subr.mxu0 0.0
      %335 = vmatpush1.msra.mxu0 0.0
      %336 = vmatprep.subr.mxu0 0.0
      %337 = vmatpush1.msra.mxu0 0.0
      %338 = vmatprep.subr.mxu0 0.0
      %339 = vmatpush1.msra.mxu0 0.0
      %340 = vmatprep.subr.mxu0 0.0
      %341 = vmatpush1.msra.mxu0 0.0
      %342 = vmatprep.mubr.f32.mxu0 0.0
      %343 = vmatmul.mubr.f32.gmra.mrb[0].mxu0 %v183
      %v344 = vpop.f32.mrb[0].mxu0
      %v345 = vadd.f32 0.0, %v344
      %v346 = vpop.f32.mrb[0].mxu0
      %347 = vmatprep.mubr.f32.mxu0 0.0
      %348 = vmatmul.mubr.f32.gmra.mrb[0].mxu0 %v186
      %v349 = vpop.f32.mrb[0].mxu0
      %v350 = vadd.f32 0.0, %v349
      %v351 = vpop.f32.mrb[0].mxu0
      %352 = vmatprep.mubr.f32.mxu0 0.0
      %353 = vmatmul.mubr.f32.gmra.mrb[0].mxu0 %v189
      %v354 = vpop.f32.mrb[0].mxu0
      %v355 = vadd.f32 0.0, %v354
      %v356 = vpop.f32.mrb[0].mxu0
      %357 = vmatprep.mubr.f32.mxu0 0.0
      %358 = vmatmul.mubr.f32.gmra.mrb[0].mxu0 %v192
      %v359 = vpop.f32.mrb[0].mxu0
      %v360 = vadd.f32 0.0, %v359
      %v361 = vpop.f32.mrb[0].mxu0
      %362 = vmatprep.mubr.f32.mxu0 0.0
      %363 = vmatmul.mubr.f32.gmra.mrb[0].mxu0 %v195
      %v364 = vpop.f32.mrb[0].mxu0
      %v365 = vadd.f32 0.0, %v364
      %v366 = vpop.f32.mrb[0].mxu0
      %367 = vmatprep.mubr.f32.mxu0 0.0
      %368 = vmatmul.mubr.f32.gmra.mrb[0].mxu0 %v198
      %v369 = vpop.f32.mrb[0].mxu0
      %v370 = vadd.f32 0.0, %v369
      %v371 = vpop.f32.mrb[0].mxu0
      %372 = vmatprep.mubr.f32.mxu0 0.0
      %373 = vmatmul.mubr.f32.gmra.mrb[0].mxu0 %v201
      %v374 = vpop.f32.mrb[0].mxu0
      %v375 = vadd.f32 0.0, %v374
      %v376 = vpop.f32.mrb[0].mxu0
      %377 = vmatprep.mubr.f32.mxu0 0.0
      %378 = vmatmul.mubr.f32.gmra.mrb[0].mxu0 %v204
      %v379 = vpop.f32.mrb[0].mxu0
      %v380 = vadd.f32 0.0, %v379
      %v381 = vpop.f32.mrb[0].mxu0
      %382 = vmatprep.mubr.f32.mxu0 0.0
      %383 = vmatmul.mubr.f32.gmra.mrb[0].mxu0 %v207
      %v384 = vpop.f32.mrb[0].mxu0
      %v385 = vadd.f32 0.0, %v384
      %v386 = vpop.f32.mrb[0].mxu0
      %387 = vmatprep.mubr.f32.mxu0 0.0
      %388 = vmatmul.mubr.f32.gmra.mrb[0].mxu0 %v210
      %v389 = vpop.f32.mrb[0].mxu0
      %v390 = vadd.f32 0.0, %v389
      %v391 = vpop.f32.mrb[0].mxu0
      %392 = vmatprep.mubr.f32.mxu0 0.0
      %393 = vmatmul.mubr.f32.gmra.mrb[0].mxu0 %v213
      %v394 = vpop.f32.mrb[0].mxu0
      %v395 = vadd.f32 0.0, %v394
      %v396 = vpop.f32.mrb[0].mxu0
      %397 = vmatprep.mubr.f32.mxu0 0.0
      %398 = vmatmul.mubr.f32.gmra.mrb[0].mxu0 %v216
      %v399 = vpop.f32.mrb[0].mxu0
      %v400 = vadd.f32 0.0, %v399
      %v401 = vpop.f32.mrb[0].mxu0
      %402 = vmatprep.mubr.f32.mxu0 0.0
      %403 = vmatmul.mubr.f32.gmra.mrb[0].mxu0 %v219
      %v404 = vpop.f32.mrb[0].mxu0
      %v405 = vadd.f32 0.0, %v404
      %v406 = vpop.f32.mrb[0].mxu0
      %407 = vmatprep.mubr.f32.mxu0 0.0
      %408 = vmatmul.mubr.f32.gmra.mrb[0].mxu0 %v222
      %v409 = vpop.f32.mrb[0].mxu0
      %v410 = vadd.f32 0.0, %v409
      %v411 = vpop.f32.mrb[0].mxu0
      %412 = vmatprep.mubr.f32.mxu0 0.0
      %413 = vmatmul.mubr.f32.gmra.mrb[0].mxu0 %v225
      %v414 = vpop.f32.mrb[0].mxu0
      %v415 = vadd.f32 0.0, %v414
      %v416 = vpop.f32.mrb[0].mxu0
      %417 = vmatprep.mubr.f32.mxu0 0.0
      %418 = vmatmul.mubr.f32.gmra.mrb[0].mxu0 %v228
      %v419 = vpop.f32.mrb[0].mxu0
      %v420 = vadd.f32 0.0, %v419
      %v421 = vpop.f32.mrb[0].mxu0
      %422 = vmatprep.mubr.f32.mxu0 0.0
      %423 = vmatmul.mubr.f32.gmra.mrb[0].mxu0 %v231
      %v424 = vpop.f32.mrb[0].mxu0
      %v425 = vadd.f32 0.0, %v424
      %v426 = vpop.f32.mrb[0].mxu0
      %427 = vmatprep.mubr.f32.mxu0 0.0
      %428 = vmatmul.mubr.f32.gmra.mrb[0].mxu0 %v234
      %v429 = vpop.f32.mrb[0].mxu0
      %v430 = vadd.f32 0.0, %v429
      %v431 = vpop.f32.mrb[0].mxu0
      %432 = vmatprep.mubr.f32.mxu0 0.0
      %433 = vmatmul.mubr.f32.gmra.mrb[0].mxu0 %v237
      %v434 = vpop.f32.mrb[0].mxu0
      %v435 = vadd.f32 0.0, %v434
      %v436 = vpop.f32.mrb[0].mxu0
      %437 = vmatprep.mubr.f32.mxu0 0.0
      %438 = vmatmul.mubr.f32.gmra.mrb[0].mxu0 %v240
      %v439 = vpop.f32.mrb[0].mxu0
      %v440 = vadd.f32 0.0, %v439
      %v441 = vpop.f32.mrb[0].mxu0
      %442 = vmatprep.mubr.f32.mxu0 0.0
      %443 = vmatmul.mubr.f32.gmra.mrb[0].mxu0 %v243
      %v444 = vpop.f32.mrb[0].mxu0
      %v445 = vadd.f32 0.0, %v444
      %v446 = vpop.f32.mrb[0].mxu0
      %447 = vmatprep.mubr.f32.mxu0 0.0
      %448 = vmatmul.mubr.f32.gmra.mrb[0].mxu0 %v246
      %v449 = vpop.f32.mrb[0].mxu0
      %v450 = vadd.f32 0.0, %v449
      %v451 = vpop.f32.mrb[0].mxu0
      %452 = vmatprep.mubr.f32.mxu0 0.0
      %453 = vmatmul.mubr.f32.gmra.mrb[0].mxu0 %v249
      %v454 = vpop.f32.mrb[0].mxu0
      %v455 = vadd.f32 0.0, %v454
      %v456 = vpop.f32.mrb[0].mxu0
      %457 = vmatprep.mubr.f32.mxu0 0.0
      %458 = vmatmul.mubr.f32.gmra.mrb[0].mxu0 %v252
      %v459 = vpop.f32.mrb[0].mxu0
      %v460 = vadd.f32 0.0, %v459
      %v461 = vpop.f32.mrb[0].mxu0
      %462 = vmatprep.mubr.f32.mxu0 0.0
      %463 = vmatmul.mubr.f32.gmra.mrb[0].mxu0 %v255
      %v464 = vpop.f32.mrb[0].mxu0
      %v465 = vadd.f32 0.0, %v464
      %v466 = vpop.f32.mrb[0].mxu0
      %467 = vmatprep.mubr.f32.mxu0 0.0
      %468 = vmatmul.mubr.f32.gmra.mrb[0].mxu0 %v258
      %v469 = vpop.f32.mrb[0].mxu0
      %v470 = vadd.f32 0.0, %v469
      %v471 = vpop.f32.mrb[0].mxu0
      %472 = vmatprep.mubr.f32.mxu0 0.0
      %473 = vmatmul.mubr.f32.gmra.mrb[0].mxu0 %v261
      %v474 = vpop.f32.mrb[0].mxu0
      %v475 = vadd.f32 0.0, %v474
      %v476 = vpop.f32.mrb[0].mxu0
      %477 = vmatprep.mubr.f32.mxu0 0.0
      %478 = vmatmul.mubr.f32.gmra.mrb[0].mxu0 %v264
      %v479 = vpop.f32.mrb[0].mxu0
      %v480 = vadd.f32 0.0, %v479
      %v481 = vpop.f32.mrb[0].mxu0
      %482 = vmatprep.mubr.f32.mxu0 0.0
      %483 = vmatmul.mubr.f32.gmra.mrb[0].mxu0 %v267
      %v484 = vpop.f32.mrb[0].mxu0
      %v485 = vadd.f32 0.0, %v484
      %v486 = vpop.f32.mrb[0].mxu0
      %487 = vmatprep.mubr.f32.mxu0 0.0
      %488 = vmatmul.mubr.f32.gmra.mrb[0].mxu0 %v270
      %v489 = vpop.f32.mrb[0].mxu0
      %v490 = vadd.f32 0.0, %v489
      %v491 = vpop.f32.mrb[0].mxu0
      %492 = vmatprep.mubr.f32.mxu0 0.0
      %493 = vmatmul.mubr.f32.gmra.mrb[0].mxu0 %v273
      %v494 = vpop.f32.mrb[0].mxu0
      %v495 = vadd.f32 0.0, %v494
      %v496 = vpop.f32.mrb[0].mxu0
      %497 = vmatprep.mubr.f32.mxu0 0.0
      %498 = vmatmul.mubr.f32.gmra.mrb[0].mxu0 %v276
      %v499 = vpop.f32.mrb[0].mxu0
      %v500 = vadd.f32 0.0, %v499
      %v501 = vpop.f32.mrb[0].mxu0
      %502 = vdwg.mxu0
      %v503 = vpack.c.bf16 %v350, %v345
      %v504 = vpack.c.bf16 %v360, %v355
      %v505 = vpack.c.bf16 %v370, %v365
      %v506 = vpack.c.bf16 %v380, %v375
      %v507 = vpack.c.bf16 %v390, %v385
      %v508 = vpack.c.bf16 %v400, %v395
      %v509 = vpack.c.bf16 %v410, %v405
      %v510 = vpack.c.bf16 %v420, %v415
      %v511 = vpack.c.bf16 %v430, %v425
      %v512 = vpack.c.bf16 %v440, %v435
      %v513 = vpack.c.bf16 %v450, %v445
      %v514 = vpack.c.bf16 %v460, %v455
      %v515 = vpack.c.bf16 %v470, %v465
      %v516 = vpack.c.bf16 %v480, %v475
      %v517 = vpack.c.bf16 %v490, %v485
      %v518 = vpack.c.bf16 %v500, %v495
      %v535 = vunpack.c.l.b16 %v503
      %v536 = vunpack.c.h.b16 %v503
      %v537 = vunpack.c.l.b16 %v504
      %v538 = vunpack.c.h.b16 %v504
      %v539 = vunpack.c.l.b16 %v505
      %v540 = vunpack.c.h.b16 %v505
      %v541 = vunpack.c.l.b16 %v506
      %v542 = vunpack.c.h.b16 %v506
      %v543 = vunpack.c.l.b16 %v507
      %v544 = vunpack.c.h.b16 %v507
      %v545 = vunpack.c.l.b16 %v508
      %v546 = vunpack.c.h.b16 %v508
      %v547 = vunpack.c.l.b16 %v509
      %v548 = vunpack.c.h.b16 %v509
      %v549 = vunpack.c.l.b16 %v510
      %v550 = vunpack.c.h.b16 %v510
      %v551 = vunpack.c.l.b16 %v511
      %v552 = vunpack.c.h.b16 %v511
      %v553 = vunpack.c.l.b16 %v512
      %v554 = vunpack.c.h.b16 %v512
      %v555 = vunpack.c.l.b16 %v513
      %v556 = vunpack.c.h.b16 %v513
      %v557 = vunpack.c.l.b16 %v514
      %v558 = vunpack.c.h.b16 %v514
      %v559 = vunpack.c.l.b16 %v515
      %v560 = vunpack.c.h.b16 %v515
      %v561 = vunpack.c.l.b16 %v516
      %v562 = vunpack.c.h.b16 %v516
      %v563 = vunpack.c.l.b16 %v517
      %v564 = vunpack.c.h.b16 %v517
      %v565 = vunpack.c.l.b16 %v518
      %v566 = vunpack.c.h.b16 %v518
      %v567 = vpack.c.b16 %v535, %v535
      %v568 = vpack.c.b16 %v536, %v536
      %v569 = vpack.c.b16 %v537, %v537
      %v570 = vpack.c.b16 %v538, %v538
      %v571 = vpack.c.b16 %v539, %v539
      %v572 = vpack.c.b16 %v540, %v540
      %v573 = vpack.c.b16 %v541, %v541
      %v574 = vpack.c.b16 %v542, %v542
      %v575 = vpack.c.b16 %v543, %v543
      %v576 = vpack.c.b16 %v544, %v544
      %v577 = vpack.c.b16 %v545, %v545
      %v578 = vpack.c.b16 %v546, %v546
      %v579 = vpack.c.b16 %v547, %v547
      %v580 = vpack.c.b16 %v548, %v548
      %v581 = vpack.c.b16 %v549, %v549
      %v582 = vpack.c.b16 %v550, %v550
      %v583 = vpack.c.b16 %v551, %v551
      %v584 = vpack.c.b16 %v552, %v552
      %v585 = vpack.c.b16 %v553, %v553
      %v586 = vpack.c.b16 %v554, %v554
      %v587 = vpack.c.b16 %v555, %v555
      %v588 = vpack.c.b16 %v556, %v556
      %v589 = vpack.c.b16 %v557, %v557
      %v590 = vpack.c.b16 %v558, %v558
      %v591 = vpack.c.b16 %v559, %v559
      %v592 = vpack.c.b16 %v560, %v560
      %v593 = vpack.c.b16 %v561, %v561
      %v594 = vpack.c.b16 %v562, %v562
      %v595 = vpack.c.b16 %v563, %v563
      %v596 = vpack.c.b16 %v564, %v564
      %v597 = vpack.c.b16 %v565, %v565
      %v598 = vpack.c.b16 %v566, %v566
      %vm631 = vcmask 257024
      %632 = vst.msk [vmem:[%s145] sm:$0xf] %vm631, %v567
      %633 = vst.msk [vmem:[%s145 + $0x4] sm:$0xf] %vm631, %v568
      %634 = vst.msk [vmem:[%s145 + $0x8] sm:$0xf] %vm631, %v569
      %635 = vst.msk [vmem:[%s145 + $0xc] sm:$0xf] %vm631, %v570
      %636 = vst.msk [vmem:[%s145 + $0x10] sm:$0xf] %vm631, %v571
      %637 = vst.msk [vmem:[%s145 + $0x14] sm:$0xf] %vm631, %v572
      %638 = vst.msk [vmem:[%s145 + $0x18] sm:$0xf] %vm631, %v573
      %639 = vst.msk [vmem:[%s145 + $0x1c] sm:$0xf] %vm631, %v574
      %640 = vst.msk [vmem:[%s145 + $0x20] sm:$0xf] %vm631, %v575
      %641 = vst.msk [vmem:[%s145 + $0x24] sm:$0xf] %vm631, %v576
      %642 = vst.msk [vmem:[%s145 + $0x28] sm:$0xf] %vm631, %v577
      %643 = vst.msk [vmem:[%s145 + $0x2c] sm:$0xf] %vm631, %v578
      %644 = vst.msk [vmem:[%s145 + $0x30] sm:$0xf] %vm631, %v579
      %645 = vst.msk [vmem:[%s145 + $0x34] sm:$0xf] %vm631, %v580
      %646 = vst.msk [vmem:[%s145 + $0x38] sm:$0xf] %vm631, %v581
      %647 = vst.msk [vmem:[%s145 + $0x3c] sm:$0xf] %vm631, %v582
      %648 = vst.msk [vmem:[%s145 + $0x40] sm:$0xf] %vm631, %v583
      %649 = vst.msk [vmem:[%s145 + $0x44] sm:$0xf] %vm631, %v584
      %650 = vst.msk [vmem:[%s145 + $0x48] sm:$0xf] %vm631, %v585
      %651 = vst.msk [vmem:[%s145 + $0x4c] sm:$0xf] %vm631, %v586
      %652 = vst.msk [vmem:[%s145 + $0x50] sm:$0xf] %vm631, %v587
      %653 = vst.msk [vmem:[%s145 + $0x54] sm:$0xf] %vm631, %v588
      %654 = vst.msk [vmem:[%s145 + $0x58] sm:$0xf] %vm631, %v589
      %655 = vst.msk [vmem:[%s145 + $0x5c] sm:$0xf] %vm631, %v590
      %656 = vst.msk [vmem:[%s145 + $0x60] sm:$0xf] %vm631, %v591
      %657 = vst.msk [vmem:[%s145 + $0x64] sm:$0xf] %vm631, %v592
      %658 = vst.msk [vmem:[%s145 + $0x68] sm:$0xf] %vm631, %v593
      %659 = vst.msk [vmem:[%s145 + $0x6c] sm:$0xf] %vm631, %v594
      %660 = vst.msk [vmem:[%s145 + $0x70] sm:$0xf] %vm631, %v595
      %661 = vst.msk [vmem:[%s145 + $0x74] sm:$0xf] %vm631, %v596
      %662 = vst.msk [vmem:[%s145 + $0x78] sm:$0xf] %vm631, %v597
      %663 = vst.msk [vmem:[%s145 + $0x7c] sm:$0xf] %vm631, %v598
      %s664 = smul.u32 32, %s13
      %p665 = scmp.lt.s32.totalorder %s664, 63
      %s666 = scalar_select %p665, %s664, 63
      %s667 = smul.addr %s666, 4
      %s668 = scalar_lea.vmem %s2, %s667
      // Predicated region
      $region29: #{vgae_encoder.3} parent=27 // pred_check
        %p669 = pneg %p78
      $region30: #{vgae_encoder.3} parent=27 // pred_check_branch
        %671 = sbr.rel (%p669) target = $region32
      $region31: #{vgae_encoder.3} parent=27 // pred_region
        %s672 = smul.u32 32, %s13
      $region32: #{vgae_encoder.3} parent=27 // pred_fallthru
        _
    $region28: #{vgae_encoder.3} parent=5 // pred_fallthru
      _
    %p673 = scmp.le.s32.totalorder 2, %s8
    // Predicated region
    $region33: #{vgae_encoder.3} parent=5 // pred_check
      %p674 = pneg %p673
    $region34: #{vgae_encoder.3} parent=5 // pred_check_branch
      %676 = sbr.rel (%p674) target = $region36
    $region35: #{vgae_encoder.3} parent=5 // pred_region
      %s677 = ssub.s32 %s8, 2
      // Predicated region
      $region37: #{vgae_encoder.3} parent=35 // pred_check
        %p678 = pneg %p84
      $region38: #{vgae_encoder.3} parent=35 // pred_check_branch
        %680 = sbr.rel (%p678) target = $region40
      $region39: #{vgae_encoder.3} parent=35 // pred_region
        %s681 = smul.u32 32, %s14
        %p682 = scmp.lt.s32.totalorder %s681, 63
        %s683 = scalar_select %p682, %s681, 63
        %s684 = smul.addr %s683, 4
        %s685 = scalar_lea.vmem %s2, %s684
      $region40: #{vgae_encoder.3} parent=35 // pred_fallthru
        _
    $region36: #{vgae_encoder.3} parent=5 // pred_fallthru
      _
  $region6: #{vgae_encoder.3} parent=0 // loop_footer
    %s12 = sadd.s32 1, %s8
  $region7: #{vgae_encoder.3} parent=0 // loop_footer_branch
    %7 = sbr.rel target = $region3
  $region8: #{vgae_encoder.3} parent=0 // loop_exit
    _

// kernel: vgae_encoder.5
$region0: #{vgae_encoder.5}
  #allocation0 [shape = 'u32[]', space=smem, size = 0x4, offset = 0x4, fixed_abs, tag = 'smem constant byte address 0x4 - core index']
  #allocation1 [shape = 'u32[144,128]{1,0:T(1,128)}', space=vmem, size = 0x12000, scoped, tag = 'internal scratch']
  #allocation2 [shape = 'f32[256,128]{1,0:T(8,128)}', space=vmem, size = 0x20000, scoped, tag = 'scratch operand']
  %s0 = inlined_call_operand.vmem [shape: bf16[512,512], index: 0, kind: input, shape index: {}]
  %s1 = inlined_call_operand.vmem [shape: bf16[512,128], index: 1, kind: input, shape index: {}]
  %s2 = inlined_call_operand.vmem [shape: f32[1,128], index: 2, kind: input, shape index: {}]
  %s3 = inlined_call_operand.vmem [shape: f32[512,128], index: 3, kind: output, shape index: {}]
  %s4 = sld [smem:[#allocation0]]
  $region91: #{vgae_encoder.5} parent=0
    _
  %s6 = ssub.s32 1, %s4
  %s7 = scalar_select 0, %s6, %s4
  $region1: #{vgae_encoder.5} parent=0
    #allocation3 [shape = 'u8[262144]{0}', space=vmem, size = 0x40000, scoped, tag = 'input window, operand 0']
    loop: start=0, step=1, limit=6
    $region2: #{vgae_encoder.5} parent=1 // loop_pre_header
      _
    $region3: #{vgae_encoder.5} parent=1 // loop_header
      %s9 = sphi 0, %s13
      %p10 = scmp.ge.s32.totalorder %s9, 6
      %s16 = sphi 0, %s28
      %s17 = sphi 0, %s24
      %s18 = sphi 0, %s16
      %s19 = sphi 0, %s17
      %s20 = sphi 0, %s18
      %s21 = sphi 0, %s19
      %s33 = sphi 0, %s35
      %s36 = sphi 0, %s33
      %s37 = sphi 0, %s36
      %s53 = sphi 0, %s37
      %s59 = sphi 0, %s61
      %s62 = sphi 0, %s59
      %s63 = sphi 0, %s62
      %s79 = sphi 0, %s63
      %s83 = sphi 0, %s83
      %s85 = sphi 0, %s83
      %s86 = sphi 0, %s85
      %s100 = sphi 0, %s86
      %s106 = sphi 0, %s108
      %s109 = sphi 0, %s106
      %s110 = sphi 0, %s109
      %s126 = sphi 0, %s110
    $region4: #{vgae_encoder.5} parent=1 // loop_header_branch
      %12 = sbr.rel (%p10) target = $region8
    $region5: #{vgae_encoder.5} parent=1 // loop_body
      %s14 = ssub.s32 %s9, 1
      %s15 = ssub.s32 %s9, 2
      %s22 = sadd.s32 1, %s17
      %p23 = scmp.ge.s32.totalorder %s22, 2
      %s24 = scalar_select %p23, 0, %s22
      %s25 = sadd.s32 1, %s16
      %s26 = scalar_select %p23, %s25, %s16
      %p27 = scmp.ge.s32.totalorder %s26, 2
      %s28 = scalar_select %p27, 0, %s26
      %s29 = ssub.s32 %s16, %s28
      %s30 = ssub.s32 %s17, %s24
      %s31 = sor.u32 %s29, %s30
      %p32 = scmp.eq.s32.totalorder %s31, 0
      %s34 = sadd.s32 %s33, 1
      %s35 = scalar_select %p32, %s33, %s34
      %p38 = pneg %p32
      %p39 = scmp.eq.s32.totalorder %s9, 3
      %p40 = por %p38, %p39
      %p41 = scmp.ne.s32.totalorder %s33, %s36
      %p42 = scmp.eq.s32.totalorder %s9, 0
      %p43 = por %p41, %p42
      %p44 = scmp.ne.s32.totalorder %s33, %s36
      %p45 = scmp.eq.s32.totalorder %s14, 3
      %p46 = por %p44, %p45
      %p47 = scmp.ne.s32.totalorder %s36, %s37
      %p48 = scmp.eq.s32.totalorder %s14, 0
      %p49 = por %p47, %p48
      %p50 = scmp.ne.s32.totalorder %s36, %s37
      %p51 = scmp.eq.s32.totalorder %s15, 3
      %p52 = por %p50, %p51
      %p54 = scmp.ne.s32.totalorder %s37, %s53
      %p55 = scmp.eq.s32.totalorder %s15, 0
      %p56 = por %p54, %p55
      %s57 = ssub.s32 %s17, %s24
      %p58 = scmp.eq.s32.totalorder %s57, 0
      %s60 = sadd.s32 %s59, 1
      %s61 = scalar_select %p58, %s59, %s60
      %p64 = pneg %p58
      %p65 = scmp.eq.s32.totalorder %s9, 3
      %p66 = por %p64, %p65
      %p67 = scmp.ne.s32.totalorder %s59, %s62
      %p68 = scmp.eq.s32.totalorder %s9, 0
      %p69 = por %p67, %p68
      %p70 = scmp.ne.s32.totalorder %s59, %s62
      %p71 = scmp.eq.s32.totalorder %s14, 3
      %p72 = por %p70, %p71
      %p73 = scmp.ne.s32.totalorder %s62, %s63
      %p74 = scmp.eq.s32.totalorder %s14, 0
      %p75 = por %p73, %p74
      %p76 = scmp.ne.s32.totalorder %s62, %s63
      %p77 = scmp.eq.s32.totalorder %s15, 3
      %p78 = por %p76, %p77
      %p80 = scmp.ne.s32.totalorder %s63, %s79
      %p81 = scmp.eq.s32.totalorder %s15, 0
      %p82 = por %p80, %p81
      %s84 = sadd.s32 %s83, 1
      %p87 = scmp.eq.s32.totalorder %s9, 3
      %p88 = scmp.ne.s32.totalorder %s83, %s85
      %p89 = scmp.eq.s32.totalorder %s9, 0
      %p90 = por %p88, %p89
      %p91 = scmp.ne.s32.totalorder %s83, %s85
      %p92 = scmp.eq.s32.totalorder %s14, 3
      %p93 = por %p91, %p92
      %p94 = scmp.ne.s32.totalorder %s85, %s86
      %p95 = scmp.eq.s32.totalorder %s14, 0
      %p96 = por %p94, %p95
      %p97 = scmp.ne.s32.totalorder %s85, %s86
      %p98 = scmp.eq.s32.totalorder %s15, 3
      %p99 = por %p97, %p98
      %p101 = scmp.ne.s32.totalorder %s86, %s100
      %p102 = scmp.eq.s32.totalorder %s15, 0
      %p103 = por %p101, %p102
      %s104 = ssub.s32 %s16, %s28
      %p105 = scmp.eq.s32.totalorder %s104, 0
      %s107 = sadd.s32 %s106, 1
      %s108 = scalar_select %p105, %s106, %s107
      %p111 = pneg %p105
      %p112 = scmp.eq.s32.totalorder %s9, 3
      %p113 = por %p111, %p112
      %p114 = scmp.ne.s32.totalorder %s106, %s109
      %p115 = scmp.eq.s32.totalorder %s9, 0
      %p116 = por %p114, %p115
      %p117 = scmp.ne.s32.totalorder %s106, %s109
      %p118 = scmp.eq.s32.totalorder %s14, 3
      %p119 = por %p117, %p118
      %p120 = scmp.ne.s32.totalorder %s109, %s110
      %p121 = scmp.eq.s32.totalorder %s14, 0
      %p122 = por %p120, %p121
      %p123 = scmp.ne.s32.totalorder %s109, %s110
      %p124 = scmp.eq.s32.totalorder %s15, 3
      %p125 = por %p123, %p124
      %p127 = scmp.ne.s32.totalorder %s110, %s126
      %p128 = scmp.eq.s32.totalorder %s15, 0
      %p129 = por %p127, %p128
      %p130 = scmp.le.s32.totalorder 1, %s9
      %p131 = scmp.lt.s32.totalorder %s9, 5
      %p132 = pnand %p130, %p131
      %p133 = pneg %p132
      // Predicated region
      $region9: #{vgae_encoder.5} parent=5 // pred_check
        _
      $region10: #{vgae_encoder.5} parent=5 // pred_check_branch
        %135 = sbr.rel (%p132) target = $region12
      $region11: #{vgae_encoder.5} parent=5 // pred_region
        %s136 = ssub.s32 %s9, 1
        // Predicated region
        $region13: #{vgae_encoder.5} parent=11 // pred_check
          %p137 = pneg %p96
        $region14: #{vgae_encoder.5} parent=11 // pred_check_branch
          %139 = sbr.rel (%p137) target = $region16
        $region15: #{vgae_encoder.5} parent=11 // pred_region
          _
        $region16: #{vgae_encoder.5} parent=11 // pred_fallthru
          _
      $region12: #{vgae_encoder.5} parent=5 // pred_fallthru
        _
      %p140 = scmp.lt.s32.totalorder %s9, 4
      // Predicated region
      $region17: #{vgae_encoder.5} parent=5 // pred_check
        %p141 = pneg %p140
      $region18: #{vgae_encoder.5} parent=5 // pred_check_branch
        %143 = sbr.rel (%p141) target = $region20
      $region19: #{vgae_encoder.5} parent=5 // pred_region
        // Predicated region
        $region21: #{vgae_encoder.5} parent=19 // pred_check
          %p144 = pneg %p43
        $region22: #{vgae_encoder.5} parent=19 // pred_check_branch
          %146 = sbr.rel (%p144) target = $region24
        $region23: #{vgae_encoder.5} parent=19 // pred_region
          %s147 = sand.u32 %s33, 1
          %s148 = sand.u32 %s33, 1
          %s149 = smul.addr %s148, 256
          %s150 = scalar_lea.vmem [#allocation3], %s149
          %s151 = smul.u32 32, %s16
          %s152 = smul.u32 2, %s17
          %s153 = smul.addr %s151, 4
          %s154 = sadd.s32 %s152, %s153
          %s155 = smul.addr %s154, 4
          %s156 = scalar_lea.vmem %s0, %s155
          // Predicated region
          $region25: #{vgae_encoder.5} parent=23 // pred_check
            _
          $region26: #{vgae_encoder.5} parent=23 // pred_check_branch
            %158 = sbr.rel (0) target = $region28
          $region27: #{vgae_encoder.5} parent=23 // pred_region
            // Predicated region
            $region29: #{vgae_encoder.5} parent=27 // pred_check
              _
            $region30: #{vgae_encoder.5} parent=27 // pred_check_branch
              %160 = sbr.rel (0) target = $region32
            $region31: #{vgae_encoder.5} parent=27 // pred_region
              // Predicated region
              $region44: #{vgae_encoder.5} parent=31 // pred_check
                _
              $region45: #{vgae_encoder.5} parent=31 // pred_check_branch
                %237 = sbr.rel (0) target = $region47
              $region46: #{vgae_encoder.5} parent=31 // pred_region
                loop: start=0, step=1, limit=1
                $region48: #{vgae_encoder.5} parent=46 // loop_pre_header
                  _
                $region49: #{vgae_encoder.5} parent=46 // loop_header
                  %s239 = sphi 0, %s243
                  %p240 = scmp.ge.s32.totalorder %s239, 1
                  %s244 = sphi %s156, %s156
                  %s245 = sphi %s150, %s150
                $region50: #{vgae_encoder.5} parent=46 // loop_header_branch
                  %242 = sbr.rel (%p240) target = $region54
                $region51: #{vgae_encoder.5} parent=46 // loop_body
                  %v246 = vld [vmem:[%s244] sm:$0xff]
                  %247 = vst [vmem:[%s245] sm:$0xff] %v246
                  %v248 = vld [vmem:[%s244 + $0x10] sm:$0xff]
                  %249 = vst [vmem:[%s245 + $0x8] sm:$0xff] %v248
                  %v250 = vld [vmem:[%s244 + $0x20] sm:$0xff]
                  %251 = vst [vmem:[%s245 + $0x10] sm:$0xff] %v250
                  %v252 = vld [vmem:[%s244 + $0x30] sm:$0xff]
                  %253 = vst [vmem:[%s245 + $0x18] sm:$0xff] %v252
                  %v254 = vld [vmem:[%s244 + $0x40] sm:$0xff]
                  %255 = vst [vmem:[%s245 + $0x20] sm:$0xff] %v254
                  %v256 = vld [vmem:[%s244 + $0x50] sm:$0xff]
                  %257 = vst [vmem:[%s245 + $0x28] sm:$0xff] %v256
                  %v258 = vld [vmem:[%s244 + $0x60] sm:$0xff]
                  %259 = vst [vmem:[%s245 + $0x30] sm:$0xff] %v258
                  %v260 = vld [vmem:[%s244 + $0x70] sm:$0xff]
                  %261 = vst [vmem:[%s245 + $0x38] sm:$0xff] %v260
                  %v262 = vld [vmem:[%s244 + $0x80] sm:$0xff]
                  %263 = vst [vmem:[%s245 + $0x40] sm:$0xff] %v262
                  %v264 = vld [vmem:[%s244 + $0x90] sm:$0xff]
                  %265 = vst [vmem:[%s245 + $0x48] sm:$0xff] %v264
                  %v266 = vld [vmem:[%s244 + $0xa0] sm:$0xff]
                  %267 = vst [vmem:[%s245 + $0x50] sm:$0xff] %v266
                  %v268 = vld [vmem:[%s244 + $0xb0] sm:$0xff]
                  %269 = vst [vmem:[%s245 + $0x58] sm:$0xff] %v268
                  %v270 = vld [vmem:[%s244 + $0xc0] sm:$0xff]
                  %271 = vst [vmem:[%s245 + $0x60] sm:$0xff] %v270
                  %v272 = vld [vmem:[%s244 + $0xd0] sm:$0xff]
                  %273 = vst [vmem:[%s245 + $0x68] sm:$0xff] %v272
                  %v274 = vld [vmem:[%s244 + $0xe0] sm:$0xff]
                  %275 = vst [vmem:[%s245 + $0x70] sm:$0xff] %v274
                  %v276 = vld [vmem:[%s244 + $0xf0] sm:$0xff]
                  %277 = vst [vmem:[%s245 + $0x78] sm:$0xff] %v276
                  %v278 = vld [vmem:[%s244 + $0x100] sm:$0xff]
                  %279 = vst [vmem:[%s245 + $0x80] sm:$0xff] %v278
                  %v280 = vld [vmem:[%s244 + $0x110] sm:$0xff]
                  %281 = vst [vmem:[%s245 + $0x88] sm:$0xff] %v280
                  %v282 = vld [vmem:[%s244 + $0x120] sm:$0xff]
                  %283 = vst [vmem:[%s245 + $0x90] sm:$0xff] %v282
                  %v284 = vld [vmem:[%s244 + $0x130] sm:$0xff]
                  %285 = vst [vmem:[%s245 + $0x98] sm:$0xff] %v284
                  %v286 = vld [vmem:[%s244 + $0x140] sm:$0xff]
                  %287 = vst [vmem:[%s245 + $0xa0] sm:$0xff] %v286
                  %v288 = vld [vmem:[%s244 + $0x150] sm:$0xff]
                  %289 = vst [vmem:[%s245 + $0xa8] sm:$0xff] %v288
                  %v290 = vld [vmem:[%s244 + $0x160] sm:$0xff]
                  %291 = vst [vmem:[%s245 + $0xb0] sm:$0xff] %v290
                  %v292 = vld [vmem:[%s244 + $0x170] sm:$0xff]
                  %293 = vst [vmem:[%s245 + $0xb8] sm:$0xff] %v292
                  %v294 = vld [vmem:[%s244 + $0x180] sm:$0xff]
                  %295 = vst [vmem:[%s245 + $0xc0] sm:$0xff] %v294
                  %v296 = vld [vmem:[%s244 + $0x190] sm:$0xff]
                  %297 = vst [vmem:[%s245 + $0xc8] sm:$0xff] %v296
                  %v298 = vld [vmem:[%s244 + $0x1a0] sm:$0xff]
                  %299 = vst [vmem:[%s245 + $0xd0] sm:$0xff] %v298
                  %v300 = vld [vmem:[%s244 + $0x1b0] sm:$0xff]
                  %301 = vst [vmem:[%s245 + $0xd8] sm:$0xff] %v300
                  %v302 = vld [vmem:[%s244 + $0x1c0] sm:$0xff]
                  %303 = vst [vmem:[%s245 + $0xe0] sm:$0xff] %v302
                  %v304 = vld [vmem:[%s244 + $0x1d0] sm:$0xff]
                  %305 = vst [vmem:[%s245 + $0xe8] sm:$0xff] %v304
                  %v306 = vld [vmem:[%s244 + $0x1e0] sm:$0xff]
                  %307 = vst [vmem:[%s245 + $0xf0] sm:$0xff] %v306
                  %v308 = vld [vmem:[%s244 + $0x1f0] sm:$0xff]
                  %309 = vst [vmem:[%s245 + $0xf8] sm:$0xff] %v308
                $region52: #{vgae_encoder.5} parent=46 // loop_footer
                  %s243 = sadd.s32 1, %s239
                $region53: #{vgae_encoder.5} parent=46 // loop_footer_branch
                  %238 = sbr.rel target = $region49
                $region54: #{vgae_encoder.5} parent=46 // loop_exit
                  _
              $region47: #{vgae_encoder.5} parent=31 // pred_fallthru
                _
              // Predicated region
              $region55: #{vgae_encoder.5} parent=31 // pred_check
                _
              $region56: #{vgae_encoder.5} parent=31 // pred_check_branch
                %311 = sbr.rel target = $region58
              $region57: #{vgae_encoder.5} parent=31 // pred_region
                _
              $region58: #{vgae_encoder.5} parent=31 // pred_fallthru
                _
            $region32: #{vgae_encoder.5} parent=27 // pred_fallthru
              _
            // Predicated region
            $region33: #{vgae_encoder.5} parent=27 // pred_check
              _
            $region34: #{vgae_encoder.5} parent=27 // pred_check_branch
              %162 = sbr.rel target = $region36
            $region35: #{vgae_encoder.5} parent=27 // pred_region
              loop: start=0, step=1, limit=1
              $region37: #{vgae_encoder.5} parent=35 // loop_pre_header
                _
              $region38: #{vgae_encoder.5} parent=35 // loop_header
                %s165 = sphi 0, %s169
                %p166 = scmp.ge.s32.totalorder %s165, 1
                %s170 = sphi %s156, %s156
                %s171 = sphi %s150, %s150
              $region39: #{vgae_encoder.5} parent=35 // loop_header_branch
                %168 = sbr.rel (%p166) target = $region43
              $region40: #{vgae_encoder.5} parent=35 // loop_body
                %v172 = vld [vmem:[%s170] sm:$0xff]
                %173 = vst [vmem:[%s171] sm:$0xff] %v172
                %v174 = vld [vmem:[%s170 + $0x10] sm:$0xff]
                %175 = vst [vmem:[%s171 + $0x8] sm:$0xff] %v174
                %v176 = vld [vmem:[%s170 + $0x20] sm:$0xff]
                %177 = vst [vmem:[%s171 + $0x10] sm:$0xff] %v176
                %v178 = vld [vmem:[%s170 + $0x30] sm:$0xff]
                %179 = vst [vmem:[%s171 + $0x18] sm:$0xff] %v178
                %v180 = vld [vmem:[%s170 + $0x40] sm:$0xff]
                %181 = vst [vmem:[%s171 + $0x20] sm:$0xff] %v180
                %v182 = vld [vmem:[%s170 + $0x50] sm:$0xff]
                %183 = vst [vmem:[%s171 + $0x28] sm:$0xff] %v182
                %v184 = vld [vmem:[%s170 + $0x60] sm:$0xff]
                %185 = vst [vmem:[%s171 + $0x30] sm:$0xff] %v184
                %v186 = vld [vmem:[%s170 + $0x70] sm:$0xff]
                %187 = vst [vmem:[%s171 + $0x38] sm:$0xff] %v186
                %v188 = vld [vmem:[%s170 + $0x80] sm:$0xff]
                %189 = vst [vmem:[%s171 + $0x40] sm:$0xff] %v188
                %v190 = vld [vmem:[%s170 + $0x90] sm:$0xff]
                %191 = vst [vmem:[%s171 + $0x48] sm:$0xff] %v190
                %v192 = vld [vmem:[%s170 + $0xa0] sm:$0xff]
                %193 = vst [vmem:[%s171 + $0x50] sm:$0xff] %v192
                %v194 = vld [vmem:[%s170 + $0xb0] sm:$0xff]
                %195 = vst [vmem:[%s171 + $0x58] sm:$0xff] %v194
                %v196 = vld [vmem:[%s170 + $0xc0] sm:$0xff]
                %197 = vst [vmem:[%s171 + $0x60] sm:$0xff] %v196
                %v198 = vld [vmem:[%s170 + $0xd0] sm:$0xff]
                %199 = vst [vmem:[%s171 + $0x68] sm:$0xff] %v198
                %v200 = vld [vmem:[%s170 + $0xe0] sm:$0xff]
                %201 = vst [vmem:[%s171 + $0x70] sm:$0xff] %v200
                %v202 = vld [vmem:[%s170 + $0xf0] sm:$0xff]
                %203 = vst [vmem:[%s171 + $0x78] sm:$0xff] %v202
                %v204 = vld [vmem:[%s170 + $0x100] sm:$0xff]
                %205 = vst [vmem:[%s171 + $0x80] sm:$0xff] %v204
                %v206 = vld [vmem:[%s170 + $0x110] sm:$0xff]
                %207 = vst [vmem:[%s171 + $0x88] sm:$0xff] %v206
                %v208 = vld [vmem:[%s170 + $0x120] sm:$0xff]
                %209 = vst [vmem:[%s171 + $0x90] sm:$0xff] %v208
                %v210 = vld [vmem:[%s170 + $0x130] sm:$0xff]
                %211 = vst [vmem:[%s171 + $0x98] sm:$0xff] %v210
                %v212 = vld [vmem:[%s170 + $0x140] sm:$0xff]
                %213 = vst [vmem:[%s171 + $0xa0] sm:$0xff] %v212
                %v214 = vld [vmem:[%s170 + $0x150] sm:$0xff]
                %215 = vst [vmem:[%s171 + $0xa8] sm:$0xff] %v214
                %v216 = vld [vmem:[%s170 + $0x160] sm:$0xff]
                %217 = vst [vmem:[%s171 + $0xb0] sm:$0xff] %v216
                %v218 = vld [vmem:[%s170 + $0x170] sm:$0xff]
                %219 = vst [vmem:[%s171 + $0xb8] sm:$0xff] %v218
                %v220 = vld [vmem:[%s170 + $0x180] sm:$0xff]
                %221 = vst [vmem:[%s171 + $0xc0] sm:$0xff] %v220
                %v222 = vld [vmem:[%s170 + $0x190] sm:$0xff]
                %223 = vst [vmem:[%s171 + $0xc8] sm:$0xff] %v222
                %v224 = vld [vmem:[%s170 + $0x1a0] sm:$0xff]
                %225 = vst [vmem:[%s171 + $0xd0] sm:$0xff] %v224
                %v226 = vld [vmem:[%s170 + $0x1b0] sm:$0xff]
                %227 = vst [vmem:[%s171 + $0xd8] sm:$0xff] %v226
                %v228 = vld [vmem:[%s170 + $0x1c0] sm:$0xff]
                %229 = vst [vmem:[%s171 + $0xe0] sm:$0xff] %v228
                %v230 = vld [vmem:[%s170 + $0x1d0] sm:$0xff]
                %231 = vst [vmem:[%s171 + $0xe8] sm:$0xff] %v230
                %v232 = vld [vmem:[%s170 + $0x1e0] sm:$0xff]
                %233 = vst [vmem:[%s171 + $0xf0] sm:$0xff] %v232
                %v234 = vld [vmem:[%s170 + $0x1f0] sm:$0xff]
                %235 = vst [vmem:[%s171 + $0xf8] sm:$0xff] %v234
              $region41: #{vgae_encoder.5} parent=35 // loop_footer
                %s169 = sadd.s32 1, %s165
              $region42: #{vgae_encoder.5} parent=35 // loop_footer_branch
                %164 = sbr.rel target = $region38
              $region43: #{vgae_encoder.5} parent=35 // loop_exit
                _
            $region36: #{vgae_encoder.5} parent=27 // pred_fallthru
              _
          $region28: #{vgae_encoder.5} parent=23 // pred_fallthru
            _
          %312 = vnop
        $region24: #{vgae_encoder.5} parent=19 // pred_fallthru
          _
        // Predicated region
        $region59: #{vgae_encoder.5} parent=19 // pred_check
          %p313 = pneg %p69
        $region60: #{vgae_encoder.5} parent=19 // pred_check_branch
          %315 = sbr.rel (%p313) target = $region62
        $region61: #{vgae_encoder.5} parent=19 // pred_region
          %s316 = smul.u32 32, %s17
          %p317 = scmp.lt.s32.totalorder %s316, 63
          %s318 = scalar_select %p317, %s316, 63
          %s319 = smul.addr %s318, 4
          %s320 = scalar_lea.vmem %s1, %s319
          %s321 = smul.u32 32, %s17
        $region62: #{vgae_encoder.5} parent=19 // pred_fallthru
          _
      $region20: #{vgae_encoder.5} parent=5 // pred_fallthru
        _
      %p322 = scmp.le.s32.totalorder 1, %s9
      %p323 = scmp.lt.s32.totalorder %s9, 5
      %p324 = pnand %p322, %p323
      %p325 = pneg %p324
      // Predicated region
      $region63: #{vgae_encoder.5} parent=5 // pred_check
        _
      $region64: #{vgae_encoder.5} parent=5 // pred_check_branch
        %327 = sbr.rel (%p324) target = $region66
      $region65: #{vgae_encoder.5} parent=5 // pred_region
        %s328 = ssub.s32 %s9, 1
        %s329 = sand.u32 %s36, 1
        %s330 = sand.u32 %s36, 1
        %s331 = smul.addr %s330, 256
        %s332 = scalar_lea.vmem [#allocation3], %s331
        // Predicated region
        $region67: #{vgae_encoder.5} parent=65 // pred_check
          %p333 = pneg %p49
        $region68: #{vgae_encoder.5} parent=65 // pred_check_branch
          %335 = sbr.rel (%p333) target = $region70
        $region69: #{vgae_encoder.5} parent=65 // pred_region
          _
        $region70: #{vgae_encoder.5} parent=65 // pred_fallthru
          _
        %s336 = sand.u32 %s36, 1
        %s337 = sand.u32 %s36, 1
        %s338 = smul.addr %s337, 256
        %s339 = scalar_lea.vmem [#allocation3], %s338
        %p340 = pneg %p49
        %p341 = pneg %p46
        %s342 = smul.u32 32, %s19
        %p343 = scmp.lt.s32.totalorder %s342, 63
        %s344 = scalar_select %p343, %s342, 63
        %s345 = smul.addr %s344, 4
        %s346 = scalar_lea.vmem %s1, %s345
        %p347 = pneg %p75
        %p348 = pneg %p72
        %p349 = pneg %p96
        %p350 = pneg %p93
        %p351 = pneg %p122
        %p352 = pneg %p119
        %s353 = smul.u32 32, %s18
        %p354 = scmp.lt.s32.totalorder %s353, 63
        %s355 = scalar_select %p354, %s353, 63
        %s356 = smul.addr %s355, 8
        %s357 = scalar_lea.vmem %s3, %s356
        %s358 = smul.u32 32, %s18
        %s359 = smul.u32 2, %s19
        %s360 = smul.u32 32, %s19
        %p361 = scmp.lt.s32.totalorder %s360, 63
        %s362 = scalar_select %p361, %s360, 63
        %s363 = smul.addr %s362, 4
        %s364 = scalar_lea.vmem %s1, %s363
        %s365 = smul.u32 32, %s19
        %s366 = smul.u32 32, %s18
        %p367 = scmp.lt.s32.totalorder %s366, 63
        %s368 = scalar_select %p367, %s366, 63
        %s369 = smul.addr %s368, 8
        %s370 = scalar_lea.vmem %s3, %s369
        %s371 = smul.u32 32, %s18
        %p373 = scmp.eq.s32.totalorder %s19, 0
        // Predicated region
        $region71: #{vgae_encoder.5} parent=65 // pred_check
          %p374 = pneg %p373
        $region72: #{vgae_encoder.5} parent=65 // pred_check_branch
          %376 = sbr.rel (%p374) target = $region74
        $region73: #{vgae_encoder.5} parent=65 // pred_region
          %377 = vst [vmem:[#allocation2] sm:$0xff] 0.0
          %378 = vst [vmem:[#allocation2 + $0x8] sm:$0xff] 0.0
          %379 = vst [vmem:[#allocation2 + $0x10] sm:$0xff] 0.0
          %380 = vst [vmem:[#allocation2 + $0x18] sm:$0xff] 0.0
          %381 = vst [vmem:[#allocation2 + $0x20] sm:$0xff] 0.0
          %382 = vst [vmem:[#allocation2 + $0x28] sm:$0xff] 0.0
          %383 = vst [vmem:[#allocation2 + $0x30] sm:$0xff] 0.0
          %384 = vst [vmem:[#allocation2 + $0x38] sm:$0xff] 0.0
          %385 = vst [vmem:[#allocation2 + $0x40] sm:$0xff] 0.0
          %386 = vst [vmem:[#allocation2 + $0x48] sm:$0xff] 0.0
          %387 = vst [vmem:[#allocation2 + $0x50] sm:$0xff] 0.0
          %388 = vst [vmem:[#allocation2 + $0x58] sm:$0xff] 0.0
          %389 = vst [vmem:[#allocation2 + $0x60] sm:$0xff] 0.0
          %390 = vst [vmem:[#allocation2 + $0x68] sm:$0xff] 0.0
          %391 = vst [vmem:[#allocation2 + $0x70] sm:$0xff] 0.0
          %392 = vst [vmem:[#allocation2 + $0x78] sm:$0xff] 0.0
          %393 = vst [vmem:[#allocation2 + $0x80] sm:$0xff] 0.0
          %394 = vst [vmem:[#allocation2 + $0x88] sm:$0xff] 0.0
          %395 = vst [vmem:[#allocation2 + $0x90] sm:$0xff] 0.0
          %396 = vst [vmem:[#allocation2 + $0x98] sm:$0xff] 0.0
          %397 = vst [vmem:[#allocation2 + $0xa0] sm:$0xff] 0.0
          %398 = vst [vmem:[#allocation2 + $0xa8] sm:$0xff] 0.0
          %399 = vst [vmem:[#allocation2 + $0xb0] sm:$0xff] 0.0
          %400 = vst [vmem:[#allocation2 + $0xb8] sm:$0xff] 0.0
          %401 = vst [vmem:[#allocation2 + $0xc0] sm:$0xff] 0.0
          %402 = vst [vmem:[#allocation2 + $0xc8] sm:$0xff] 0.0
          %403 = vst [vmem:[#allocation2 + $0xd0] sm:$0xff] 0.0
          %404 = vst [vmem:[#allocation2 + $0xd8] sm:$0xff] 0.0
          %405 = vst [vmem:[#allocation2 + $0xe0] sm:$0xff] 0.0
          %406 = vst [vmem:[#allocation2 + $0xe8] sm:$0xff] 0.0
          %407 = vst [vmem:[#allocation2 + $0xf0] sm:$0xff] 0.0
          %408 = vst [vmem:[#allocation2 + $0xf8] sm:$0xff] 0.0
        $region74: #{vgae_encoder.5} parent=65 // pred_fallthru
          _
        %v409 = vld [vmem:[#allocation2] sm:$0xff]
        %v410 = vld [vmem:[#allocation2 + $0x8] sm:$0xff]
        %v411 = vld [vmem:[#allocation2 + $0x10] sm:$0xff]
        %v412 = vld [vmem:[#allocation2 + $0x18] sm:$0xff]
        %v413 = vld [vmem:[#allocation2 + $0x20] sm:$0xff]
        %v414 = vld [vmem:[#allocation2 + $0x28] sm:$0xff]
        %v415 = vld [vmem:[#allocation2 + $0x30] sm:$0xff]
        %v416 = vld [vmem:[#allocation2 + $0x38] sm:$0xff]
        %v417 = vld [vmem:[#allocation2 + $0x40] sm:$0xff]
        %v418 = vld [vmem:[#allocation2 + $0x48] sm:$0xff]
        %v419 = vld [vmem:[#allocation2 + $0x50] sm:$0xff]
        %v420 = vld [vmem:[#allocation2 + $0x58] sm:$0xff]
        %v421 = vld [vmem:[#allocation2 + $0x60] sm:$0xff]
        %v422 = vld [vmem:[#allocation2 + $0x68] sm:$0xff]
        %v423 = vld [vmem:[#allocation2 + $0x70] sm:$0xff]
        %v424 = vld [vmem:[#allocation2 + $0x78] sm:$0xff]
        %v425 = vld [vmem:[#allocation2 + $0x80] sm:$0xff]
        %v426 = vld [vmem:[#allocation2 + $0x88] sm:$0xff]
        %v427 = vld [vmem:[#allocation2 + $0x90] sm:$0xff]
        %v428 = vld [vmem:[#allocation2 + $0x98] sm:$0xff]
        %v429 = vld [vmem:[#allocation2 + $0xa0] sm:$0xff]
        %v430 = vld [vmem:[#allocation2 + $0xa8] sm:$0xff]
        %v431 = vld [vmem:[#allocation2 + $0xb0] sm:$0xff]
        %v432 = vld [vmem:[#allocation2 + $0xb8] sm:$0xff]
        %v433 = vld [vmem:[#allocation2 + $0xc0] sm:$0xff]
        %v434 = vld [vmem:[#allocation2 + $0xc8] sm:$0xff]
        %v435 = vld [vmem:[#allocation2 + $0xd0] sm:$0xff]
        %v436 = vld [vmem:[#allocation2 + $0xd8] sm:$0xff]
        %v437 = vld [vmem:[#allocation2 + $0xe0] sm:$0xff]
        %v438 = vld [vmem:[#allocation2 + $0xe8] sm:$0xff]
        %v439 = vld [vmem:[#allocation2 + $0xf0] sm:$0xff]
        %v440 = vld [vmem:[#allocation2 + $0xf8] sm:$0xff]
        %v441 = vld [vmem:[%s332] sm:$0xff]
        %v442 = vld [vmem:[%s332 + $0x8] sm:$0xff]
        %v443 = vld [vmem:[%s332 + $0x10] sm:$0xff]
        %v444 = vld [vmem:[%s332 + $0x18] sm:$0xff]
        %v445 = vld [vmem:[%s332 + $0x20] sm:$0xff]
        %v446 = vld [vmem:[%s332 + $0x28] sm:$0xff]
        %v447 = vld [vmem:[%s332 + $0x30] sm:$0xff]
        %v448 = vld [vmem:[%s332 + $0x38] sm:$0xff]
        %v449 = vld [vmem:[%s332 + $0x40] sm:$0xff]
        %v450 = vld [vmem:[%s332 + $0x48] sm:$0xff]
        %v451 = vld [vmem:[%s332 + $0x50] sm:$0xff]
        %v452 = vld [vmem:[%s332 + $0x58] sm:$0xff]
        %v453 = vld [vmem:[%s332 + $0x60] sm:$0xff]
        %v454 = vld [vmem:[%s332 + $0x68] sm:$0xff]
        %v455 = vld [vmem:[%s332 + $0x70] sm:$0xff]
        %v456 = vld [vmem:[%s332 + $0x78] sm:$0xff]
        %v457 = vld [vmem:[%s332 + $0x80] sm:$0xff]
        %v458 = vld [vmem:[%s332 + $0x88] sm:$0xff]
        %v459 = vld [vmem:[%s332 + $0x90] sm:$0xff]
        %v460 = vld [vmem:[%s332 + $0x98] sm:$0xff]
        %v461 = vld [vmem:[%s332 + $0xa0] sm:$0xff]
        %v462 = vld [vmem:[%s332 + $0xa8] sm:$0xff]
        %v463 = vld [vmem:[%s332 + $0xb0] sm:$0xff]
        %v464 = vld [vmem:[%s332 + $0xb8] sm:$0xff]
        %v465 = vld [vmem:[%s332 + $0xc0] sm:$0xff]
        %v466 = vld [vmem:[%s332 + $0xc8] sm:$0xff]
        %v467 = vld [vmem:[%s332 + $0xd0] sm:$0xff]
        %v468 = vld [vmem:[%s332 + $0xd8] sm:$0xff]
        %v469 = vld [vmem:[%s332 + $0xe0] sm:$0xff]
        %v470 = vld [vmem:[%s332 + $0xe8] sm:$0xff]
        %v471 = vld [vmem:[%s332 + $0xf0] sm:$0xff]
        %v472 = vld [vmem:[%s332 + $0xf8] sm:$0xff]
        %v473 = vld [vmem:[%s364] sm:$0xf]
        %v474 = vld [vmem:[%s364 + $0x4] sm:$0xf]
        %v475 = vld [vmem:[%s364 + $0x8] sm:$0xf]
        %v476 = vld [vmem:[%s364 + $0xc] sm:$0xf]
        %v477 = vld [vmem:[%s364 + $0x10] sm:$0xf]
        %v478 = vld [vmem:[%s364 + $0x14] sm:$0xf]
        %v479 = vld [vmem:[%s364 + $0x18] sm:$0xf]
        %v480 = vld [vmem:[%s364 + $0x1c] sm:$0xf]
        %v481 = vld [vmem:[%s364 + $0x20] sm:$0xf]
        %v482 = vld [vmem:[%s364 + $0x24] sm:$0xf]
        %v483 = vld [vmem:[%s364 + $0x28] sm:$0xf]
        %v484 = vld [vmem:[%s364 + $0x2c] sm:$0xf]
        %v485 = vld [vmem:[%s364 + $0x30] sm:$0xf]
        %v486 = vld [vmem:[%s364 + $0x34] sm:$0xf]
        %v487 = vld [vmem:[%s364 + $0x38] sm:$0xf]
        %v488 = vld [vmem:[%s364 + $0x3c] sm:$0xf]
        %v489 = vld [vmem:[%s364 + $0x40] sm:$0xf]
        %v490 = vld [vmem:[%s364 + $0x44] sm:$0xf]
        %v491 = vld [vmem:[%s364 + $0x48] sm:$0xf]
        %v492 = vld [vmem:[%s364 + $0x4c] sm:$0xf]
        %v493 = vld [vmem:[%s364 + $0x50] sm:$0xf]
        %v494 = vld [vmem:[%s364 + $0x54] sm:$0xf]
        %v495 = vld [vmem:[%s364 + $0x58] sm:$0xf]
        %v496 = vld [vmem:[%s364 + $0x5c] sm:$0xf]
        %v497 = vld [vmem:[%s364 + $0x60] sm:$0xf]
        %v498 = vld [vmem:[%s364 + $0x64] sm:$0xf]
        %v499 = vld [vmem:[%s364 + $0x68] sm:$0xf]
        %v500 = vld [vmem:[%s364 + $0x6c] sm:$0xf]
        %v501 = vld [vmem:[%s364 + $0x70] sm:$0xf]
        %v502 = vld [vmem:[%s364 + $0x74] sm:$0xf]
        %v503 = vld [vmem:[%s364 + $0x78] sm:$0xf]
        %v504 = vld [vmem:[%s364 + $0x7c] sm:$0xf]
        %v537 = vunpack.c.l.b16 %v441
        %v538 = vunpack.c.h.b16 %v441
        %v539 = vunpack.c.l.b16 %v442
        %v540 = vunpack.c.h.b16 %v442
        %v541 = vunpack.c.l.b16 %v443
        %v542 = vunpack.c.h.b16 %v443
        %v543 = vunpack.c.l.b16 %v444
        %v544 = vunpack.c.h.b16 %v444
        %v545 = vunpack.c.l.b16 %v445
        %v546 = vunpack.c.h.b16 %v445
        %v547 = vunpack.c.l.b16 %v446
        %v548 = vunpack.c.h.b16 %v446
        %v549 = vunpack.c.l.b16 %v447
        %v550 = vunpack.c.h.b16 %v447
        %v551 = vunpack.c.l.b16 %v448
        %v552 = vunpack.c.h.b16 %v448
        %v553 = vunpack.c.l.b16 %v449
        %v554 = vunpack.c.h.b16 %v449
        %v555 = vunpack.c.l.b16 %v450
        %v556 = vunpack.c.h.b16 %v450
        %v557 = vunpack.c.l.b16 %v451
        %v558 = vunpack.c.h.b16 %v451
        %v559 = vunpack.c.l.b16 %v452
        %v560 = vunpack.c.h.b16 %v452
        %v561 = vunpack.c.l.b16 %v453
        %v562 = vunpack.c.h.b16 %v453
        %v563 = vunpack.c.l.b16 %v454
        %v564 = vunpack.c.h.b16 %v454
        %v565 = vunpack.c.l.b16 %v455
        %v566 = vunpack.c.h.b16 %v455
        %v567 = vunpack.c.l.b16 %v456
        %v568 = vunpack.c.h.b16 %v456
        %v569 = vunpack.c.l.b16 %v457
        %v570 = vunpack.c.h.b16 %v457
        %v571 = vunpack.c.l.b16 %v458
        %v572 = vunpack.c.h.b16 %v458
        %v573 = vunpack.c.l.b16 %v459
        %v574 = vunpack.c.h.b16 %v459
        %v575 = vunpack.c.l.b16 %v460
        %v576 = vunpack.c.h.b16 %v460
        %v577 = vunpack.c.l.b16 %v461
        %v578 = vunpack.c.h.b16 %v461
        %v579 = vunpack.c.l.b16 %v462
        %v580 = vunpack.c.h.b16 %v462
        %v581 = vunpack.c.l.b16 %v463
        %v582 = vunpack.c.h.b16 %v463
        %v583 = vunpack.c.l.b16 %v464
        %v584 = vunpack.c.h.b16 %v464
        %v585 = vunpack.c.l.b16 %v465
        %v586 = vunpack.c.h.b16 %v465
        %v587 = vunpack.c.l.b16 %v466
        %v588 = vunpack.c.h.b16 %v466
        %v589 = vunpack.c.l.b16 %v467
        %v590 = vunpack.c.h.b16 %v467
        %v591 = vunpack.c.l.b16 %v468
        %v592 = vunpack.c.h.b16 %v468
        %v593 = vunpack.c.l.b16 %v469
        %v594 = vunpack.c.h.b16 %v469
        %v595 = vunpack.c.l.b16 %v470
        %v596 = vunpack.c.h.b16 %v470
        %v597 = vunpack.c.l.b16 %v471
        %v598 = vunpack.c.h.b16 %v471
        %v599 = vunpack.c.l.b16 %v472
        %v600 = vunpack.c.h.b16 %v472
        %v601 = vpack.c.b16 %v539, %v537
        %v602 = vpack.c.b16 %v540, %v538
        %v603 = vpack.c.b16 %v543, %v541
        %v604 = vpack.c.b16 %v544, %v542
        %v605 = vpack.c.b16 %v547, %v545
        %v606 = vpack.c.b16 %v548, %v546
        %v607 = vpack.c.b16 %v551, %v549
        %v608 = vpack.c.b16 %v552, %v550
        %v609 = vpack.c.b16 %v555, %v553
        %v610 = vpack.c.b16 %v556, %v554
        %v611 = vpack.c.b16 %v559, %v557
        %v612 = vpack.c.b16 %v560, %v558
        %v613 = vpack.c.b16 %v563, %v561
        %v614 = vpack.c.b16 %v564, %v562
        %v615 = vpack.c.b16 %v567, %v565
        %v616 = vpack.c.b16 %v568, %v566
        %v617 = vpack.c.b16 %v571, %v569
        %v618 = vpack.c.b16 %v572, %v570
        %v619 = vpack.c.b16 %v575, %v573
        %v620 = vpack.c.b16 %v576, %v574
        %v621 = vpack.c.b16 %v579, %v577
        %v622 = vpack.c.b16 %v580, %v578
        %v623 = vpack.c.b16 %v583, %v581
        %v624 = vpack.c.b16 %v584, %v582
        %v625 = vpack.c.b16 %v587, %v585
        %v626 = vpack.c.b16 %v588, %v586
        %v627 = vpack.c.b16 %v591, %v589
        %v628 = vpack.c.b16 %v592, %v590
        %v629 = vpack.c.b16 %v595, %v593
        %v630 = vpack.c.b16 %v596, %v594
        %v631 = vpack.c.b16 %v599, %v597
        %v632 = vpack.c.b16 %v600, %v598
        %v697 = vunpack.c.l.b16 %v473
        %v698 = vunpack.c.l.b16 %v474
        %v699 = vunpack.c.l.b16 %v475
        %v700 = vunpack.c.l.b16 %v476
        %v701 = vunpack.c.l.b16 %v477
        %v702 = vunpack.c.l.b16 %v478
        %v703 = vunpack.c.l.b16 %v479
        %v704 = vunpack.c.l.b16 %v480
        %v705 = vunpack.c.l.b16 %v481
        %v706 = vunpack.c.l.b16 %v482
        %v707 = vunpack.c.l.b16 %v483
        %v708 = vunpack.c.l.b16 %v484
        %v709 = vunpack.c.l.b16 %v485
        %v710 = vunpack.c.l.b16 %v486
        %v711 = vunpack.c.l.b16 %v487
        %v712 = vunpack.c.l.b16 %v488
        %v713 = vunpack.c.l.b16 %v489
        %v714 = vunpack.c.l.b16 %v490
        %v715 = vunpack.c.l.b16 %v491
        %v716 = vunpack.c.l.b16 %v492
        %v717 = vunpack.c.l.b16 %v493
        %v718 = vunpack.c.l.b16 %v494
        %v719 = vunpack.c.l.b16 %v495
        %v720 = vunpack.c.l.b16 %v496
        %v721 = vunpack.c.l.b16 %v497
        %v722 = vunpack.c.l.b16 %v498
        %v723 = vunpack.c.l.b16 %v499
        %v724 = vunpack.c.l.b16 %v500
        %v725 = vunpack.c.l.b16 %v501
        %v726 = vunpack.c.l.b16 %v502
        %v727 = vunpack.c.l.b16 %v503
        %v728 = vunpack.c.l.b16 %v504
        %v729 = vpack.c.b16 %v698, %v697
        %v730 = vpack.c.b16 %v700, %v699
        %v731 = vpack.c.b16 %v702, %v701
        %v732 = vpack.c.b16 %v704, %v703
        %v733 = vpack.c.b16 %v706, %v705
        %v734 = vpack.c.b16 %v708, %v707
        %v735 = vpack.c.b16 %v710, %v709
        %v736 = vpack.c.b16 %v712, %v711
        %v737 = vpack.c.b16 %v714, %v713
        %v738 = vpack.c.b16 %v716, %v715
        %v739 = vpack.c.b16 %v718, %v717
        %v740 = vpack.c.b16 %v720, %v719
        %v741 = vpack.c.b16 %v722, %v721
        %v742 = vpack.c.b16 %v724, %v723
        %v743 = vpack.c.b16 %v726, %v725
        %v744 = vpack.c.b16 %v728, %v727
        %761 = vmatprep.subr.bf16.mxu0 0
        %762 = vmatpush1.bf16.msra.mxu0 %v729
        %763 = vmatprep.subr.bf16.mxu0 0
        %764 = vmatpush1.bf16.msra.mxu0 %v730
        %765 = vmatprep.subr.bf16.mxu0 0
        %766 = vmatpush1.bf16.msra.mxu0 %v731
        %767 = vmatprep.subr.bf16.mxu0 0
        %768 = vmatpush1.bf16.msra.mxu0 %v732
        %769 = vmatprep.subr.bf16.mxu0 0
        %770 = vmatpush1.bf16.msra.mxu0 %v733
        %771 = vmatprep.subr.bf16.mxu0 0
        %772 = vmatpush1.bf16.msra.mxu0 %v734
        %773 = vmatprep.subr.bf16.mxu0 0
        %774 = vmatpush1.bf16.msra.mxu0 %v735
        %775 = vmatprep.subr.bf16.mxu0 0
        %776 = vmatpush1.bf16.msra.mxu0 %v736
        %777 = vmatprep.subr.bf16.mxu0 0
        %778 = vmatpush1.bf16.msra.mxu0 %v737
        %779 = vmatprep.subr.bf16.mxu0 0
        %780 = vmatpush1.bf16.msra.mxu0 %v738
        %781 = vmatprep.subr.bf16.mxu0 0
        %782 = vmatpush1.bf16.msra.mxu0 %v739
        %783 = vmatprep.subr.bf16.mxu0 0
        %784 = vmatpush1.bf16.msra.mxu0 %v740
        %785 = vmatprep.subr.bf16.mxu0 0
        %786 = vmatpush1.bf16.msra.mxu0 %v741
        %787 = vmatprep.subr.bf16.mxu0 0
        %788 = vmatpush1.bf16.msra.mxu0 %v742
        %789 = vmatprep.subr.bf16.mxu0 0
        %790 = vmatpush1.bf16.msra.mxu0 %v743
        %791 = vmatprep.subr.bf16.mxu0 0
        %792 = vmatpush1.bf16.msra.mxu0 %v744
        %793 = vmatprep.mubr.bf16.mxu0 %v602
        %794 = vmatmul.mubr.bf16.gmra.mrb[0].mxu0 %v601
        %v795 = vpop.f32.mrb[0].mxu0
        %v796 = vadd.f32 0.0, %v795
        %v797 = vpop.f32.mrb[0].mxu0
        %v798 = vpop.f32.mrb[0].mxu0
        %v799 = vadd.f32 0.0, %v798
        %v800 = vpop.f32.mrb[0].mxu0
        %801 = vmatprep.mubr.bf16.mxu0 %v604
        %802 = vmatmul.mubr.bf16.gmra.mrb[0].mxu0 %v603
        %v803 = vpop.f32.mrb[0].mxu0
        %v804 = vadd.f32 0.0, %v803
        %v805 = vpop.f32.mrb[0].mxu0
        %v806 = vpop.f32.mrb[0].mxu0
        %v807 = vadd.f32 0.0, %v806
        %v808 = vpop.f32.mrb[0].mxu0
        %809 = vmatprep.mubr.bf16.mxu0 %v606
        %810 = vmatmul.mubr.bf16.gmra.mrb[0].mxu0 %v605
        %v811 = vpop.f32.mrb[0].mxu0
        %v812 = vadd.f32 0.0, %v811
        %v813 = vpop.f32.mrb[0].mxu0
        %v814 = vpop.f32.mrb[0].mxu0
        %v815 = vadd.f32 0.0, %v814
        %v816 = vpop.f32.mrb[0].mxu0
        %817 = vmatprep.mubr.bf16.mxu0 %v608
        %818 = vmatmul.mubr.bf16.gmra.mrb[0].mxu0 %v607
        %v819 = vpop.f32.mrb[0].mxu0
        %v820 = vadd.f32 0.0, %v819
        %v821 = vpop.f32.mrb[0].mxu0
        %v822 = vpop.f32.mrb[0].mxu0
        %v823 = vadd.f32 0.0, %v822
        %v824 = vpop.f32.mrb[0].mxu0
        %825 = vmatprep.mubr.bf16.mxu0 %v610
        %826 = vmatmul.mubr.bf16.gmra.mrb[0].mxu0 %v609
        %v827 = vpop.f32.mrb[0].mxu0
        %v828 = vadd.f32 0.0, %v827
        %v829 = vpop.f32.mrb[0].mxu0
        %v830 = vpop.f32.mrb[0].mxu0
        %v831 = vadd.f32 0.0, %v830
        %v832 = vpop.f32.mrb[0].mxu0
        %833 = vmatprep.mubr.bf16.mxu0 %v612
        %834 = vmatmul.mubr.bf16.gmra.mrb[0].mxu0 %v611
        %v835 = vpop.f32.mrb[0].mxu0
        %v836 = vadd.f32 0.0, %v835
        %v837 = vpop.f32.mrb[0].mxu0
        %v838 = vpop.f32.mrb[0].mxu0
        %v839 = vadd.f32 0.0, %v838
        %v840 = vpop.f32.mrb[0].mxu0
        %841 = vmatprep.mubr.bf16.mxu0 %v614
        %842 = vmatmul.mubr.bf16.gmra.mrb[0].mxu0 %v613
        %v843 = vpop.f32.mrb[0].mxu0
        %v844 = vadd.f32 0.0, %v843
        %v845 = vpop.f32.mrb[0].mxu0
        %v846 = vpop.f32.mrb[0].mxu0
        %v847 = vadd.f32 0.0, %v846
        %v848 = vpop.f32.mrb[0].mxu0
        %849 = vmatprep.mubr.bf16.mxu0 %v616
        %850 = vmatmul.mubr.bf16.gmra.mrb[0].mxu0 %v615
        %v851 = vpop.f32.mrb[0].mxu0
        %v852 = vadd.f32 0.0, %v851
        %v853 = vpop.f32.mrb[0].mxu0
        %v854 = vpop.f32.mrb[0].mxu0
        %v855 = vadd.f32 0.0, %v854
        %v856 = vpop.f32.mrb[0].mxu0
        %857 = vmatprep.mubr.bf16.mxu0 %v618
        %858 = vmatmul.mubr.bf16.gmra.mrb[0].mxu0 %v617
        %v859 = vpop.f32.mrb[0].mxu0
        %v860 = vadd.f32 0.0, %v859
        %v861 = vpop.f32.mrb[0].mxu0
        %v862 = vpop.f32.mrb[0].mxu0
        %v863 = vadd.f32 0.0, %v862
        %v864 = vpop.f32.mrb[0].mxu0
        %865 = vmatprep.mubr.bf16.mxu0 %v620
        %866 = vmatmul.mubr.bf16.gmra.mrb[0].mxu0 %v619
        %v867 = vpop.f32.mrb[0].mxu0
        %v868 = vadd.f32 0.0, %v867
        %v869 = vpop.f32.mrb[0].mxu0
        %v870 = vpop.f32.mrb[0].mxu0
        %v871 = vadd.f32 0.0, %v870
        %v872 = vpop.f32.mrb[0].mxu0
        %873 = vmatprep.mubr.bf16.mxu0 %v622
        %874 = vmatmul.mubr.bf16.gmra.mrb[0].mxu0 %v621
        %v875 = vpop.f32.mrb[0].mxu0
        %v876 = vadd.f32 0.0, %v875
        %v877 = vpop.f32.mrb[0].mxu0
        %v878 = vpop.f32.mrb[0].mxu0
        %v879 = vadd.f32 0.0, %v878
        %v880 = vpop.f32.mrb[0].mxu0
        %881 = vmatprep.mubr.bf16.mxu0 %v624
        %882 = vmatmul.mubr.bf16.gmra.mrb[0].mxu0 %v623
        %v883 = vpop.f32.mrb[0].mxu0
        %v884 = vadd.f32 0.0, %v883
        %v885 = vpop.f32.mrb[0].mxu0
        %v886 = vpop.f32.mrb[0].mxu0
        %v887 = vadd.f32 0.0, %v886
        %v888 = vpop.f32.mrb[0].mxu0
        %889 = vmatprep.mubr.bf16.mxu0 %v626
        %890 = vmatmul.mubr.bf16.gmra.mrb[0].mxu0 %v625
        %v891 = vpop.f32.mrb[0].mxu0
        %v892 = vadd.f32 0.0, %v891
        %v893 = vpop.f32.mrb[0].mxu0
        %v894 = vpop.f32.mrb[0].mxu0
        %v895 = vadd.f32 0.0, %v894
        %v896 = vpop.f32.mrb[0].mxu0
        %897 = vmatprep.mubr.bf16.mxu0 %v628
        %898 = vmatmul.mubr.bf16.gmra.mrb[0].mxu0 %v627
        %v899 = vpop.f32.mrb[0].mxu0
        %v900 = vadd.f32 0.0, %v899
        %v901 = vpop.f32.mrb[0].mxu0
        %v902 = vpop.f32.mrb[0].mxu0
        %v903 = vadd.f32 0.0, %v902
        %v904 = vpop.f32.mrb[0].mxu0
        %905 = vmatprep.mubr.bf16.mxu0 %v630
        %906 = vmatmul.mubr.bf16.gmra.mrb[0].mxu0 %v629
        %v907 = vpop.f32.mrb[0].mxu0
        %v908 = vadd.f32 0.0, %v907
        %v909 = vpop.f32.mrb[0].mxu0
        %v910 = vpop.f32.mrb[0].mxu0
        %v911 = vadd.f32 0.0, %v910
        %v912 = vpop.f32.mrb[0].mxu0
        %913 = vmatprep.mubr.bf16.mxu0 %v632
        %914 = vmatmul.mubr.bf16.gmra.mrb[0].mxu0 %v631
        %v915 = vpop.f32.mrb[0].mxu0
        %v916 = vadd.f32 0.0, %v915
        %v917 = vpop.f32.mrb[0].mxu0
        %v918 = vpop.f32.mrb[0].mxu0
        %v919 = vadd.f32 0.0, %v918
        %v920 = vpop.f32.mrb[0].mxu0
        %921 = vdwg.mxu0
        %v922 = vadd.f32 %v409, %v796
        %v923 = vadd.f32 %v410, %v799
        %v924 = vadd.f32 %v411, %v804
        %v925 = vadd.f32 %v412, %v807
        %v926 = vadd.f32 %v413, %v812
        %v927 = vadd.f32 %v414, %v815
        %v928 = vadd.f32 %v415, %v820
        %v929 = vadd.f32 %v416, %v823
        %v930 = vadd.f32 %v417, %v828
        %v931 = vadd.f32 %v418, %v831
        %v932 = vadd.f32 %v419, %v836
        %v933 = vadd.f32 %v420, %v839
        %v934 = vadd.f32 %v421, %v844
        %v935 = vadd.f32 %v422, %v847
        %v936 = vadd.f32 %v423, %v852
        %v937 = vadd.f32 %v424, %v855
        %v938 = vadd.f32 %v425, %v860
        %v939 = vadd.f32 %v426, %v863
        %v940 = vadd.f32 %v427, %v868
        %v941 = vadd.f32 %v428, %v871
        %v942 = vadd.f32 %v429, %v876
        %v943 = vadd.f32 %v430, %v879
        %v944 = vadd.f32 %v431, %v884
        %v945 = vadd.f32 %v432, %v887
        %v946 = vadd.f32 %v433, %v892
        %v947 = vadd.f32 %v434, %v895
        %v948 = vadd.f32 %v435, %v900
        %v949 = vadd.f32 %v436, %v903
        %v950 = vadd.f32 %v437, %v908
        %v951 = vadd.f32 %v438, %v911
        %v952 = vadd.f32 %v439, %v916
        %v953 = vadd.f32 %v440, %v919
        %954 = vst [vmem:[#allocation2] sm:$0xff] %v922
        %955 = vst [vmem:[#allocation2 + $0x8] sm:$0xff] %v923
        %956 = vst [vmem:[#allocation2 + $0x10] sm:$0xff] %v924
        %957 = vst [vmem:[#allocation2 + $0x18] sm:$0xff] %v925
        %958 = vst [vmem:[#allocation2 + $0x20] sm:$0xff] %v926
        %959 = vst [vmem:[#allocation2 + $0x28] sm:$0xff] %v927
        %960 = vst [vmem:[#allocation2 + $0x30] sm:$0xff] %v928
        %961 = vst [vmem:[#allocation2 + $0x38] sm:$0xff] %v929
        %962 = vst [vmem:[#allocation2 + $0x40] sm:$0xff] %v930
        %963 = vst [vmem:[#allocation2 + $0x48] sm:$0xff] %v931
        %964 = vst [vmem:[#allocation2 + $0x50] sm:$0xff] %v932
        %965 = vst [vmem:[#allocation2 + $0x58] sm:$0xff] %v933
        %966 = vst [vmem:[#allocation2 + $0x60] sm:$0xff] %v934
        %967 = vst [vmem:[#allocation2 + $0x68] sm:$0xff] %v935
        %968 = vst [vmem:[#allocation2 + $0x70] sm:$0xff] %v936
        %969 = vst [vmem:[#allocation2 + $0x78] sm:$0xff] %v937
        %970 = vst [vmem:[#allocation2 + $0x80] sm:$0xff] %v938
        %971 = vst [vmem:[#allocation2 + $0x88] sm:$0xff] %v939
        %972 = vst [vmem:[#allocation2 + $0x90] sm:$0xff] %v940
        %973 = vst [vmem:[#allocation2 + $0x98] sm:$0xff] %v941
        %974 = vst [vmem:[#allocation2 + $0xa0] sm:$0xff] %v942
        %975 = vst [vmem:[#allocation2 + $0xa8] sm:$0xff] %v943
        %976 = vst [vmem:[#allocation2 + $0xb0] sm:$0xff] %v944
        %977 = vst [vmem:[#allocation2 + $0xb8] sm:$0xff] %v945
        %978 = vst [vmem:[#allocation2 + $0xc0] sm:$0xff] %v946
        %979 = vst [vmem:[#allocation2 + $0xc8] sm:$0xff] %v947
        %980 = vst [vmem:[#allocation2 + $0xd0] sm:$0xff] %v948
        %981 = vst [vmem:[#allocation2 + $0xd8] sm:$0xff] %v949
        %982 = vst [vmem:[#allocation2 + $0xe0] sm:$0xff] %v950
        %983 = vst [vmem:[#allocation2 + $0xe8] sm:$0xff] %v951
        %984 = vst [vmem:[#allocation2 + $0xf0] sm:$0xff] %v952
        %985 = vst [vmem:[#allocation2 + $0xf8] sm:$0xff] %v953
        %p986 = scmp.eq.s32.totalorder %s19, 1
        // Predicated region
        $region75: #{vgae_encoder.5} parent=65 // pred_check
          %p987 = pneg %p986
        $region76: #{vgae_encoder.5} parent=65 // pred_check_branch
          %989 = sbr.rel (%p987) target = $region78
        $region77: #{vgae_encoder.5} parent=65 // pred_region
          %v990 = vld [vmem:[#allocation2] sm:$0xff]
          %v991 = vld [vmem:[#allocation2 + $0x8] sm:$0xff]
          %v992 = vld [vmem:[#allocation2 + $0x10] sm:$0xff]
          %v993 = vld [vmem:[#allocation2 + $0x18] sm:$0xff]
          %v994 = vld [vmem:[#allocation2 + $0x20] sm:$0xff]
          %v995 = vld [vmem:[#allocation2 + $0x28] sm:$0xff]
          %v996 = vld [vmem:[#allocation2 + $0x30] sm:$0xff]
          %v997 = vld [vmem:[#allocation2 + $0x38] sm:$0xff]
          %v998 = vld [vmem:[#allocation2 + $0x40] sm:$0xff]
          %v999 = vld [vmem:[#allocation2 + $0x48] sm:$0xff]
          %v1000 = vld [vmem:[#allocation2 + $0x50] sm:$0xff]
          %v1001 = vld [vmem:[#allocation2 + $0x58] sm:$0xff]
          %v1002 = vld [vmem:[#allocation2 + $0x60] sm:$0xff]
          %v1003 = vld [vmem:[#allocation2 + $0x68] sm:$0xff]
          %v1004 = vld [vmem:[#allocation2 + $0x70] sm:$0xff]
          %v1005 = vld [vmem:[#allocation2 + $0x78] sm:$0xff]
          %v1006 = vld [vmem:[#allocation2 + $0x80] sm:$0xff]
          %v1007 = vld [vmem:[#allocation2 + $0x88] sm:$0xff]
          %v1008 = vld [vmem:[#allocation2 + $0x90] sm:$0xff]
          %v1009 = vld [vmem:[#allocation2 + $0x98] sm:$0xff]
          %v1010 = vld [vmem:[#allocation2 + $0xa0] sm:$0xff]
          %v1011 = vld [vmem:[#allocation2 + $0xa8] sm:$0xff]
          %v1012 = vld [vmem:[#allocation2 + $0xb0] sm:$0xff]
          %v1013 = vld [vmem:[#allocation2 + $0xb8] sm:$0xff]
          %v1014 = vld [vmem:[#allocation2 + $0xc0] sm:$0xff]
          %v1015 = vld [vmem:[#allocation2 + $0xc8] sm:$0xff]
          %v1016 = vld [vmem:[#allocation2 + $0xd0] sm:$0xff]
          %v1017 = vld [vmem:[#allocation2 + $0xd8] sm:$0xff]
          %v1018 = vld [vmem:[#allocation2 + $0xe0] sm:$0xff]
          %v1019 = vld [vmem:[#allocation2 + $0xe8] sm:$0xff]
          %v1020 = vld [vmem:[#allocation2 + $0xf0] sm:$0xff]
          %v1021 = vld [vmem:[#allocation2 + $0xf8] sm:$0xff]
          %v1022 = vld [vmem:[%s2] sm:$0x1]
          %v1024 = vlaneseq
          %v1025 = vshrl.u32 %v1024, 7
          %v1026 = vsub.s32 0, %v1025
          %v1027 = vrot.slane %v1022, %v1026
          %v1029 = vadd.f32 %v990, %v1027
          %v1030 = vadd.f32 %v991, %v1027
          %v1031 = vadd.f32 %v992, %v1027
          %v1032 = vadd.f32 %v993, %v1027
          %v1033 = vadd.f32 %v994, %v1027
          %v1034 = vadd.f32 %v995, %v1027
          %v1035 = vadd.f32 %v996, %v1027
          %v1036 = vadd.f32 %v997, %v1027
          %v1037 = vadd.f32 %v998, %v1027
          %v1038 = vadd.f32 %v999, %v1027
          %v1039 = vadd.f32 %v1000, %v1027
          %v1040 = vadd.f32 %v1001, %v1027
          %v1041 = vadd.f32 %v1002, %v1027
          %v1042 = vadd.f32 %v1003, %v1027
          %v1043 = vadd.f32 %v1004, %v1027
          %v1044 = vadd.f32 %v1005, %v1027
          %v1045 = vadd.f32 %v1006, %v1027
          %v1046 = vadd.f32 %v1007, %v1027
          %v1047 = vadd.f32 %v1008, %v1027
          %v1048 = vadd.f32 %v1009, %v1027
          %v1049 = vadd.f32 %v1010, %v1027
          %v1050 = vadd.f32 %v1011, %v1027
          %v1051 = vadd.f32 %v1012, %v1027
          %v1052 = vadd.f32 %v1013, %v1027
          %v1053 = vadd.f32 %v1014, %v1027
          %v1054 = vadd.f32 %v1015, %v1027
          %v1055 = vadd.f32 %v1016, %v1027
          %v1056 = vadd.f32 %v1017, %v1027
          %v1057 = vadd.f32 %v1018, %v1027
          %v1058 = vadd.f32 %v1019, %v1027
          %v1059 = vadd.f32 %v1020, %v1027
          %v1060 = vadd.f32 %v1021, %v1027
          %1061 = vst [vmem:[%s370] sm:$0xff] %v1029
          %1062 = vst [vmem:[%s370 + $0x8] sm:$0xff] %v1030
          %1063 = vst [vmem:[%s370 + $0x10] sm:$0xff] %v1031
          %1064 = vst [vmem:[%s370 + $0x18] sm:$0xff] %v1032
          %1065 = vst [vmem:[%s370 + $0x20] sm:$0xff] %v1033
          %1066 = vst [vmem:[%s370 + $0x28] sm:$0xff] %v1034
          %1067 = vst [vmem:[%s370 + $0x30] sm:$0xff] %v1035
          %1068 = vst [vmem:[%s370 + $0x38] sm:$0xff] %v1036
          %1069 = vst [vmem:[%s370 + $0x40] sm:$0xff] %v1037
          %1070 = vst [vmem:[%s370 + $0x48] sm:$0xff] %v1038
          %1071 = vst [vmem:[%s370 + $0x50] sm:$0xff] %v1039
          %1072 = vst [vmem:[%s370 + $0x58] sm:$0xff] %v1040
          %1073 = vst [vmem:[%s370 + $0x60] sm:$0xff] %v1041
          %1074 = vst [vmem:[%s370 + $0x68] sm:$0xff] %v1042
          %1075 = vst [vmem:[%s370 + $0x70] sm:$0xff] %v1043
          %1076 = vst [vmem:[%s370 + $0x78] sm:$0xff] %v1044
          %1077 = vst [vmem:[%s370 + $0x80] sm:$0xff] %v1045
          %1078 = vst [vmem:[%s370 + $0x88] sm:$0xff] %v1046
          %1079 = vst [vmem:[%s370 + $0x90] sm:$0xff] %v1047
          %1080 = vst [vmem:[%s370 + $0x98] sm:$0xff] %v1048
          %1081 = vst [vmem:[%s370 + $0xa0] sm:$0xff] %v1049
          %1082 = vst [vmem:[%s370 + $0xa8] sm:$0xff] %v1050
          %1083 = vst [vmem:[%s370 + $0xb0] sm:$0xff] %v1051
          %1084 = vst [vmem:[%s370 + $0xb8] sm:$0xff] %v1052
          %1085 = vst [vmem:[%s370 + $0xc0] sm:$0xff] %v1053
          %1086 = vst [vmem:[%s370 + $0xc8] sm:$0xff] %v1054
          %1087 = vst [vmem:[%s370 + $0xd0] sm:$0xff] %v1055
          %1088 = vst [vmem:[%s370 + $0xd8] sm:$0xff] %v1056
          %1089 = vst [vmem:[%s370 + $0xe0] sm:$0xff] %v1057
          %1090 = vst [vmem:[%s370 + $0xe8] sm:$0xff] %v1058
          %1091 = vst [vmem:[%s370 + $0xf0] sm:$0xff] %v1059
          %1092 = vst [vmem:[%s370 + $0xf8] sm:$0xff] %v1060
        $region78: #{vgae_encoder.5} parent=65 // pred_fallthru
          _
        %s1093 = smul.u32 32, %s18
        %p1094 = scmp.lt.s32.totalorder %s1093, 63
        %s1095 = scalar_select %p1094, %s1093, 63
        %s1096 = smul.addr %s1095, 8
        %s1097 = scalar_lea.vmem %s3, %s1096
        // Predicated region
        $region79: #{vgae_encoder.5} parent=65 // pred_check
          %p1098 = pneg %p119
        $region80: #{vgae_encoder.5} parent=65 // pred_check_branch
          %1100 = sbr.rel (%p1098) target = $region82
        $region81: #{vgae_encoder.5} parent=65 // pred_region
          %s1101 = smul.u32 32, %s18
        $region82: #{vgae_encoder.5} parent=65 // pred_fallthru
          _
      $region66: #{vgae_encoder.5} parent=5 // pred_fallthru
        _
      %p1102 = scmp.le.s32.totalorder 2, %s9
      // Predicated region
      $region83: #{vgae_encoder.5} parent=5 // pred_check
        %p1103 = pneg %p1102
      $region84: #{vgae_encoder.5} parent=5 // pred_check_branch
        %1105 = sbr.rel (%p1103) target = $region86
      $region85: #{vgae_encoder.5} parent=5 // pred_region
        %s1106 = ssub.s32 %s9, 2
        // Predicated region
        $region87: #{vgae_encoder.5} parent=85 // pred_check
          %p1107 = pneg %p125
        $region88: #{vgae_encoder.5} parent=85 // pred_check_branch
          %1109 = sbr.rel (%p1107) target = $region90
        $region89: #{vgae_encoder.5} parent=85 // pred_region
          %s1110 = smul.u32 32, %s20
          %p1111 = scmp.lt.s32.totalorder %s1110, 63
          %s1112 = scalar_select %p1111, %s1110, 63
          %s1113 = smul.addr %s1112, 8
          %s1114 = scalar_lea.vmem %s3, %s1113
        $region90: #{vgae_encoder.5} parent=85 // pred_fallthru
          _
      $region86: #{vgae_encoder.5} parent=5 // pred_fallthru
        _
    $region6: #{vgae_encoder.5} parent=1 // loop_footer
      %s13 = sadd.s32 1, %s9
    $region7: #{vgae_encoder.5} parent=1 // loop_footer_branch
      %8 = sbr.rel target = $region3
    $region8: #{vgae_encoder.5} parent=1 // loop_exit
      _

// kernel: vgae_encoder.4
$region0: #{vgae_encoder.4}
  #allocation0 [shape = 'u32[]', space=smem, size = 0x4, offset = 0x4, fixed_abs, tag = 'smem constant byte address 0x4 - core index']
  #allocation1 [shape = 'u32[144,128]{1,0:T(1,128)}', space=vmem, size = 0x12000, scoped, tag = 'internal scratch']
  #allocation2 [shape = 'f32[256,32]{1,0:T(8,128)}', space=vmem, size = 0x20000, scoped, tag = 'scratch operand']
  %s0 = inlined_call_operand.vmem [shape: bf16[512,512], index: 0, kind: input, shape index: {}]
  %s1 = inlined_call_operand.vmem [shape: bf16[512,32], index: 1, kind: input, shape index: {}]
  %s2 = inlined_call_operand.vmem [shape: f32[1,32], index: 2, kind: input, shape index: {}]
  %s3 = inlined_call_operand.vmem [shape: f32[32,128], index: 3, kind: input, shape index: {}]
  %s4 = inlined_call_operand.vmem [shape: bf16[512,128], index: 4, kind: output, shape index: {}]
  %s5 = sld [smem:[#allocation0]]
  $region95: #{vgae_encoder.4} parent=0
    _
  %s7 = ssub.s32 1, %s5
  %s8 = scalar_select 0, %s7, %s5
  $region1: #{vgae_encoder.4} parent=0
    #allocation3 [shape = 'u8[262144]{0}', space=vmem, size = 0x40000, scoped, tag = 'input window, operand 0']
    loop: start=0, step=1, limit=6
    $region2: #{vgae_encoder.4} parent=1 // loop_pre_header
      _
    $region3: #{vgae_encoder.4} parent=1 // loop_header
      %s10 = sphi 0, %s14
      %p11 = scmp.ge.s32.totalorder %s10, 6
      %s17 = sphi 0, %s29
      %s18 = sphi 0, %s25
      %s19 = sphi 0, %s17
      %s20 = sphi 0, %s18
      %s21 = sphi 0, %s19
      %s22 = sphi 0, %s20
      %s34 = sphi 0, %s36
      %s37 = sphi 0, %s34
      %s38 = sphi 0, %s37
      %s54 = sphi 0, %s38
      %s60 = sphi 0, %s62
      %s63 = sphi 0, %s60
      %s64 = sphi 0, %s63
      %s80 = sphi 0, %s64
      %s84 = sphi 0, %s84
      %s86 = sphi 0, %s84
      %s87 = sphi 0, %s86
      %s101 = sphi 0, %s87
      %s105 = sphi 0, %s105
      %s107 = sphi 0, %s105
      %s108 = sphi 0, %s107
      %s122 = sphi 0, %s108
      %s128 = sphi 0, %s130
      %s131 = sphi 0, %s128
      %s132 = sphi 0, %s131
      %s148 = sphi 0, %s132
    $region4: #{vgae_encoder.4} parent=1 // loop_header_branch
      %13 = sbr.rel (%p11) target = $region8
    $region5: #{vgae_encoder.4} parent=1 // loop_body
      %s15 = ssub.s32 %s10, 1
      %s16 = ssub.s32 %s10, 2
      %s23 = sadd.s32 1, %s18
      %p24 = scmp.ge.s32.totalorder %s23, 2
      %s25 = scalar_select %p24, 0, %s23
      %s26 = sadd.s32 1, %s17
      %s27 = scalar_select %p24, %s26, %s17
      %p28 = scmp.ge.s32.totalorder %s27, 2
      %s29 = scalar_select %p28, 0, %s27
      %s30 = ssub.s32 %s17, %s29
      %s31 = ssub.s32 %s18, %s25
      %s32 = sor.u32 %s30, %s31
      %p33 = scmp.eq.s32.totalorder %s32, 0
      %s35 = sadd.s32 %s34, 1
      %s36 = scalar_select %p33, %s34, %s35
      %p39 = pneg %p33
      %p40 = scmp.eq.s32.totalorder %s10, 3
      %p41 = por %p39, %p40
      %p42 = scmp.ne.s32.totalorder %s34, %s37
      %p43 = scmp.eq.s32.totalorder %s10, 0
      %p44 = por %p42, %p43
      %p45 = scmp.ne.s32.totalorder %s34, %s37
      %p46 = scmp.eq.s32.totalorder %s15, 3
      %p47 = por %p45, %p46
      %p48 = scmp.ne.s32.totalorder %s37, %s38
      %p49 = scmp.eq.s32.totalorder %s15, 0
      %p50 = por %p48, %p49
      %p51 = scmp.ne.s32.totalorder %s37, %s38
      %p52 = scmp.eq.s32.totalorder %s16, 3
      %p53 = por %p51, %p52
      %p55 = scmp.ne.s32.totalorder %s38, %s54
      %p56 = scmp.eq.s32.totalorder %s16, 0
      %p57 = por %p55, %p56
      %s58 = ssub.s32 %s18, %s25
      %p59 = scmp.eq.s32.totalorder %s58, 0
      %s61 = sadd.s32 %s60, 1
      %s62 = scalar_select %p59, %s60, %s61
      %p65 = pneg %p59
      %p66 = scmp.eq.s32.totalorder %s10, 3
      %p67 = por %p65, %p66
      %p68 = scmp.ne.s32.totalorder %s60, %s63
      %p69 = scmp.eq.s32.totalorder %s10, 0
      %p70 = por %p68, %p69
      %p71 = scmp.ne.s32.totalorder %s60, %s63
      %p72 = scmp.eq.s32.totalorder %s15, 3
      %p73 = por %p71, %p72
      %p74 = scmp.ne.s32.totalorder %s63, %s64
      %p75 = scmp.eq.s32.totalorder %s15, 0
      %p76 = por %p74, %p75
      %p77 = scmp.ne.s32.totalorder %s63, %s64
      %p78 = scmp.eq.s32.totalorder %s16, 3
      %p79 = por %p77, %p78
      %p81 = scmp.ne.s32.totalorder %s64, %s80
      %p82 = scmp.eq.s32.totalorder %s16, 0
      %p83 = por %p81, %p82
      %s85 = sadd.s32 %s84, 1
      %p88 = scmp.eq.s32.totalorder %s10, 3
      %p89 = scmp.ne.s32.totalorder %s84, %s86
      %p90 = scmp.eq.s32.totalorder %s10, 0
      %p91 = por %p89, %p90
      %p92 = scmp.ne.s32.totalorder %s84, %s86
      %p93 = scmp.eq.s32.totalorder %s15, 3
      %p94 = por %p92, %p93
      %p95 = scmp.ne.s32.totalorder %s86, %s87
      %p96 = scmp.eq.s32.totalorder %s15, 0
      %p97 = por %p95, %p96
      %p98 = scmp.ne.s32.totalorder %s86, %s87
      %p99 = scmp.eq.s32.totalorder %s16, 3
      %p100 = por %p98, %p99
      %p102 = scmp.ne.s32.totalorder %s87, %s101
      %p103 = scmp.eq.s32.totalorder %s16, 0
      %p104 = por %p102, %p103
      %s106 = sadd.s32 %s105, 1
      %p109 = scmp.eq.s32.totalorder %s10, 3
      %p110 = scmp.ne.s32.totalorder %s105, %s107
      %p111 = scmp.eq.s32.totalorder %s10, 0
      %p112 = por %p110, %p111
      %p113 = scmp.ne.s32.totalorder %s105, %s107
      %p114 = scmp.eq.s32.totalorder %s15, 3
      %p115 = por %p113, %p114
      %p116 = scmp.ne.s32.totalorder %s107, %s108
      %p117 = scmp.eq.s32.totalorder %s15, 0
      %p118 = por %p116, %p117
      %p119 = scmp.ne.s32.totalorder %s107, %s108
      %p120 = scmp.eq.s32.totalorder %s16, 3
      %p121 = por %p119, %p120
      %p123 = scmp.ne.s32.totalorder %s108, %s122
      %p124 = scmp.eq.s32.totalorder %s16, 0
      %p125 = por %p123, %p124
      %s126 = ssub.s32 %s17, %s29
      %p127 = scmp.eq.s32.totalorder %s126, 0
      %s129 = sadd.s32 %s128, 1
      %s130 = scalar_select %p127, %s128, %s129
      %p133 = pneg %p127
      %p134 = scmp.eq.s32.totalorder %s10, 3
      %p135 = por %p133, %p134
      %p136 = scmp.ne.s32.totalorder %s128, %s131
      %p137 = scmp.eq.s32.totalorder %s10, 0
      %p138 = por %p136, %p137
      %p139 = scmp.ne.s32.totalorder %s128, %s131
      %p140 = scmp.eq.s32.totalorder %s15, 3
      %p141 = por %p139, %p140
      %p142 = scmp.ne.s32.totalorder %s131, %s132
      %p143 = scmp.eq.s32.totalorder %s15, 0
      %p144 = por %p142, %p143
      %p145 = scmp.ne.s32.totalorder %s131, %s132
      %p146 = scmp.eq.s32.totalorder %s16, 3
      %p147 = por %p145, %p146
      %p149 = scmp.ne.s32.totalorder %s132, %s148
      %p150 = scmp.eq.s32.totalorder %s16, 0
      %p151 = por %p149, %p150
      %p152 = scmp.le.s32.totalorder 1, %s10
      %p153 = scmp.lt.s32.totalorder %s10, 5
      %p154 = pnand %p152, %p153
      %p155 = pneg %p154
      // Predicated region
      $region9: #{vgae_encoder.4} parent=5 // pred_check
        _
      $region10: #{vgae_encoder.4} parent=5 // pred_check_branch
        %157 = sbr.rel (%p154) target = $region12
      $region11: #{vgae_encoder.4} parent=5 // pred_region
        %s158 = ssub.s32 %s10, 1
        // Predicated region
        $region13: #{vgae_encoder.4} parent=11 // pred_check
          %p159 = pneg %p97
        $region14: #{vgae_encoder.4} parent=11 // pred_check_branch
          %161 = sbr.rel (%p159) target = $region16
        $region15: #{vgae_encoder.4} parent=11 // pred_region
          _
        $region16: #{vgae_encoder.4} parent=11 // pred_fallthru
          _
        // Predicated region
        $region17: #{vgae_encoder.4} parent=11 // pred_check
          %p162 = pneg %p118
        $region18: #{vgae_encoder.4} parent=11 // pred_check_branch
          %164 = sbr.rel (%p162) target = $region20
        $region19: #{vgae_encoder.4} parent=11 // pred_region
          _
        $region20: #{vgae_encoder.4} parent=11 // pred_fallthru
          _
      $region12: #{vgae_encoder.4} parent=5 // pred_fallthru
        _
      %p165 = scmp.lt.s32.totalorder %s10, 4
      // Predicated region
      $region21: #{vgae_encoder.4} parent=5 // pred_check
        %p166 = pneg %p165
      $region22: #{vgae_encoder.4} parent=5 // pred_check_branch
        %168 = sbr.rel (%p166) target = $region24
      $region23: #{vgae_encoder.4} parent=5 // pred_region
        // Predicated region
        $region25: #{vgae_encoder.4} parent=23 // pred_check
          %p169 = pneg %p44
        $region26: #{vgae_encoder.4} parent=23 // pred_check_branch
          %171 = sbr.rel (%p169) target = $region28
        $region27: #{vgae_encoder.4} parent=23 // pred_region
          %s172 = sand.u32 %s34, 1
          %s173 = sand.u32 %s34, 1
          %s174 = smul.addr %s173, 256
          %s175 = scalar_lea.vmem [#allocation3], %s174
          %s176 = smul.u32 32, %s17
          %s177 = smul.u32 2, %s18
          %s178 = smul.addr %s176, 4
          %s179 = sadd.s32 %s177, %s178
          %s180 = smul.addr %s179, 4
          %s181 = scalar_lea.vmem %s0, %s180
          // Predicated region
          $region29: #{vgae_encoder.4} parent=27 // pred_check
            _
          $region30: #{vgae_encoder.4} parent=27 // pred_check_branch
            %183 = sbr.rel (0) target = $region32
          $region31: #{vgae_encoder.4} parent=27 // pred_region
            // Predicated region
            $region33: #{vgae_encoder.4} parent=31 // pred_check
              _
            $region34: #{vgae_encoder.4} parent=31 // pred_check_branch
              %185 = sbr.rel (0) target = $region36
            $region35: #{vgae_encoder.4} parent=31 // pred_region
              // Predicated region
              $region48: #{vgae_encoder.4} parent=35 // pred_check
                _
              $region49: #{vgae_encoder.4} parent=35 // pred_check_branch
                %262 = sbr.rel (0) target = $region51
              $region50: #{vgae_encoder.4} parent=35 // pred_region
                loop: start=0, step=1, limit=1
                $region52: #{vgae_encoder.4} parent=50 // loop_pre_header
                  _
                $region53: #{vgae_encoder.4} parent=50 // loop_header
                  %s264 = sphi 0, %s268
                  %p265 = scmp.ge.s32.totalorder %s264, 1
                  %s269 = sphi %s181, %s181
                  %s270 = sphi %s175, %s175
                $region54: #{vgae_encoder.4} parent=50 // loop_header_branch
                  %267 = sbr.rel (%p265) target = $region58
                $region55: #{vgae_encoder.4} parent=50 // loop_body
                  %v271 = vld [vmem:[%s269] sm:$0xff]
                  %272 = vst [vmem:[%s270] sm:$0xff] %v271
                  %v273 = vld [vmem:[%s269 + $0x10] sm:$0xff]
                  %274 = vst [vmem:[%s270 + $0x8] sm:$0xff] %v273
                  %v275 = vld [vmem:[%s269 + $0x20] sm:$0xff]
                  %276 = vst [vmem:[%s270 + $0x10] sm:$0xff] %v275
                  %v277 = vld [vmem:[%s269 + $0x30] sm:$0xff]
                  %278 = vst [vmem:[%s270 + $0x18] sm:$0xff] %v277
                  %v279 = vld [vmem:[%s269 + $0x40] sm:$0xff]
                  %280 = vst [vmem:[%s270 + $0x20] sm:$0xff] %v279
                  %v281 = vld [vmem:[%s269 + $0x50] sm:$0xff]
                  %282 = vst [vmem:[%s270 + $0x28] sm:$0xff] %v281
                  %v283 = vld [vmem:[%s269 + $0x60] sm:$0xff]
                  %284 = vst [vmem:[%s270 + $0x30] sm:$0xff] %v283
                  %v285 = vld [vmem:[%s269 + $0x70] sm:$0xff]
                  %286 = vst [vmem:[%s270 + $0x38] sm:$0xff] %v285
                  %v287 = vld [vmem:[%s269 + $0x80] sm:$0xff]
                  %288 = vst [vmem:[%s270 + $0x40] sm:$0xff] %v287
                  %v289 = vld [vmem:[%s269 + $0x90] sm:$0xff]
                  %290 = vst [vmem:[%s270 + $0x48] sm:$0xff] %v289
                  %v291 = vld [vmem:[%s269 + $0xa0] sm:$0xff]
                  %292 = vst [vmem:[%s270 + $0x50] sm:$0xff] %v291
                  %v293 = vld [vmem:[%s269 + $0xb0] sm:$0xff]
                  %294 = vst [vmem:[%s270 + $0x58] sm:$0xff] %v293
                  %v295 = vld [vmem:[%s269 + $0xc0] sm:$0xff]
                  %296 = vst [vmem:[%s270 + $0x60] sm:$0xff] %v295
                  %v297 = vld [vmem:[%s269 + $0xd0] sm:$0xff]
                  %298 = vst [vmem:[%s270 + $0x68] sm:$0xff] %v297
                  %v299 = vld [vmem:[%s269 + $0xe0] sm:$0xff]
                  %300 = vst [vmem:[%s270 + $0x70] sm:$0xff] %v299
                  %v301 = vld [vmem:[%s269 + $0xf0] sm:$0xff]
                  %302 = vst [vmem:[%s270 + $0x78] sm:$0xff] %v301
                  %v303 = vld [vmem:[%s269 + $0x100] sm:$0xff]
                  %304 = vst [vmem:[%s270 + $0x80] sm:$0xff] %v303
                  %v305 = vld [vmem:[%s269 + $0x110] sm:$0xff]
                  %306 = vst [vmem:[%s270 + $0x88] sm:$0xff] %v305
                  %v307 = vld [vmem:[%s269 + $0x120] sm:$0xff]
                  %308 = vst [vmem:[%s270 + $0x90] sm:$0xff] %v307
                  %v309 = vld [vmem:[%s269 + $0x130] sm:$0xff]
                  %310 = vst [vmem:[%s270 + $0x98] sm:$0xff] %v309
                  %v311 = vld [vmem:[%s269 + $0x140] sm:$0xff]
                  %312 = vst [vmem:[%s270 + $0xa0] sm:$0xff] %v311
                  %v313 = vld [vmem:[%s269 + $0x150] sm:$0xff]
                  %314 = vst [vmem:[%s270 + $0xa8] sm:$0xff] %v313
                  %v315 = vld [vmem:[%s269 + $0x160] sm:$0xff]
                  %316 = vst [vmem:[%s270 + $0xb0] sm:$0xff] %v315
                  %v317 = vld [vmem:[%s269 + $0x170] sm:$0xff]
                  %318 = vst [vmem:[%s270 + $0xb8] sm:$0xff] %v317
                  %v319 = vld [vmem:[%s269 + $0x180] sm:$0xff]
                  %320 = vst [vmem:[%s270 + $0xc0] sm:$0xff] %v319
                  %v321 = vld [vmem:[%s269 + $0x190] sm:$0xff]
                  %322 = vst [vmem:[%s270 + $0xc8] sm:$0xff] %v321
                  %v323 = vld [vmem:[%s269 + $0x1a0] sm:$0xff]
                  %324 = vst [vmem:[%s270 + $0xd0] sm:$0xff] %v323
                  %v325 = vld [vmem:[%s269 + $0x1b0] sm:$0xff]
                  %326 = vst [vmem:[%s270 + $0xd8] sm:$0xff] %v325
                  %v327 = vld [vmem:[%s269 + $0x1c0] sm:$0xff]
                  %328 = vst [vmem:[%s270 + $0xe0] sm:$0xff] %v327
                  %v329 = vld [vmem:[%s269 + $0x1d0] sm:$0xff]
                  %330 = vst [vmem:[%s270 + $0xe8] sm:$0xff] %v329
                  %v331 = vld [vmem:[%s269 + $0x1e0] sm:$0xff]
                  %332 = vst [vmem:[%s270 + $0xf0] sm:$0xff] %v331
                  %v333 = vld [vmem:[%s269 + $0x1f0] sm:$0xff]
                  %334 = vst [vmem:[%s270 + $0xf8] sm:$0xff] %v333
                $region56: #{vgae_encoder.4} parent=50 // loop_footer
                  %s268 = sadd.s32 1, %s264
                $region57: #{vgae_encoder.4} parent=50 // loop_footer_branch
                  %263 = sbr.rel target = $region53
                $region58: #{vgae_encoder.4} parent=50 // loop_exit
                  _
              $region51: #{vgae_encoder.4} parent=35 // pred_fallthru
                _
              // Predicated region
              $region59: #{vgae_encoder.4} parent=35 // pred_check
                _
              $region60: #{vgae_encoder.4} parent=35 // pred_check_branch
                %336 = sbr.rel target = $region62
              $region61: #{vgae_encoder.4} parent=35 // pred_region
                _
              $region62: #{vgae_encoder.4} parent=35 // pred_fallthru
                _
            $region36: #{vgae_encoder.4} parent=31 // pred_fallthru
              _
            // Predicated region
            $region37: #{vgae_encoder.4} parent=31 // pred_check
              _
            $region38: #{vgae_encoder.4} parent=31 // pred_check_branch
              %187 = sbr.rel target = $region40
            $region39: #{vgae_encoder.4} parent=31 // pred_region
              loop: start=0, step=1, limit=1
              $region41: #{vgae_encoder.4} parent=39 // loop_pre_header
                _
              $region42: #{vgae_encoder.4} parent=39 // loop_header
                %s190 = sphi 0, %s194
                %p191 = scmp.ge.s32.totalorder %s190, 1
                %s195 = sphi %s181, %s181
                %s196 = sphi %s175, %s175
              $region43: #{vgae_encoder.4} parent=39 // loop_header_branch
                %193 = sbr.rel (%p191) target = $region47
              $region44: #{vgae_encoder.4} parent=39 // loop_body
                %v197 = vld [vmem:[%s195] sm:$0xff]
                %198 = vst [vmem:[%s196] sm:$0xff] %v197
                %v199 = vld [vmem:[%s195 + $0x10] sm:$0xff]
                %200 = vst [vmem:[%s196 + $0x8] sm:$0xff] %v199
                %v201 = vld [vmem:[%s195 + $0x20] sm:$0xff]
                %202 = vst [vmem:[%s196 + $0x10] sm:$0xff] %v201
                %v203 = vld [vmem:[%s195 + $0x30] sm:$0xff]
                %204 = vst [vmem:[%s196 + $0x18] sm:$0xff] %v203
                %v205 = vld [vmem:[%s195 + $0x40] sm:$0xff]
                %206 = vst [vmem:[%s196 + $0x20] sm:$0xff] %v205
                %v207 = vld [vmem:[%s195 + $0x50] sm:$0xff]
                %208 = vst [vmem:[%s196 + $0x28] sm:$0xff] %v207
                %v209 = vld [vmem:[%s195 + $0x60] sm:$0xff]
                %210 = vst [vmem:[%s196 + $0x30] sm:$0xff] %v209
                %v211 = vld [vmem:[%s195 + $0x70] sm:$0xff]
                %212 = vst [vmem:[%s196 + $0x38] sm:$0xff] %v211
                %v213 = vld [vmem:[%s195 + $0x80] sm:$0xff]
                %214 = vst [vmem:[%s196 + $0x40] sm:$0xff] %v213
                %v215 = vld [vmem:[%s195 + $0x90] sm:$0xff]
                %216 = vst [vmem:[%s196 + $0x48] sm:$0xff] %v215
                %v217 = vld [vmem:[%s195 + $0xa0] sm:$0xff]
                %218 = vst [vmem:[%s196 + $0x50] sm:$0xff] %v217
                %v219 = vld [vmem:[%s195 + $0xb0] sm:$0xff]
                %220 = vst [vmem:[%s196 + $0x58] sm:$0xff] %v219
                %v221 = vld [vmem:[%s195 + $0xc0] sm:$0xff]
                %222 = vst [vmem:[%s196 + $0x60] sm:$0xff] %v221
                %v223 = vld [vmem:[%s195 + $0xd0] sm:$0xff]
                %224 = vst [vmem:[%s196 + $0x68] sm:$0xff] %v223
                %v225 = vld [vmem:[%s195 + $0xe0] sm:$0xff]
                %226 = vst [vmem:[%s196 + $0x70] sm:$0xff] %v225
                %v227 = vld [vmem:[%s195 + $0xf0] sm:$0xff]
                %228 = vst [vmem:[%s196 + $0x78] sm:$0xff] %v227
                %v229 = vld [vmem:[%s195 + $0x100] sm:$0xff]
                %230 = vst [vmem:[%s196 + $0x80] sm:$0xff] %v229
                %v231 = vld [vmem:[%s195 + $0x110] sm:$0xff]
                %232 = vst [vmem:[%s196 + $0x88] sm:$0xff] %v231
                %v233 = vld [vmem:[%s195 + $0x120] sm:$0xff]
                %234 = vst [vmem:[%s196 + $0x90] sm:$0xff] %v233
                %v235 = vld [vmem:[%s195 + $0x130] sm:$0xff]
                %236 = vst [vmem:[%s196 + $0x98] sm:$0xff] %v235
                %v237 = vld [vmem:[%s195 + $0x140] sm:$0xff]
                %238 = vst [vmem:[%s196 + $0xa0] sm:$0xff] %v237
                %v239 = vld [vmem:[%s195 + $0x150] sm:$0xff]
                %240 = vst [vmem:[%s196 + $0xa8] sm:$0xff] %v239
                %v241 = vld [vmem:[%s195 + $0x160] sm:$0xff]
                %242 = vst [vmem:[%s196 + $0xb0] sm:$0xff] %v241
                %v243 = vld [vmem:[%s195 + $0x170] sm:$0xff]
                %244 = vst [vmem:[%s196 + $0xb8] sm:$0xff] %v243
                %v245 = vld [vmem:[%s195 + $0x180] sm:$0xff]
                %246 = vst [vmem:[%s196 + $0xc0] sm:$0xff] %v245
                %v247 = vld [vmem:[%s195 + $0x190] sm:$0xff]
                %248 = vst [vmem:[%s196 + $0xc8] sm:$0xff] %v247
                %v249 = vld [vmem:[%s195 + $0x1a0] sm:$0xff]
                %250 = vst [vmem:[%s196 + $0xd0] sm:$0xff] %v249
                %v251 = vld [vmem:[%s195 + $0x1b0] sm:$0xff]
                %252 = vst [vmem:[%s196 + $0xd8] sm:$0xff] %v251
                %v253 = vld [vmem:[%s195 + $0x1c0] sm:$0xff]
                %254 = vst [vmem:[%s196 + $0xe0] sm:$0xff] %v253
                %v255 = vld [vmem:[%s195 + $0x1d0] sm:$0xff]
                %256 = vst [vmem:[%s196 + $0xe8] sm:$0xff] %v255
                %v257 = vld [vmem:[%s195 + $0x1e0] sm:$0xff]
                %258 = vst [vmem:[%s196 + $0xf0] sm:$0xff] %v257
                %v259 = vld [vmem:[%s195 + $0x1f0] sm:$0xff]
                %260 = vst [vmem:[%s196 + $0xf8] sm:$0xff] %v259
              $region45: #{vgae_encoder.4} parent=39 // loop_footer
                %s194 = sadd.s32 1, %s190
              $region46: #{vgae_encoder.4} parent=39 // loop_footer_branch
                %189 = sbr.rel target = $region42
              $region47: #{vgae_encoder.4} parent=39 // loop_exit
                _
            $region40: #{vgae_encoder.4} parent=31 // pred_fallthru
              _
          $region32: #{vgae_encoder.4} parent=27 // pred_fallthru
            _
          %337 = vnop
        $region28: #{vgae_encoder.4} parent=23 // pred_fallthru
          _
        // Predicated region
        $region63: #{vgae_encoder.4} parent=23 // pred_check
          %p338 = pneg %p70
        $region64: #{vgae_encoder.4} parent=23 // pred_check_branch
          %340 = sbr.rel (%p338) target = $region66
        $region65: #{vgae_encoder.4} parent=23 // pred_region
          %s341 = smul.u32 32, %s18
          %p342 = scmp.lt.s32.totalorder %s341, 63
          %s343 = scalar_select %p342, %s341, 63
          %s344 = smul.addr %s343, 4
          %s345 = scalar_lea.vmem %s1, %s344
          %s346 = smul.u32 32, %s18
        $region66: #{vgae_encoder.4} parent=23 // pred_fallthru
          _
      $region24: #{vgae_encoder.4} parent=5 // pred_fallthru
        _
      %p347 = scmp.le.s32.totalorder 1, %s10
      %p348 = scmp.lt.s32.totalorder %s10, 5
      %p349 = pnand %p347, %p348
      %p350 = pneg %p349
      // Predicated region
      $region67: #{vgae_encoder.4} parent=5 // pred_check
        _
      $region68: #{vgae_encoder.4} parent=5 // pred_check_branch
        %352 = sbr.rel (%p349) target = $region70
      $region69: #{vgae_encoder.4} parent=5 // pred_region
        %s353 = ssub.s32 %s10, 1
        %s354 = sand.u32 %s37, 1
        %s355 = sand.u32 %s37, 1
        %s356 = smul.addr %s355, 256
        %s357 = scalar_lea.vmem [#allocation3], %s356
        // Predicated region
        $region71: #{vgae_encoder.4} parent=69 // pred_check
          %p358 = pneg %p50
        $region72: #{vgae_encoder.4} parent=69 // pred_check_branch
          %360 = sbr.rel (%p358) target = $region74
        $region73: #{vgae_encoder.4} parent=69 // pred_region
          _
        $region74: #{vgae_encoder.4} parent=69 // pred_fallthru
          _
        %s361 = sand.u32 %s37, 1
        %s362 = sand.u32 %s37, 1
        %s363 = smul.addr %s362, 256
        %s364 = scalar_lea.vmem [#allocation3], %s363
        %p365 = pneg %p50
        %p366 = pneg %p47
        %s367 = smul.u32 32, %s20
        %p368 = scmp.lt.s32.totalorder %s367, 63
        %s369 = scalar_select %p368, %s367, 63
        %s370 = smul.addr %s369, 4
        %s371 = scalar_lea.vmem %s1, %s370
        %p372 = pneg %p76
        %p373 = pneg %p73
        %p374 = pneg %p97
        %p375 = pneg %p94
        %p376 = pneg %p118
        %p377 = pneg %p115
        %p378 = pneg %p144
        %p379 = pneg %p141
        %s380 = smul.u32 32, %s19
        %p381 = scmp.lt.s32.totalorder %s380, 63
        %s382 = scalar_select %p381, %s380, 63
        %s383 = smul.addr %s382, 4
        %s384 = scalar_lea.vmem %s4, %s383
        %s385 = smul.u32 32, %s19
        %s386 = smul.u32 2, %s20
        %s387 = smul.u32 32, %s20
        %p388 = scmp.lt.s32.totalorder %s387, 63
        %s389 = scalar_select %p388, %s387, 63
        %s390 = smul.addr %s389, 4
        %s391 = scalar_lea.vmem %s1, %s390
        %s392 = smul.u32 32, %s20
        %s393 = smul.u32 32, %s19
        %p394 = scmp.lt.s32.totalorder %s393, 63
        %s395 = scalar_select %p394, %s393, 63
        %s396 = smul.addr %s395, 4
        %s397 = scalar_lea.vmem %s4, %s396
        %s398 = smul.u32 32, %s19
        %p400 = scmp.eq.s32.totalorder %s20, 0
        // Predicated region
        $region75: #{vgae_encoder.4} parent=69 // pred_check
          %p401 = pneg %p400
        $region76: #{vgae_encoder.4} parent=69 // pred_check_branch
          %403 = sbr.rel (%p401) target = $region78
        $region77: #{vgae_encoder.4} parent=69 // pred_region
          %vm404 = vcmask 261120
          %405 = vst.msk [vmem:[#allocation2] sm:$0xff] %vm404, 0.0
          %406 = vst.msk [vmem:[#allocation2 + $0x8] sm:$0xff] %vm404, 0.0
          %407 = vst.msk [vmem:[#allocation2 + $0x10] sm:$0xff] %vm404, 0.0
          %408 = vst.msk [vmem:[#allocation2 + $0x18] sm:$0xff] %vm404, 0.0
          %409 = vst.msk [vmem:[#allocation2 + $0x20] sm:$0xff] %vm404, 0.0
          %410 = vst.msk [vmem:[#allocation2 + $0x28] sm:$0xff] %vm404, 0.0
          %411 = vst.msk [vmem:[#allocation2 + $0x30] sm:$0xff] %vm404, 0.0
          %412 = vst.msk [vmem:[#allocation2 + $0x38] sm:$0xff] %vm404, 0.0
          %413 = vst.msk [vmem:[#allocation2 + $0x40] sm:$0xff] %vm404, 0.0
          %414 = vst.msk [vmem:[#allocation2 + $0x48] sm:$0xff] %vm404, 0.0
          %415 = vst.msk [vmem:[#allocation2 + $0x50] sm:$0xff] %vm404, 0.0
          %416 = vst.msk [vmem:[#allocation2 + $0x58] sm:$0xff] %vm404, 0.0
          %417 = vst.msk [vmem:[#allocation2 + $0x60] sm:$0xff] %vm404, 0.0
          %418 = vst.msk [vmem:[#allocation2 + $0x68] sm:$0xff] %vm404, 0.0
          %419 = vst.msk [vmem:[#allocation2 + $0x70] sm:$0xff] %vm404, 0.0
          %420 = vst.msk [vmem:[#allocation2 + $0x78] sm:$0xff] %vm404, 0.0
          %421 = vst.msk [vmem:[#allocation2 + $0x80] sm:$0xff] %vm404, 0.0
          %422 = vst.msk [vmem:[#allocation2 + $0x88] sm:$0xff] %vm404, 0.0
          %423 = vst.msk [vmem:[#allocation2 + $0x90] sm:$0xff] %vm404, 0.0
          %424 = vst.msk [vmem:[#allocation2 + $0x98] sm:$0xff] %vm404, 0.0
          %425 = vst.msk [vmem:[#allocation2 + $0xa0] sm:$0xff] %vm404, 0.0
          %426 = vst.msk [vmem:[#allocation2 + $0xa8] sm:$0xff] %vm404, 0.0
          %427 = vst.msk [vmem:[#allocation2 + $0xb0] sm:$0xff] %vm404, 0.0
          %428 = vst.msk [vmem:[#allocation2 + $0xb8] sm:$0xff] %vm404, 0.0
          %429 = vst.msk [vmem:[#allocation2 + $0xc0] sm:$0xff] %vm404, 0.0
          %430 = vst.msk [vmem:[#allocation2 + $0xc8] sm:$0xff] %vm404, 0.0
          %431 = vst.msk [vmem:[#allocation2 + $0xd0] sm:$0xff] %vm404, 0.0
          %432 = vst.msk [vmem:[#allocation2 + $0xd8] sm:$0xff] %vm404, 0.0
          %433 = vst.msk [vmem:[#allocation2 + $0xe0] sm:$0xff] %vm404, 0.0
          %434 = vst.msk [vmem:[#allocation2 + $0xe8] sm:$0xff] %vm404, 0.0
          %435 = vst.msk [vmem:[#allocation2 + $0xf0] sm:$0xff] %vm404, 0.0
          %436 = vst.msk [vmem:[#allocation2 + $0xf8] sm:$0xff] %vm404, 0.0
        $region78: #{vgae_encoder.4} parent=69 // pred_fallthru
          _
        %v437 = vld [vmem:[#allocation2] sm:$0xff]
        %v438 = vld [vmem:[#allocation2 + $0x8] sm:$0xff]
        %v439 = vld [vmem:[#allocation2 + $0x10] sm:$0xff]
        %v440 = vld [vmem:[#allocation2 + $0x18] sm:$0xff]
        %v441 = vld [vmem:[#allocation2 + $0x20] sm:$0xff]
        %v442 = vld [vmem:[#allocation2 + $0x28] sm:$0xff]
        %v443 = vld [vmem:[#allocation2 + $0x30] sm:$0xff]
        %v444 = vld [vmem:[#allocation2 + $0x38] sm:$0xff]
        %v445 = vld [vmem:[#allocation2 + $0x40] sm:$0xff]
        %v446 = vld [vmem:[#allocation2 + $0x48] sm:$0xff]
        %v447 = vld [vmem:[#allocation2 + $0x50] sm:$0xff]
        %v448 = vld [vmem:[#allocation2 + $0x58] sm:$0xff]
        %v449 = vld [vmem:[#allocation2 + $0x60] sm:$0xff]
        %v450 = vld [vmem:[#allocation2 + $0x68] sm:$0xff]
        %v451 = vld [vmem:[#allocation2 + $0x70] sm:$0xff]
        %v452 = vld [vmem:[#allocation2 + $0x78] sm:$0xff]
        %v453 = vld [vmem:[#allocation2 + $0x80] sm:$0xff]
        %v454 = vld [vmem:[#allocation2 + $0x88] sm:$0xff]
        %v455 = vld [vmem:[#allocation2 + $0x90] sm:$0xff]
        %v456 = vld [vmem:[#allocation2 + $0x98] sm:$0xff]
        %v457 = vld [vmem:[#allocation2 + $0xa0] sm:$0xff]
        %v458 = vld [vmem:[#allocation2 + $0xa8] sm:$0xff]
        %v459 = vld [vmem:[#allocation2 + $0xb0] sm:$0xff]
        %v460 = vld [vmem:[#allocation2 + $0xb8] sm:$0xff]
        %v461 = vld [vmem:[#allocation2 + $0xc0] sm:$0xff]
        %v462 = vld [vmem:[#allocation2 + $0xc8] sm:$0xff]
        %v463 = vld [vmem:[#allocation2 + $0xd0] sm:$0xff]
        %v464 = vld [vmem:[#allocation2 + $0xd8] sm:$0xff]
        %v465 = vld [vmem:[#allocation2 + $0xe0] sm:$0xff]
        %v466 = vld [vmem:[#allocation2 + $0xe8] sm:$0xff]
        %v467 = vld [vmem:[#allocation2 + $0xf0] sm:$0xff]
        %v468 = vld [vmem:[#allocation2 + $0xf8] sm:$0xff]
        %v469 = vld [vmem:[%s357] sm:$0xff]
        %v470 = vld [vmem:[%s357 + $0x8] sm:$0xff]
        %v471 = vld [vmem:[%s357 + $0x10] sm:$0xff]
        %v472 = vld [vmem:[%s357 + $0x18] sm:$0xff]
        %v473 = vld [vmem:[%s357 + $0x20] sm:$0xff]
        %v474 = vld [vmem:[%s357 + $0x28] sm:$0xff]
        %v475 = vld [vmem:[%s357 + $0x30] sm:$0xff]
        %v476 = vld [vmem:[%s357 + $0x38] sm:$0xff]
        %v477 = vld [vmem:[%s357 + $0x40] sm:$0xff]
        %v478 = vld [vmem:[%s357 + $0x48] sm:$0xff]
        %v479 = vld [vmem:[%s357 + $0x50] sm:$0xff]
        %v480 = vld [vmem:[%s357 + $0x58] sm:$0xff]
        %v481 = vld [vmem:[%s357 + $0x60] sm:$0xff]
        %v482 = vld [vmem:[%s357 + $0x68] sm:$0xff]
        %v483 = vld [vmem:[%s357 + $0x70] sm:$0xff]
        %v484 = vld [vmem:[%s357 + $0x78] sm:$0xff]
        %v485 = vld [vmem:[%s357 + $0x80] sm:$0xff]
        %v486 = vld [vmem:[%s357 + $0x88] sm:$0xff]
        %v487 = vld [vmem:[%s357 + $0x90] sm:$0xff]
        %v488 = vld [vmem:[%s357 + $0x98] sm:$0xff]
        %v489 = vld [vmem:[%s357 + $0xa0] sm:$0xff]
        %v490 = vld [vmem:[%s357 + $0xa8] sm:$0xff]
        %v491 = vld [vmem:[%s357 + $0xb0] sm:$0xff]
        %v492 = vld [vmem:[%s357 + $0xb8] sm:$0xff]
        %v493 = vld [vmem:[%s357 + $0xc0] sm:$0xff]
        %v494 = vld [vmem:[%s357 + $0xc8] sm:$0xff]
        %v495 = vld [vmem:[%s357 + $0xd0] sm:$0xff]
        %v496 = vld [vmem:[%s357 + $0xd8] sm:$0xff]
        %v497 = vld [vmem:[%s357 + $0xe0] sm:$0xff]
        %v498 = vld [vmem:[%s357 + $0xe8] sm:$0xff]
        %v499 = vld [vmem:[%s357 + $0xf0] sm:$0xff]
        %v500 = vld [vmem:[%s357 + $0xf8] sm:$0xff]
        %v501 = vld [vmem:[%s391] sm:$0xf]
        %v502 = vld [vmem:[%s391 + $0x4] sm:$0xf]
        %v503 = vld [vmem:[%s391 + $0x8] sm:$0xf]
        %v504 = vld [vmem:[%s391 + $0xc] sm:$0xf]
        %v505 = vld [vmem:[%s391 + $0x10] sm:$0xf]
        %v506 = vld [vmem:[%s391 + $0x14] sm:$0xf]
        %v507 = vld [vmem:[%s391 + $0x18] sm:$0xf]
        %v508 = vld [vmem:[%s391 + $0x1c] sm:$0xf]
        %v509 = vld [vmem:[%s391 + $0x20] sm:$0xf]
        %v510 = vld [vmem:[%s391 + $0x24] sm:$0xf]
        %v511 = vld [vmem:[%s391 + $0x28] sm:$0xf]
        %v512 = vld [vmem:[%s391 + $0x2c] sm:$0xf]
        %v513 = vld [vmem:[%s391 + $0x30] sm:$0xf]
        %v514 = vld [vmem:[%s391 + $0x34] sm:$0xf]
        %v515 = vld [vmem:[%s391 + $0x38] sm:$0xf]
        %v516 = vld [vmem:[%s391 + $0x3c] sm:$0xf]
        %v517 = vld [vmem:[%s391 + $0x40] sm:$0xf]
        %v518 = vld [vmem:[%s391 + $0x44] sm:$0xf]
        %v519 = vld [vmem:[%s391 + $0x48] sm:$0xf]
        %v520 = vld [vmem:[%s391 + $0x4c] sm:$0xf]
        %v521 = vld [vmem:[%s391 + $0x50] sm:$0xf]
        %v522 = vld [vmem:[%s391 + $0x54] sm:$0xf]
        %v523 = vld [vmem:[%s391 + $0x58] sm:$0xf]
        %v524 = vld [vmem:[%s391 + $0x5c] sm:$0xf]
        %v525 = vld [vmem:[%s391 + $0x60] sm:$0xf]
        %v526 = vld [vmem:[%s391 + $0x64] sm:$0xf]
        %v527 = vld [vmem:[%s391 + $0x68] sm:$0xf]
        %v528 = vld [vmem:[%s391 + $0x6c] sm:$0xf]
        %v529 = vld [vmem:[%s391 + $0x70] sm:$0xf]
        %v530 = vld [vmem:[%s391 + $0x74] sm:$0xf]
        %v531 = vld [vmem:[%s391 + $0x78] sm:$0xf]
        %v532 = vld [vmem:[%s391 + $0x7c] sm:$0xf]
        %v565 = vunpack.c.l.b16 %v469
        %v566 = vunpack.c.h.b16 %v469
        %v567 = vunpack.c.l.b16 %v470
        %v568 = vunpack.c.h.b16 %v470
        %v569 = vunpack.c.l.b16 %v471
        %v570 = vunpack.c.h.b16 %v471
        %v571 = vunpack.c.l.b16 %v472
        %v572 = vunpack.c.h.b16 %v472
        %v573 = vunpack.c.l.b16 %v473
        %v574 = vunpack.c.h.b16 %v473
        %v575 = vunpack.c.l.b16 %v474
        %v576 = vunpack.c.h.b16 %v474
        %v577 = vunpack.c.l.b16 %v475
        %v578 = vunpack.c.h.b16 %v475
        %v579 = vunpack.c.l.b16 %v476
        %v580 = vunpack.c.h.b16 %v476
        %v581 = vunpack.c.l.b16 %v477
        %v582 = vunpack.c.h.b16 %v477
        %v583 = vunpack.c.l.b16 %v478
        %v584 = vunpack.c.h.b16 %v478
        %v585 = vunpack.c.l.b16 %v479
        %v586 = vunpack.c.h.b16 %v479
        %v587 = vunpack.c.l.b16 %v480
        %v588 = vunpack.c.h.b16 %v480
        %v589 = vunpack.c.l.b16 %v481
        %v590 = vunpack.c.h.b16 %v481
        %v591 = vunpack.c.l.b16 %v482
        %v592 = vunpack.c.h.b16 %v482
        %v593 = vunpack.c.l.b16 %v483
        %v594 = vunpack.c.h.b16 %v483
        %v595 = vunpack.c.l.b16 %v484
        %v596 = vunpack.c.h.b16 %v484
        %v597 = vunpack.c.l.b16 %v485
        %v598 = vunpack.c.h.b16 %v485
        %v599 = vunpack.c.l.b16 %v486
        %v600 = vunpack.c.h.b16 %v486
        %v601 = vunpack.c.l.b16 %v487
        %v602 = vunpack.c.h.b16 %v487
        %v603 = vunpack.c.l.b16 %v488
        %v604 = vunpack.c.h.b16 %v488
        %v605 = vunpack.c.l.b16 %v489
        %v606 = vunpack.c.h.b16 %v489
        %v607 = vunpack.c.l.b16 %v490
        %v608 = vunpack.c.h.b16 %v490
        %v609 = vunpack.c.l.b16 %v491
        %v610 = vunpack.c.h.b16 %v491
        %v611 = vunpack.c.l.b16 %v492
        %v612 = vunpack.c.h.b16 %v492
        %v613 = vunpack.c.l.b16 %v493
        %v614 = vunpack.c.h.b16 %v493
        %v615 = vunpack.c.l.b16 %v494
        %v616 = vunpack.c.h.b16 %v494
        %v617 = vunpack.c.l.b16 %v495
        %v618 = vunpack.c.h.b16 %v495
        %v619 = vunpack.c.l.b16 %v496
        %v620 = vunpack.c.h.b16 %v496
        %v621 = vunpack.c.l.b16 %v497
        %v622 = vunpack.c.h.b16 %v497
        %v623 = vunpack.c.l.b16 %v498
        %v624 = vunpack.c.h.b16 %v498
        %v625 = vunpack.c.l.b16 %v499
        %v626 = vunpack.c.h.b16 %v499
        %v627 = vunpack.c.l.b16 %v500
        %v628 = vunpack.c.h.b16 %v500
        %v629 = vpack.c.b16 %v567, %v565
        %v630 = vpack.c.b16 %v568, %v566
        %v631 = vpack.c.b16 %v571, %v569
        %v632 = vpack.c.b16 %v572, %v570
        %v633 = vpack.c.b16 %v575, %v573
        %v634 = vpack.c.b16 %v576, %v574
        %v635 = vpack.c.b16 %v579, %v577
        %v636 = vpack.c.b16 %v580, %v578
        %v637 = vpack.c.b16 %v583, %v581
        %v638 = vpack.c.b16 %v584, %v582
        %v639 = vpack.c.b16 %v587, %v585
        %v640 = vpack.c.b16 %v588, %v586
        %v641 = vpack.c.b16 %v591, %v589
        %v642 = vpack.c.b16 %v592, %v590
        %v643 = vpack.c.b16 %v595, %v593
        %v644 = vpack.c.b16 %v596, %v594
        %v645 = vpack.c.b16 %v599, %v597
        %v646 = vpack.c.b16 %v600, %v598
        %v647 = vpack.c.b16 %v603, %v601
        %v648 = vpack.c.b16 %v604, %v602
        %v649 = vpack.c.b16 %v607, %v605
        %v650 = vpack.c.b16 %v608, %v606
        %v651 = vpack.c.b16 %v611, %v609
        %v652 = vpack.c.b16 %v612, %v610
        %v653 = vpack.c.b16 %v615, %v613
        %v654 = vpack.c.b16 %v616, %v614
        %v655 = vpack.c.b16 %v619, %v617
        %v656 = vpack.c.b16 %v620, %v618
        %v657 = vpack.c.b16 %v623, %v621
        %v658 = vpack.c.b16 %v624, %v622
        %v659 = vpack.c.b16 %v627, %v625
        %v660 = vpack.c.b16 %v628, %v626
        %v725 = vunpack.c.l.b16 %v501
        %v726 = vunpack.c.l.b16 %v502
        %v727 = vunpack.c.l.b16 %v503
        %v728 = vunpack.c.l.b16 %v504
        %v729 = vunpack.c.l.b16 %v505
        %v730 = vunpack.c.l.b16 %v506
        %v731 = vunpack.c.l.b16 %v507
        %v732 = vunpack.c.l.b16 %v508
        %v733 = vunpack.c.l.b16 %v509
        %v734 = vunpack.c.l.b16 %v510
        %v735 = vunpack.c.l.b16 %v511
        %v736 = vunpack.c.l.b16 %v512
        %v737 = vunpack.c.l.b16 %v513
        %v738 = vunpack.c.l.b16 %v514
        %v739 = vunpack.c.l.b16 %v515
        %v740 = vunpack.c.l.b16 %v516
        %v741 = vunpack.c.l.b16 %v517
        %v742 = vunpack.c.l.b16 %v518
        %v743 = vunpack.c.l.b16 %v519
        %v744 = vunpack.c.l.b16 %v520
        %v745 = vunpack.c.l.b16 %v521
        %v746 = vunpack.c.l.b16 %v522
        %v747 = vunpack.c.l.b16 %v523
        %v748 = vunpack.c.l.b16 %v524
        %v749 = vunpack.c.l.b16 %v525
        %v750 = vunpack.c.l.b16 %v526
        %v751 = vunpack.c.l.b16 %v527
        %v752 = vunpack.c.l.b16 %v528
        %v753 = vunpack.c.l.b16 %v529
        %v754 = vunpack.c.l.b16 %v530
        %v755 = vunpack.c.l.b16 %v531
        %v756 = vunpack.c.l.b16 %v532
        %v757 = vpack.c.b16 %v726, %v725
        %v758 = vpack.c.b16 %v728, %v727
        %v759 = vpack.c.b16 %v730, %v729
        %v760 = vpack.c.b16 %v732, %v731
        %v761 = vpack.c.b16 %v734, %v733
        %v762 = vpack.c.b16 %v736, %v735
        %v763 = vpack.c.b16 %v738, %v737
        %v764 = vpack.c.b16 %v740, %v739
        %v765 = vpack.c.b16 %v742, %v741
        %v766 = vpack.c.b16 %v744, %v743
        %v767 = vpack.c.b16 %v746, %v745
        %v768 = vpack.c.b16 %v748, %v747
        %v769 = vpack.c.b16 %v750, %v749
        %v770 = vpack.c.b16 %v752, %v751
        %v771 = vpack.c.b16 %v754, %v753
        %v772 = vpack.c.b16 %v756, %v755
        %789 = vmatprep.subr.bf16.mxu0 0
        %790 = vmatpush1.bf16.msra.mxu0 %v757
        %791 = vmatprep.subr.bf16.mxu0 0
        %792 = vmatpush1.bf16.msra.mxu0 %v758
        %793 = vmatprep.subr.bf16.mxu0 0
        %794 = vmatpush1.bf16.msra.mxu0 %v759
        %795 = vmatprep.subr.bf16.mxu0 0
        %796 = vmatpush1.bf16.msra.mxu0 %v760
        %797 = vmatprep.subr.bf16.mxu0 0
        %798 = vmatpush1.bf16.msra.mxu0 %v761
        %799 = vmatprep.subr.bf16.mxu0 0
        %800 = vmatpush1.bf16.msra.mxu0 %v762
        %801 = vmatprep.subr.bf16.mxu0 0
        %802 = vmatpush1.bf16.msra.mxu0 %v763
        %803 = vmatprep.subr.bf16.mxu0 0
        %804 = vmatpush1.bf16.msra.mxu0 %v764
        %805 = vmatprep.subr.bf16.mxu0 0
        %806 = vmatpush1.bf16.msra.mxu0 %v765
        %807 = vmatprep.subr.bf16.mxu0 0
        %808 = vmatpush1.bf16.msra.mxu0 %v766
        %809 = vmatprep.subr.bf16.mxu0 0
        %810 = vmatpush1.bf16.msra.mxu0 %v767
        %811 = vmatprep.subr.bf16.mxu0 0
        %812 = vmatpush1.bf16.msra.mxu0 %v768
        %813 = vmatprep.subr.bf16.mxu0 0
        %814 = vmatpush1.bf16.msra.mxu0 %v769
        %815 = vmatprep.subr.bf16.mxu0 0
        %816 = vmatpush1.bf16.msra.mxu0 %v770
        %817 = vmatprep.subr.bf16.mxu0 0
        %818 = vmatpush1.bf16.msra.mxu0 %v771
        %819 = vmatprep.subr.bf16.mxu0 0
        %820 = vmatpush1.bf16.msra.mxu0 %v772
        %821 = vmatprep.mubr.bf16.mxu0 %v630
        %822 = vmatmul.mubr.bf16.gmra.mrb[0].mxu0 %v629
        %v823 = vpop.f32.mrb[0].mxu0
        %v824 = vadd.f32 0.0, %v823
        %v825 = vpop.f32.mrb[0].mxu0
        %v826 = vpop.f32.mrb[0].mxu0
        %v827 = vadd.f32 0.0, %v826
        %v828 = vpop.f32.mrb[0].mxu0
        %829 = vmatprep.mubr.bf16.mxu0 %v632
        %830 = vmatmul.mubr.bf16.gmra.mrb[0].mxu0 %v631
        %v831 = vpop.f32.mrb[0].mxu0
        %v832 = vadd.f32 0.0, %v831
        %v833 = vpop.f32.mrb[0].mxu0
        %v834 = vpop.f32.mrb[0].mxu0
        %v835 = vadd.f32 0.0, %v834
        %v836 = vpop.f32.mrb[0].mxu0
        %837 = vmatprep.mubr.bf16.mxu0 %v634
        %838 = vmatmul.mubr.bf16.gmra.mrb[0].mxu0 %v633
        %v839 = vpop.f32.mrb[0].mxu0
        %v840 = vadd.f32 0.0, %v839
        %v841 = vpop.f32.mrb[0].mxu0
        %v842 = vpop.f32.mrb[0].mxu0
        %v843 = vadd.f32 0.0, %v842
        %v844 = vpop.f32.mrb[0].mxu0
        %845 = vmatprep.mubr.bf16.mxu0 %v636
        %846 = vmatmul.mubr.bf16.gmra.mrb[0].mxu0 %v635
        %v847 = vpop.f32.mrb[0].mxu0
        %v848 = vadd.f32 0.0, %v847
        %v849 = vpop.f32.mrb[0].mxu0
        %v850 = vpop.f32.mrb[0].mxu0
        %v851 = vadd.f32 0.0, %v850
        %v852 = vpop.f32.mrb[0].mxu0
        %853 = vmatprep.mubr.bf16.mxu0 %v638
        %854 = vmatmul.mubr.bf16.gmra.mrb[0].mxu0 %v637
        %v855 = vpop.f32.mrb[0].mxu0
        %v856 = vadd.f32 0.0, %v855
        %v857 = vpop.f32.mrb[0].mxu0
        %v858 = vpop.f32.mrb[0].mxu0
        %v859 = vadd.f32 0.0, %v858
        %v860 = vpop.f32.mrb[0].mxu0
        %861 = vmatprep.mubr.bf16.mxu0 %v640
        %862 = vmatmul.mubr.bf16.gmra.mrb[0].mxu0 %v639
        %v863 = vpop.f32.mrb[0].mxu0
        %v864 = vadd.f32 0.0, %v863
        %v865 = vpop.f32.mrb[0].mxu0
        %v866 = vpop.f32.mrb[0].mxu0
        %v867 = vadd.f32 0.0, %v866
        %v868 = vpop.f32.mrb[0].mxu0
        %869 = vmatprep.mubr.bf16.mxu0 %v642
        %870 = vmatmul.mubr.bf16.gmra.mrb[0].mxu0 %v641
        %v871 = vpop.f32.mrb[0].mxu0
        %v872 = vadd.f32 0.0, %v871
        %v873 = vpop.f32.mrb[0].mxu0
        %v874 = vpop.f32.mrb[0].mxu0
        %v875 = vadd.f32 0.0, %v874
        %v876 = vpop.f32.mrb[0].mxu0
        %877 = vmatprep.mubr.bf16.mxu0 %v644
        %878 = vmatmul.mubr.bf16.gmra.mrb[0].mxu0 %v643
        %v879 = vpop.f32.mrb[0].mxu0
        %v880 = vadd.f32 0.0, %v879
        %v881 = vpop.f32.mrb[0].mxu0
        %v882 = vpop.f32.mrb[0].mxu0
        %v883 = vadd.f32 0.0, %v882
        %v884 = vpop.f32.mrb[0].mxu0
        %885 = vmatprep.mubr.bf16.mxu0 %v646
        %886 = vmatmul.mubr.bf16.gmra.mrb[0].mxu0 %v645
        %v887 = vpop.f32.mrb[0].mxu0
        %v888 = vadd.f32 0.0, %v887
        %v889 = vpop.f32.mrb[0].mxu0
        %v890 = vpop.f32.mrb[0].mxu0
        %v891 = vadd.f32 0.0, %v890
        %v892 = vpop.f32.mrb[0].mxu0
        %893 = vmatprep.mubr.bf16.mxu0 %v648
        %894 = vmatmul.mubr.bf16.gmra.mrb[0].mxu0 %v647
        %v895 = vpop.f32.mrb[0].mxu0
        %v896 = vadd.f32 0.0, %v895
        %v897 = vpop.f32.mrb[0].mxu0
        %v898 = vpop.f32.mrb[0].mxu0
        %v899 = vadd.f32 0.0, %v898
        %v900 = vpop.f32.mrb[0].mxu0
        %901 = vmatprep.mubr.bf16.mxu0 %v650
        %902 = vmatmul.mubr.bf16.gmra.mrb[0].mxu0 %v649
        %v903 = vpop.f32.mrb[0].mxu0
        %v904 = vadd.f32 0.0, %v903
        %v905 = vpop.f32.mrb[0].mxu0
        %v906 = vpop.f32.mrb[0].mxu0
        %v907 = vadd.f32 0.0, %v906
        %v908 = vpop.f32.mrb[0].mxu0
        %909 = vmatprep.mubr.bf16.mxu0 %v652
        %910 = vmatmul.mubr.bf16.gmra.mrb[0].mxu0 %v651
        %v911 = vpop.f32.mrb[0].mxu0
        %v912 = vadd.f32 0.0, %v911
        %v913 = vpop.f32.mrb[0].mxu0
        %v914 = vpop.f32.mrb[0].mxu0
        %v915 = vadd.f32 0.0, %v914
        %v916 = vpop.f32.mrb[0].mxu0
        %917 = vmatprep.mubr.bf16.mxu0 %v654
        %918 = vmatmul.mubr.bf16.gmra.mrb[0].mxu0 %v653
        %v919 = vpop.f32.mrb[0].mxu0
        %v920 = vadd.f32 0.0, %v919
        %v921 = vpop.f32.mrb[0].mxu0
        %v922 = vpop.f32.mrb[0].mxu0
        %v923 = vadd.f32 0.0, %v922
        %v924 = vpop.f32.mrb[0].mxu0
        %925 = vmatprep.mubr.bf16.mxu0 %v656
        %926 = vmatmul.mubr.bf16.gmra.mrb[0].mxu0 %v655
        %v927 = vpop.f32.mrb[0].mxu0
        %v928 = vadd.f32 0.0, %v927
        %v929 = vpop.f32.mrb[0].mxu0
        %v930 = vpop.f32.mrb[0].mxu0
        %v931 = vadd.f32 0.0, %v930
        %v932 = vpop.f32.mrb[0].mxu0
        %933 = vmatprep.mubr.bf16.mxu0 %v658
        %934 = vmatmul.mubr.bf16.gmra.mrb[0].mxu0 %v657
        %v935 = vpop.f32.mrb[0].mxu0
        %v936 = vadd.f32 0.0, %v935
        %v937 = vpop.f32.mrb[0].mxu0
        %v938 = vpop.f32.mrb[0].mxu0
        %v939 = vadd.f32 0.0, %v938
        %v940 = vpop.f32.mrb[0].mxu0
        %941 = vmatprep.mubr.bf16.mxu0 %v660
        %942 = vmatmul.mubr.bf16.gmra.mrb[0].mxu0 %v659
        %v943 = vpop.f32.mrb[0].mxu0
        %v944 = vadd.f32 0.0, %v943
        %v945 = vpop.f32.mrb[0].mxu0
        %v946 = vpop.f32.mrb[0].mxu0
        %v947 = vadd.f32 0.0, %v946
        %v948 = vpop.f32.mrb[0].mxu0
        %949 = vdwg.mxu0
        %v950 = vadd.f32 %v437, %v824
        %v951 = vadd.f32 %v438, %v827
        %v952 = vadd.f32 %v439, %v832
        %v953 = vadd.f32 %v440, %v835
        %v954 = vadd.f32 %v441, %v840
        %v955 = vadd.f32 %v442, %v843
        %v956 = vadd.f32 %v443, %v848
        %v957 = vadd.f32 %v444, %v851
        %v958 = vadd.f32 %v445, %v856
        %v959 = vadd.f32 %v446, %v859
        %v960 = vadd.f32 %v447, %v864
        %v961 = vadd.f32 %v448, %v867
        %v962 = vadd.f32 %v449, %v872
        %v963 = vadd.f32 %v450, %v875
        %v964 = vadd.f32 %v451, %v880
        %v965 = vadd.f32 %v452, %v883
        %v966 = vadd.f32 %v453, %v888
        %v967 = vadd.f32 %v454, %v891
        %v968 = vadd.f32 %v455, %v896
        %v969 = vadd.f32 %v456, %v899
        %v970 = vadd.f32 %v457, %v904
        %v971 = vadd.f32 %v458, %v907
        %v972 = vadd.f32 %v459, %v912
        %v973 = vadd.f32 %v460, %v915
        %v974 = vadd.f32 %v461, %v920
        %v975 = vadd.f32 %v462, %v923
        %v976 = vadd.f32 %v463, %v928
        %v977 = vadd.f32 %v464, %v931
        %v978 = vadd.f32 %v465, %v936
        %v979 = vadd.f32 %v466, %v939
        %v980 = vadd.f32 %v467, %v944
        %v981 = vadd.f32 %v468, %v947
        %vm982 = vcmask 261120
        %983 = vst.msk [vmem:[#allocation2] sm:$0xff] %vm982, %v950
        %984 = vst.msk [vmem:[#allocation2 + $0x8] sm:$0xff] %vm982, %v951
        %985 = vst.msk [vmem:[#allocation2 + $0x10] sm:$0xff] %vm982, %v952
        %986 = vst.msk [vmem:[#allocation2 + $0x18] sm:$0xff] %vm982, %v953
        %987 = vst.msk [vmem:[#allocation2 + $0x20] sm:$0xff] %vm982, %v954
        %988 = vst.msk [vmem:[#allocation2 + $0x28] sm:$0xff] %vm982, %v955
        %989 = vst.msk [vmem:[#allocation2 + $0x30] sm:$0xff] %vm982, %v956
        %990 = vst.msk [vmem:[#allocation2 + $0x38] sm:$0xff] %vm982, %v957
        %991 = vst.msk [vmem:[#allocation2 + $0x40] sm:$0xff] %vm982, %v958
        %992 = vst.msk [vmem:[#allocation2 + $0x48] sm:$0xff] %vm982, %v959
        %993 = vst.msk [vmem:[#allocation2 + $0x50] sm:$0xff] %vm982, %v960
        %994 = vst.msk [vmem:[#allocation2 + $0x58] sm:$0xff] %vm982, %v961
        %995 = vst.msk [vmem:[#allocation2 + $0x60] sm:$0xff] %vm982, %v962
        %996 = vst.msk [vmem:[#allocation2 + $0x68] sm:$0xff] %vm982, %v963
        %997 = vst.msk [vmem:[#allocation2 + $0x70] sm:$0xff] %vm982, %v964
        %998 = vst.msk [vmem:[#allocation2 + $0x78] sm:$0xff] %vm982, %v965
        %999 = vst.msk [vmem:[#allocation2 + $0x80] sm:$0xff] %vm982, %v966
        %1000 = vst.msk [vmem:[#allocation2 + $0x88] sm:$0xff] %vm982, %v967
        %1001 = vst.msk [vmem:[#allocation2 + $0x90] sm:$0xff] %vm982, %v968
        %1002 = vst.msk [vmem:[#allocation2 + $0x98] sm:$0xff] %vm982, %v969
        %1003 = vst.msk [vmem:[#allocation2 + $0xa0] sm:$0xff] %vm982, %v970
        %1004 = vst.msk [vmem:[#allocation2 + $0xa8] sm:$0xff] %vm982, %v971
        %1005 = vst.msk [vmem:[#allocation2 + $0xb0] sm:$0xff] %vm982, %v972
        %1006 = vst.msk [vmem:[#allocation2 + $0xb8] sm:$0xff] %vm982, %v973
        %1007 = vst.msk [vmem:[#allocation2 + $0xc0] sm:$0xff] %vm982, %v974
        %1008 = vst.msk [vmem:[#allocation2 + $0xc8] sm:$0xff] %vm982, %v975
        %1009 = vst.msk [vmem:[#allocation2 + $0xd0] sm:$0xff] %vm982, %v976
        %1010 = vst.msk [vmem:[#allocation2 + $0xd8] sm:$0xff] %vm982, %v977
        %1011 = vst.msk [vmem:[#allocation2 + $0xe0] sm:$0xff] %vm982, %v978
        %1012 = vst.msk [vmem:[#allocation2 + $0xe8] sm:$0xff] %vm982, %v979
        %1013 = vst.msk [vmem:[#allocation2 + $0xf0] sm:$0xff] %vm982, %v980
        %1014 = vst.msk [vmem:[#allocation2 + $0xf8] sm:$0xff] %vm982, %v981
        %p1015 = scmp.eq.s32.totalorder %s20, 1
        // Predicated region
        $region79: #{vgae_encoder.4} parent=69 // pred_check
          %p1016 = pneg %p1015
        $region80: #{vgae_encoder.4} parent=69 // pred_check_branch
          %1018 = sbr.rel (%p1016) target = $region82
        $region81: #{vgae_encoder.4} parent=69 // pred_region
          %v1019 = vld [vmem:[#allocation2] sm:$0xff]
          %v1020 = vld [vmem:[#allocation2 + $0x8] sm:$0xff]
          %v1021 = vld [vmem:[#allocation2 + $0x10] sm:$0xff]
          %v1022 = vld [vmem:[#allocation2 + $0x18] sm:$0xff]
          %v1023 = vld [vmem:[#allocation2 + $0x20] sm:$0xff]
          %v1024 = vld [vmem:[#allocation2 + $0x28] sm:$0xff]
          %v1025 = vld [vmem:[#allocation2 + $0x30] sm:$0xff]
          %v1026 = vld [vmem:[#allocation2 + $0x38] sm:$0xff]
          %v1027 = vld [vmem:[#allocation2 + $0x40] sm:$0xff]
          %v1028 = vld [vmem:[#allocation2 + $0x48] sm:$0xff]
          %v1029 = vld [vmem:[#allocation2 + $0x50] sm:$0xff]
          %v1030 = vld [vmem:[#allocation2 + $0x58] sm:$0xff]
          %v1031 = vld [vmem:[#allocation2 + $0x60] sm:$0xff]
          %v1032 = vld [vmem:[#allocation2 + $0x68] sm:$0xff]
          %v1033 = vld [vmem:[#allocation2 + $0x70] sm:$0xff]
          %v1034 = vld [vmem:[#allocation2 + $0x78] sm:$0xff]
          %v1035 = vld [vmem:[#allocation2 + $0x80] sm:$0xff]
          %v1036 = vld [vmem:[#allocation2 + $0x88] sm:$0xff]
          %v1037 = vld [vmem:[#allocation2 + $0x90] sm:$0xff]
          %v1038 = vld [vmem:[#allocation2 + $0x98] sm:$0xff]
          %v1039 = vld [vmem:[#allocation2 + $0xa0] sm:$0xff]
          %v1040 = vld [vmem:[#allocation2 + $0xa8] sm:$0xff]
          %v1041 = vld [vmem:[#allocation2 + $0xb0] sm:$0xff]
          %v1042 = vld [vmem:[#allocation2 + $0xb8] sm:$0xff]
          %v1043 = vld [vmem:[#allocation2 + $0xc0] sm:$0xff]
          %v1044 = vld [vmem:[#allocation2 + $0xc8] sm:$0xff]
          %v1045 = vld [vmem:[#allocation2 + $0xd0] sm:$0xff]
          %v1046 = vld [vmem:[#allocation2 + $0xd8] sm:$0xff]
          %v1047 = vld [vmem:[#allocation2 + $0xe0] sm:$0xff]
          %v1048 = vld [vmem:[#allocation2 + $0xe8] sm:$0xff]
          %v1049 = vld [vmem:[#allocation2 + $0xf0] sm:$0xff]
          %v1050 = vld [vmem:[#allocation2 + $0xf8] sm:$0xff]
          %v1051 = vld [vmem:[%s2] sm:$0x1]
          %v1053 = vlaneseq
          %v1054 = vshrl.u32 %v1053, 7
          %v1055 = vsub.s32 0, %v1054
          %v1056 = vrot.slane %v1051, %v1055
          %v1058 = vadd.f32 %v1019, %v1056
          %v1059 = vadd.f32 %v1020, %v1056
          %v1060 = vadd.f32 %v1021, %v1056
          %v1061 = vadd.f32 %v1022, %v1056
          %v1062 = vadd.f32 %v1023, %v1056
          %v1063 = vadd.f32 %v1024, %v1056
          %v1064 = vadd.f32 %v1025, %v1056
          %v1065 = vadd.f32 %v1026, %v1056
          %v1066 = vadd.f32 %v1027, %v1056
          %v1067 = vadd.f32 %v1028, %v1056
          %v1068 = vadd.f32 %v1029, %v1056
          %v1069 = vadd.f32 %v1030, %v1056
          %v1070 = vadd.f32 %v1031, %v1056
          %v1071 = vadd.f32 %v1032, %v1056
          %v1072 = vadd.f32 %v1033, %v1056
          %v1073 = vadd.f32 %v1034, %v1056
          %v1074 = vadd.f32 %v1035, %v1056
          %v1075 = vadd.f32 %v1036, %v1056
          %v1076 = vadd.f32 %v1037, %v1056
          %v1077 = vadd.f32 %v1038, %v1056
          %v1078 = vadd.f32 %v1039, %v1056
          %v1079 = vadd.f32 %v1040, %v1056
          %v1080 = vadd.f32 %v1041, %v1056
          %v1081 = vadd.f32 %v1042, %v1056
          %v1082 = vadd.f32 %v1043, %v1056
          %v1083 = vadd.f32 %v1044, %v1056
          %v1084 = vadd.f32 %v1045, %v1056
          %v1085 = vadd.f32 %v1046, %v1056
          %v1086 = vadd.f32 %v1047, %v1056
          %v1087 = vadd.f32 %v1048, %v1056
          %v1088 = vadd.f32 %v1049, %v1056
          %v1089 = vadd.f32 %v1050, %v1056
          %v1090 = vmax.f32 %v1058, 0.0
          %v1091 = vmax.f32 %v1059, 0.0
          %v1092 = vmax.f32 %v1060, 0.0
          %v1093 = vmax.f32 %v1061, 0.0
          %v1094 = vmax.f32 %v1062, 0.0
          %v1095 = vmax.f32 %v1063, 0.0
          %v1096 = vmax.f32 %v1064, 0.0
          %v1097 = vmax.f32 %v1065, 0.0
          %v1098 = vmax.f32 %v1066, 0.0
          %v1099 = vmax.f32 %v1067, 0.0
          %v1100 = vmax.f32 %v1068, 0.0
          %v1101 = vmax.f32 %v1069, 0.0
          %v1102 = vmax.f32 %v1070, 0.0
          %v1103 = vmax.f32 %v1071, 0.0
          %v1104 = vmax.f32 %v1072, 0.0
          %v1105 = vmax.f32 %v1073, 0.0
          %v1106 = vmax.f32 %v1074, 0.0
          %v1107 = vmax.f32 %v1075, 0.0
          %v1108 = vmax.f32 %v1076, 0.0
          %v1109 = vmax.f32 %v1077, 0.0
          %v1110 = vmax.f32 %v1078, 0.0
          %v1111 = vmax.f32 %v1079, 0.0
          %v1112 = vmax.f32 %v1080, 0.0
          %v1113 = vmax.f32 %v1081, 0.0
          %v1114 = vmax.f32 %v1082, 0.0
          %v1115 = vmax.f32 %v1083, 0.0
          %v1116 = vmax.f32 %v1084, 0.0
          %v1117 = vmax.f32 %v1085, 0.0
          %v1118 = vmax.f32 %v1086, 0.0
          %v1119 = vmax.f32 %v1087, 0.0
          %v1120 = vmax.f32 %v1088, 0.0
          %v1121 = vmax.f32 %v1089, 0.0
          %v1122 = vld [vmem:[%s3] sm:$0xff]
          %v1123 = vld [vmem:[%s3 + $0x8] sm:$0xff]
          %v1124 = vld [vmem:[%s3 + $0x10] sm:$0xff]
          %v1125 = vld [vmem:[%s3 + $0x18] sm:$0xff]
          %v1127 = vsel %vm982, %v1090, 0
          %v1130 = vsel %vm982, %v1091, 0
          %v1133 = vsel %vm982, %v1092, 0
          %v1136 = vsel %vm982, %v1093, 0
          %v1139 = vsel %vm982, %v1094, 0
          %v1142 = vsel %vm982, %v1095, 0
          %v1145 = vsel %vm982, %v1096, 0
          %v1148 = vsel %vm982, %v1097, 0
          %v1151 = vsel %vm982, %v1098, 0
          %v1154 = vsel %vm982, %v1099, 0
          %v1157 = vsel %vm982, %v1100, 0
          %v1160 = vsel %vm982, %v1101, 0
          %v1163 = vsel %vm982, %v1102, 0
          %v1166 = vsel %vm982, %v1103, 0
          %v1169 = vsel %vm982, %v1104, 0
          %v1172 = vsel %vm982, %v1105, 0
          %v1175 = vsel %vm982, %v1106, 0
          %v1178 = vsel %vm982, %v1107, 0
          %v1181 = vsel %vm982, %v1108, 0
          %v1184 = vsel %vm982, %v1109, 0
          %v1187 = vsel %vm982, %v1110, 0
          %v1190 = vsel %vm982, %v1111, 0
          %v1193 = vsel %vm982, %v1112, 0
          %v1196 = vsel %vm982, %v1113, 0
          %v1199 = vsel %vm982, %v1114, 0
          %v1202 = vsel %vm982, %v1115, 0
          %v1205 = vsel %vm982, %v1116, 0
          %v1208 = vsel %vm982, %v1117, 0
          %v1211 = vsel %vm982, %v1118, 0
          %v1214 = vsel %vm982, %v1119, 0
          %v1217 = vsel %vm982, %v1120, 0
          %v1220 = vsel %vm982, %v1121, 0
          %1222 = vmatprep.subr.mxu0 0.0
          %1223 = vmatpush1.msra.mxu0 %v1122
          %1224 = vmatprep.subr.mxu0 0.0
          %1225 = vmatpush1.msra.mxu0 %v1123
          %1226 = vmatprep.subr.mxu0 0.0
          %1227 = vmatpush1.msra.mxu0 %v1124
          %1228 = vmatprep.subr.mxu0 0.0
          %1229 = vmatpush1.msra.mxu0 %v1125
          %1230 = vmatprep.subr.mxu0 0.0
          %1231 = vmatpush1.msra.mxu0 0.0
          %1232 = vmatprep.subr.mxu0 0.0
          %1233 = vmatpush1.msra.mxu0 0.0
          %1234 = vmatprep.subr.mxu0 0.0
          %1235 = vmatpush1.msra.mxu0 0.0
          %1236 = vmatprep.subr.mxu0 0.0
          %1237 = vmatpush1.msra.mxu0 0.0
          %1238 = vmatprep.subr.mxu0 0.0
          %1239 = vmatpush1.msra.mxu0 0.0
          %1240 = vmatprep.subr.mxu0 0.0
          %1241 = vmatpush1.msra.mxu0 0.0
          %1242 = vmatprep.subr.mxu0 0.0
          %1243 = vmatpush1.msra.mxu0 0.0
          %1244 = vmatprep.subr.mxu0 0.0
          %1245 = vmatpush1.msra.mxu0 0.0
          %1246 = vmatprep.subr.mxu0 0.0
          %1247 = vmatpush1.msra.mxu0 0.0
          %1248 = vmatprep.subr.mxu0 0.0
          %1249 = vmatpush1.msra.mxu0 0.0
          %1250 = vmatprep.subr.mxu0 0.0
          %1251 = vmatpush1.msra.mxu0 0.0
          %1252 = vmatprep.subr.mxu0 0.0
          %1253 = vmatpush1.msra.mxu0 0.0
          %1254 = vmatprep.subr.mxu0 0.0
          %1255 = vmatpush1.msra.mxu0 0.0
          %1256 = vmatprep.subr.mxu0 0.0
          %1257 = vmatpush1.msra.mxu0 0.0
          %1258 = vmatprep.subr.mxu0 0.0
          %1259 = vmatpush1.msra.mxu0 0.0
          %1260 = vmatprep.subr.mxu0 0.0
          %1261 = vmatpush1.msra.mxu0 0.0
          %1262 = vmatprep.subr.mxu0 0.0
          %1263 = vmatpush1.msra.mxu0 0.0
          %1264 = vmatprep.subr.mxu0 0.0
          %1265 = vmatpush1.msra.mxu0 0.0
          %1266 = vmatprep.subr.mxu0 0.0
          %1267 = vmatpush1.msra.mxu0 0.0
          %1268 = vmatprep.subr.mxu0 0.0
          %1269 = vmatpush1.msra.mxu0 0.0
          %1270 = vmatprep.subr.mxu0 0.0
          %1271 = vmatpush1.msra.mxu0 0.0
          %1272 = vmatprep.subr.mxu0 0.0
          %1273 = vmatpush1.msra.mxu0 0.0
          %1274 = vmatprep.subr.mxu0 0.0
          %1275 = vmatpush1.msra.mxu0 0.0
          %1276 = vmatprep.subr.mxu0 0.0
          %1277 = vmatpush1.msra.mxu0 0.0
          %1278 = vmatprep.subr.mxu0 0.0
          %1279 = vmatpush1.msra.mxu0 0.0
          %1280 = vmatprep.subr.mxu0 0.0
          %1281 = vmatpush1.msra.mxu0 0.0
          %1282 = vmatprep.subr.mxu0 0.0
          %1283 = vmatpush1.msra.mxu0 0.0
          %1284 = vmatprep.subr.mxu0 0.0
          %1285 = vmatpush1.msra.mxu0 0.0
          %1286 = vmatprep.mubr.f32.mxu0 0.0
          %1287 = vmatmul.mubr.f32.gmra.mrb[0].mxu0 %v1127
          %v1288 = vpop.f32.mrb[0].mxu0
          %v1289 = vadd.f32 0.0, %v1288
          %v1290 = vpop.f32.mrb[0].mxu0
          %1291 = vmatprep.mubr.f32.mxu0 0.0
          %1292 = vmatmul.mubr.f32.gmra.mrb[0].mxu0 %v1130
          %v1293 = vpop.f32.mrb[0].mxu0
          %v1294 = vadd.f32 0.0, %v1293
          %v1295 = vpop.f32.mrb[0].mxu0
          %1296 = vmatprep.mubr.f32.mxu0 0.0
          %1297 = vmatmul.mubr.f32.gmra.mrb[0].mxu0 %v1133
          %v1298 = vpop.f32.mrb[0].mxu0
          %v1299 = vadd.f32 0.0, %v1298
          %v1300 = vpop.f32.mrb[0].mxu0
          %1301 = vmatprep.mubr.f32.mxu0 0.0
          %1302 = vmatmul.mubr.f32.gmra.mrb[0].mxu0 %v1136
          %v1303 = vpop.f32.mrb[0].mxu0
          %v1304 = vadd.f32 0.0, %v1303
          %v1305 = vpop.f32.mrb[0].mxu0
          %1306 = vmatprep.mubr.f32.mxu0 0.0
          %1307 = vmatmul.mubr.f32.gmra.mrb[0].mxu0 %v1139
          %v1308 = vpop.f32.mrb[0].mxu0
          %v1309 = vadd.f32 0.0, %v1308
          %v1310 = vpop.f32.mrb[0].mxu0
          %1311 = vmatprep.mubr.f32.mxu0 0.0
          %1312 = vmatmul.mubr.f32.gmra.mrb[0].mxu0 %v1142
          %v1313 = vpop.f32.mrb[0].mxu0
          %v1314 = vadd.f32 0.0, %v1313
          %v1315 = vpop.f32.mrb[0].mxu0
          %1316 = vmatprep.mubr.f32.mxu0 0.0
          %1317 = vmatmul.mubr.f32.gmra.mrb[0].mxu0 %v1145
          %v1318 = vpop.f32.mrb[0].mxu0
          %v1319 = vadd.f32 0.0, %v1318
          %v1320 = vpop.f32.mrb[0].mxu0
          %1321 = vmatprep.mubr.f32.mxu0 0.0
          %1322 = vmatmul.mubr.f32.gmra.mrb[0].mxu0 %v1148
          %v1323 = vpop.f32.mrb[0].mxu0
          %v1324 = vadd.f32 0.0, %v1323
          %v1325 = vpop.f32.mrb[0].mxu0
          %1326 = vmatprep.mubr.f32.mxu0 0.0
          %1327 = vmatmul.mubr.f32.gmra.mrb[0].mxu0 %v1151
          %v1328 = vpop.f32.mrb[0].mxu0
          %v1329 = vadd.f32 0.0, %v1328
          %v1330 = vpop.f32.mrb[0].mxu0
          %1331 = vmatprep.mubr.f32.mxu0 0.0
          %1332 = vmatmul.mubr.f32.gmra.mrb[0].mxu0 %v1154
          %v1333 = vpop.f32.mrb[0].mxu0
          %v1334 = vadd.f32 0.0, %v1333
          %v1335 = vpop.f32.mrb[0].mxu0
          %1336 = vmatprep.mubr.f32.mxu0 0.0
          %1337 = vmatmul.mubr.f32.gmra.mrb[0].mxu0 %v1157
          %v1338 = vpop.f32.mrb[0].mxu0
          %v1339 = vadd.f32 0.0, %v1338
          %v1340 = vpop.f32.mrb[0].mxu0
          %1341 = vmatprep.mubr.f32.mxu0 0.0
          %1342 = vmatmul.mubr.f32.gmra.mrb[0].mxu0 %v1160
          %v1343 = vpop.f32.mrb[0].mxu0
          %v1344 = vadd.f32 0.0, %v1343
          %v1345 = vpop.f32.mrb[0].mxu0
          %1346 = vmatprep.mubr.f32.mxu0 0.0
          %1347 = vmatmul.mubr.f32.gmra.mrb[0].mxu0 %v1163
          %v1348 = vpop.f32.mrb[0].mxu0
          %v1349 = vadd.f32 0.0, %v1348
          %v1350 = vpop.f32.mrb[0].mxu0
          %1351 = vmatprep.mubr.f32.mxu0 0.0
          %1352 = vmatmul.mubr.f32.gmra.mrb[0].mxu0 %v1166
          %v1353 = vpop.f32.mrb[0].mxu0
          %v1354 = vadd.f32 0.0, %v1353
          %v1355 = vpop.f32.mrb[0].mxu0
          %1356 = vmatprep.mubr.f32.mxu0 0.0
          %1357 = vmatmul.mubr.f32.gmra.mrb[0].mxu0 %v1169
          %v1358 = vpop.f32.mrb[0].mxu0
          %v1359 = vadd.f32 0.0, %v1358
          %v1360 = vpop.f32.mrb[0].mxu0
          %1361 = vmatprep.mubr.f32.mxu0 0.0
          %1362 = vmatmul.mubr.f32.gmra.mrb[0].mxu0 %v1172
          %v1363 = vpop.f32.mrb[0].mxu0
          %v1364 = vadd.f32 0.0, %v1363
          %v1365 = vpop.f32.mrb[0].mxu0
          %1366 = vmatprep.mubr.f32.mxu0 0.0
          %1367 = vmatmul.mubr.f32.gmra.mrb[0].mxu0 %v1175
          %v1368 = vpop.f32.mrb[0].mxu0
          %v1369 = vadd.f32 0.0, %v1368
          %v1370 = vpop.f32.mrb[0].mxu0
          %1371 = vmatprep.mubr.f32.mxu0 0.0
          %1372 = vmatmul.mubr.f32.gmra.mrb[0].mxu0 %v1178
          %v1373 = vpop.f32.mrb[0].mxu0
          %v1374 = vadd.f32 0.0, %v1373
          %v1375 = vpop.f32.mrb[0].mxu0
          %1376 = vmatprep.mubr.f32.mxu0 0.0
          %1377 = vmatmul.mubr.f32.gmra.mrb[0].mxu0 %v1181
          %v1378 = vpop.f32.mrb[0].mxu0
          %v1379 = vadd.f32 0.0, %v1378
          %v1380 = vpop.f32.mrb[0].mxu0
          %1381 = vmatprep.mubr.f32.mxu0 0.0
          %1382 = vmatmul.mubr.f32.gmra.mrb[0].mxu0 %v1184
          %v1383 = vpop.f32.mrb[0].mxu0
          %v1384 = vadd.f32 0.0, %v1383
          %v1385 = vpop.f32.mrb[0].mxu0
          %1386 = vmatprep.mubr.f32.mxu0 0.0
          %1387 = vmatmul.mubr.f32.gmra.mrb[0].mxu0 %v1187
          %v1388 = vpop.f32.mrb[0].mxu0
          %v1389 = vadd.f32 0.0, %v1388
          %v1390 = vpop.f32.mrb[0].mxu0
          %1391 = vmatprep.mubr.f32.mxu0 0.0
          %1392 = vmatmul.mubr.f32.gmra.mrb[0].mxu0 %v1190
          %v1393 = vpop.f32.mrb[0].mxu0
          %v1394 = vadd.f32 0.0, %v1393
          %v1395 = vpop.f32.mrb[0].mxu0
          %1396 = vmatprep.mubr.f32.mxu0 0.0
          %1397 = vmatmul.mubr.f32.gmra.mrb[0].mxu0 %v1193
          %v1398 = vpop.f32.mrb[0].mxu0
          %v1399 = vadd.f32 0.0, %v1398
          %v1400 = vpop.f32.mrb[0].mxu0
          %1401 = vmatprep.mubr.f32.mxu0 0.0
          %1402 = vmatmul.mubr.f32.gmra.mrb[0].mxu0 %v1196
          %v1403 = vpop.f32.mrb[0].mxu0
          %v1404 = vadd.f32 0.0, %v1403
          %v1405 = vpop.f32.mrb[0].mxu0
          %1406 = vmatprep.mubr.f32.mxu0 0.0
          %1407 = vmatmul.mubr.f32.gmra.mrb[0].mxu0 %v1199
          %v1408 = vpop.f32.mrb[0].mxu0
          %v1409 = vadd.f32 0.0, %v1408
          %v1410 = vpop.f32.mrb[0].mxu0
          %1411 = vmatprep.mubr.f32.mxu0 0.0
          %1412 = vmatmul.mubr.f32.gmra.mrb[0].mxu0 %v1202
          %v1413 = vpop.f32.mrb[0].mxu0
          %v1414 = vadd.f32 0.0, %v1413
          %v1415 = vpop.f32.mrb[0].mxu0
          %1416 = vmatprep.mubr.f32.mxu0 0.0
          %1417 = vmatmul.mubr.f32.gmra.mrb[0].mxu0 %v1205
          %v1418 = vpop.f32.mrb[0].mxu0
          %v1419 = vadd.f32 0.0, %v1418
          %v1420 = vpop.f32.mrb[0].mxu0
          %1421 = vmatprep.mubr.f32.mxu0 0.0
          %1422 = vmatmul.mubr.f32.gmra.mrb[0].mxu0 %v1208
          %v1423 = vpop.f32.mrb[0].mxu0
          %v1424 = vadd.f32 0.0, %v1423
          %v1425 = vpop.f32.mrb[0].mxu0
          %1426 = vmatprep.mubr.f32.mxu0 0.0
          %1427 = vmatmul.mubr.f32.gmra.mrb[0].mxu0 %v1211
          %v1428 = vpop.f32.mrb[0].mxu0
          %v1429 = vadd.f32 0.0, %v1428
          %v1430 = vpop.f32.mrb[0].mxu0
          %1431 = vmatprep.mubr.f32.mxu0 0.0
          %1432 = vmatmul.mubr.f32.gmra.mrb[0].mxu0 %v1214
          %v1433 = vpop.f32.mrb[0].mxu0
          %v1434 = vadd.f32 0.0, %v1433
          %v1435 = vpop.f32.mrb[0].mxu0
          %1436 = vmatprep.mubr.f32.mxu0 0.0
          %1437 = vmatmul.mubr.f32.gmra.mrb[0].mxu0 %v1217
          %v1438 = vpop.f32.mrb[0].mxu0
          %v1439 = vadd.f32 0.0, %v1438
          %v1440 = vpop.f32.mrb[0].mxu0
          %1441 = vmatprep.mubr.f32.mxu0 0.0
          %1442 = vmatmul.mubr.f32.gmra.mrb[0].mxu0 %v1220
          %v1443 = vpop.f32.mrb[0].mxu0
          %v1444 = vadd.f32 0.0, %v1443
          %v1445 = vpop.f32.mrb[0].mxu0
          %1446 = vdwg.mxu0
          %v1447 = vpack.c.bf16 %v1294, %v1289
          %v1448 = vpack.c.bf16 %v1304, %v1299
          %v1449 = vpack.c.bf16 %v1314, %v1309
          %v1450 = vpack.c.bf16 %v1324, %v1319
          %v1451 = vpack.c.bf16 %v1334, %v1329
          %v1452 = vpack.c.bf16 %v1344, %v1339
          %v1453 = vpack.c.bf16 %v1354, %v1349
          %v1454 = vpack.c.bf16 %v1364, %v1359
          %v1455 = vpack.c.bf16 %v1374, %v1369
          %v1456 = vpack.c.bf16 %v1384, %v1379
          %v1457 = vpack.c.bf16 %v1394, %v1389
          %v1458 = vpack.c.bf16 %v1404, %v1399
          %v1459 = vpack.c.bf16 %v1414, %v1409
          %v1460 = vpack.c.bf16 %v1424, %v1419
          %v1461 = vpack.c.bf16 %v1434, %v1429
          %v1462 = vpack.c.bf16 %v1444, %v1439
          %v1479 = vunpack.c.l.b16 %v1447
          %v1480 = vunpack.c.h.b16 %v1447
          %v1481 = vunpack.c.l.b16 %v1448
          %v1482 = vunpack.c.h.b16 %v1448
          %v1483 = vunpack.c.l.b16 %v1449
          %v1484 = vunpack.c.h.b16 %v1449
          %v1485 = vunpack.c.l.b16 %v1450
          %v1486 = vunpack.c.h.b16 %v1450
          %v1487 = vunpack.c.l.b16 %v1451
          %v1488 = vunpack.c.h.b16 %v1451
          %v1489 = vunpack.c.l.b16 %v1452
          %v1490 = vunpack.c.h.b16 %v1452
          %v1491 = vunpack.c.l.b16 %v1453
          %v1492 = vunpack.c.h.b16 %v1453
          %v1493 = vunpack.c.l.b16 %v1454
          %v1494 = vunpack.c.h.b16 %v1454
          %v1495 = vunpack.c.l.b16 %v1455
          %v1496 = vunpack.c.h.b16 %v1455
          %v1497 = vunpack.c.l.b16 %v1456
          %v1498 = vunpack.c.h.b16 %v1456
          %v1499 = vunpack.c.l.b16 %v1457
          %v1500 = vunpack.c.h.b16 %v1457
          %v1501 = vunpack.c.l.b16 %v1458
          %v1502 = vunpack.c.h.b16 %v1458
          %v1503 = vunpack.c.l.b16 %v1459
          %v1504 = vunpack.c.h.b16 %v1459
          %v1505 = vunpack.c.l.b16 %v1460
          %v1506 = vunpack.c.h.b16 %v1460
          %v1507 = vunpack.c.l.b16 %v1461
          %v1508 = vunpack.c.h.b16 %v1461
          %v1509 = vunpack.c.l.b16 %v1462
          %v1510 = vunpack.c.h.b16 %v1462
          %v1511 = vpack.c.b16 %v1479, %v1479
          %v1512 = vpack.c.b16 %v1480, %v1480
          %v1513 = vpack.c.b16 %v1481, %v1481
          %v1514 = vpack.c.b16 %v1482, %v1482
          %v1515 = vpack.c.b16 %v1483, %v1483
          %v1516 = vpack.c.b16 %v1484, %v1484
          %v1517 = vpack.c.b16 %v1485, %v1485
          %v1518 = vpack.c.b16 %v1486, %v1486
          %v1519 = vpack.c.b16 %v1487, %v1487
          %v1520 = vpack.c.b16 %v1488, %v1488
          %v1521 = vpack.c.b16 %v1489, %v1489
          %v1522 = vpack.c.b16 %v1490, %v1490
          %v1523 = vpack.c.b16 %v1491, %v1491
          %v1524 = vpack.c.b16 %v1492, %v1492
          %v1525 = vpack.c.b16 %v1493, %v1493
          %v1526 = vpack.c.b16 %v1494, %v1494
          %v1527 = vpack.c.b16 %v1495, %v1495
          %v1528 = vpack.c.b16 %v1496, %v1496
          %v1529 = vpack.c.b16 %v1497, %v1497
          %v1530 = vpack.c.b16 %v1498, %v1498
          %v1531 = vpack.c.b16 %v1499, %v1499
          %v1532 = vpack.c.b16 %v1500, %v1500
          %v1533 = vpack.c.b16 %v1501, %v1501
          %v1534 = vpack.c.b16 %v1502, %v1502
          %v1535 = vpack.c.b16 %v1503, %v1503
          %v1536 = vpack.c.b16 %v1504, %v1504
          %v1537 = vpack.c.b16 %v1505, %v1505
          %v1538 = vpack.c.b16 %v1506, %v1506
          %v1539 = vpack.c.b16 %v1507, %v1507
          %v1540 = vpack.c.b16 %v1508, %v1508
          %v1541 = vpack.c.b16 %v1509, %v1509
          %v1542 = vpack.c.b16 %v1510, %v1510
          %1575 = vst [vmem:[%s397] sm:$0xf] %v1511
          %1576 = vst [vmem:[%s397 + $0x4] sm:$0xf] %v1512
          %1577 = vst [vmem:[%s397 + $0x8] sm:$0xf] %v1513
          %1578 = vst [vmem:[%s397 + $0xc] sm:$0xf] %v1514
          %1579 = vst [vmem:[%s397 + $0x10] sm:$0xf] %v1515
          %1580 = vst [vmem:[%s397 + $0x14] sm:$0xf] %v1516
          %1581 = vst [vmem:[%s397 + $0x18] sm:$0xf] %v1517
          %1582 = vst [vmem:[%s397 + $0x1c] sm:$0xf] %v1518
          %1583 = vst [vmem:[%s397 + $0x20] sm:$0xf] %v1519
          %1584 = vst [vmem:[%s397 + $0x24] sm:$0xf] %v1520
          %1585 = vst [vmem:[%s397 + $0x28] sm:$0xf] %v1521
          %1586 = vst [vmem:[%s397 + $0x2c] sm:$0xf] %v1522
          %1587 = vst [vmem:[%s397 + $0x30] sm:$0xf] %v1523
          %1588 = vst [vmem:[%s397 + $0x34] sm:$0xf] %v1524
          %1589 = vst [vmem:[%s397 + $0x38] sm:$0xf] %v1525
          %1590 = vst [vmem:[%s397 + $0x3c] sm:$0xf] %v1526
          %1591 = vst [vmem:[%s397 + $0x40] sm:$0xf] %v1527
          %1592 = vst [vmem:[%s397 + $0x44] sm:$0xf] %v1528
          %1593 = vst [vmem:[%s397 + $0x48] sm:$0xf] %v1529
          %1594 = vst [vmem:[%s397 + $0x4c] sm:$0xf] %v1530
          %1595 = vst [vmem:[%s397 + $0x50] sm:$0xf] %v1531
          %1596 = vst [vmem:[%s397 + $0x54] sm:$0xf] %v1532
          %1597 = vst [vmem:[%s397 + $0x58] sm:$0xf] %v1533
          %1598 = vst [vmem:[%s397 + $0x5c] sm:$0xf] %v1534
          %1599 = vst [vmem:[%s397 + $0x60] sm:$0xf] %v1535
          %1600 = vst [vmem:[%s397 + $0x64] sm:$0xf] %v1536
          %1601 = vst [vmem:[%s397 + $0x68] sm:$0xf] %v1537
          %1602 = vst [vmem:[%s397 + $0x6c] sm:$0xf] %v1538
          %1603 = vst [vmem:[%s397 + $0x70] sm:$0xf] %v1539
          %1604 = vst [vmem:[%s397 + $0x74] sm:$0xf] %v1540
          %1605 = vst [vmem:[%s397 + $0x78] sm:$0xf] %v1541
          %1606 = vst [vmem:[%s397 + $0x7c] sm:$0xf] %v1542
        $region82: #{vgae_encoder.4} parent=69 // pred_fallthru
          _
        %s1607 = smul.u32 32, %s19
        %p1608 = scmp.lt.s32.totalorder %s1607, 63
        %s1609 = scalar_select %p1608, %s1607, 63
        %s1610 = smul.addr %s1609, 4
        %s1611 = scalar_lea.vmem %s4, %s1610
        // Predicated region
        $region83: #{vgae_encoder.4} parent=69 // pred_check
          %p1612 = pneg %p141
        $region84: #{vgae_encoder.4} parent=69 // pred_check_branch
          %1614 = sbr.rel (%p1612) target = $region86
        $region85: #{vgae_encoder.4} parent=69 // pred_region
          %s1615 = smul.u32 32, %s19
        $region86: #{vgae_encoder.4} parent=69 // pred_fallthru
          _
      $region70: #{vgae_encoder.4} parent=5 // pred_fallthru
        _
      %p1616 = scmp.le.s32.totalorder 2, %s10
      // Predicated region
      $region87: #{vgae_encoder.4} parent=5 // pred_check
        %p1617 = pneg %p1616
      $region88: #{vgae_encoder.4} parent=5 // pred_check_branch
        %1619 = sbr.rel (%p1617) target = $region90
      $region89: #{vgae_encoder.4} parent=5 // pred_region
        %s1620 = ssub.s32 %s10, 2
        // Predicated region
        $region91: #{vgae_encoder.4} parent=89 // pred_check
          %p1621 = pneg %p147
        $region92: #{vgae_encoder.4} parent=89 // pred_check_branch
          %1623 = sbr.rel (%p1621) target = $region94
        $region93: #{vgae_encoder.4} parent=89 // pred_region
          %s1624 = smul.u32 32, %s21
          %p1625 = scmp.lt.s32.totalorder %s1624, 63
          %s1626 = scalar_select %p1625, %s1624, 63
          %s1627 = smul.addr %s1626, 4
          %s1628 = scalar_lea.vmem %s4, %s1627
        $region94: #{vgae_encoder.4} parent=89 // pred_fallthru
          _
      $region90: #{vgae_encoder.4} parent=5 // pred_fallthru
        _
    $region6: #{vgae_encoder.4} parent=1 // loop_footer
      %s14 = sadd.s32 1, %s10
    $region7: #{vgae_encoder.4} parent=1 // loop_footer_branch
      %9 = sbr.rel target = $region3
    $region8: #{vgae_encoder.4} parent=1 // loop_exit
      _

</llo_original>
